<compile_context>
chip_gen: v5e
topology: v5e:2x2
jax: 0.10.0
libtpu: 0.0.40
codegen_flags: <defaults>
</compile_context>

<pallas_src>
import jax
import jax.numpy as jnp
from jax.experimental import pallas as pl
from jax.experimental.pallas import tpu as pltpu

HS_CHANNELS = 102   # matches `hs_channels = 102` in the reference
TIME_DIM = 32
C_PAD = 128         # lane-dense padded channel count
MAX_TILE = 1024     # rows (pixels) per grid step


# ----------------------------------------------------------------------------
# Fused Pallas kernel: full S2TD pipeline for one (batch, row-tile) block.
# ----------------------------------------------------------------------------
def _s2td_kernel(eta_ref,                                   # SMEM (2,) [eta_spat, eta_spec]
                 xn_ref, lrhs_ref, hrms_ref,                # VMEM (1, TILE, C) f32
                 spat_tb_ref, spec_tb_ref,                  # VMEM (1, 1, C)    f32
                 w14_spat_ref, w23_spat_ref,                # VMEM (2C, C)      bf16
                 w14_spec_ref, w23_spec_ref,                # VMEM (2C, C)      bf16
                 xspec_out_ref, xspat_out_ref):             # VMEM (1, TILE, C) f32
    xn = xn_ref[0]            # LRHS_noisy tile (f32)
    lrhs = lrhs_ref[0]
    hrms = hrms_ref[0]
    spat_tb = spat_tb_ref[0]  # (1, C) per-batch time-embedding bias (precomputed)
    spec_tb = spec_tb_ref[0]
    eta_spat = eta_ref[0]
    eta_spec = eta_ref[1]

    xn_b = xn.astype(jnp.bfloat16)
    lrhs_b = lrhs.astype(jnp.bfloat16)
    hrms_b = hrms.astype(jnp.bfloat16)

    # Loop-invariant base terms (one K=2C MXU pass each, incl. time bias):
    #   base_spat = xn@W1_s + hrms@W4_s + tb_s ;  base_spec = xn@W1_c + lrhs@W4_c + tb_c
    base_spat = jnp.dot(jnp.concatenate([xn_b, hrms_b], axis=-1), w14_spat_ref[...],
                        preferred_element_type=jnp.float32) + spat_tb
    base_spec = jnp.dot(jnp.concatenate([xn_b, lrhs_b], axis=-1), w14_spec_ref[...],
                        preferred_element_type=jnp.float32) + spec_tb

    def prior_h0(x, base, w23_ref):
        # H == 0: h@W3 vanishes, only x@W2 (top half of [W2;W3]) is needed.
        acc = base + jnp.dot(x.astype(jnp.bfloat16), w23_ref[:C_PAD, :],
                             preferred_element_type=jnp.float32)
        return x + jnp.tanh(acc)

    def prior(x, h, base, w23_ref):
        # x@W2 + h@W3 as a single K=2C dot to keep the MXU K dimension full.
        xh = jnp.concatenate([x.astype(jnp.bfloat16), h.astype(jnp.bfloat16)], axis=-1)
        acc = base + jnp.dot(xh, w23_ref[...], preferred_element_type=jnp.float32)
        return x + jnp.tanh(acc)

    # TODO(synk): real SpatDataIntegrity compares against F.interpolate(LRHS, 0.25);
    # the synthesized elementwise form uses the lrhs tile directly.
    y_spat = lrhs
    y_spec = hrms

    # Stage 0 (H0 == 0 exploited algebraically).
    X0_Spat = prior_h0(lrhs, base_spat, w23_spat_ref)
    # NOTE: the reference module passes H0_Spat (== 0) here, not H0_Spec.
    X0_Spec = prior_h0(lrhs, base_spec, w23_spec_ref)

    H1_Spat = eta_spat * (y_spat - X0_Spat)
    X1_Spat = prior(X0_Spec, H1_Spat, base_spat, w23_spat_ref)
    H1_Spec = eta_spec * (y_spec - X0_Spec)
    X1_Spec = prior(X1_Spat, H1_Spec, base_spec, w23_spec_ref)

    H2_Spat = H1_Spat + eta_spat * (y_spat - X1_Spat)
    X2_Spat = prior(X1_Spec, H2_Spat, base_spat, w23_spat_ref)
    H2_Spec = H1_Spec + eta_spec * (y_spec - X1_Spec)
    # NOTE: the reference module uses X1_Spat (not X2_Spat) here.
    X2_Spec = prior(X1_Spat, H2_Spec, base_spec, w23_spec_ref)

    xspec_out_ref[0] = X2_Spec.astype(xspec_out_ref.dtype)
    xspat_out_ref[0] = X2_Spat.astype(xspat_out_ref.dtype)


# ----------------------------------------------------------------------------
# Wrapper glue: layout conversion, padding, weight stacking, temb projection.
# ----------------------------------------------------------------------------
def _choose_tile(hw, batch):
    tile = min(MAX_TILE, max(8, ((hw + 7) // 8) * 8))
    # v7x has 2 TensorCores: guarantee >= 2 grid steps so neither sits idle.
    if batch * pl.cdiv(hw, tile) < 2 and hw > 8:
        tile = max(8, ((pl.cdiv(hw, 2) + 7) // 8) * 8)
    return tile


def _to_flat_padded(x_nchw, hw_pad, c_pad):
    # TODO(synk): if the surrounding model can keep activations in NHWC/bf16,
    # this transpose+pad HBM pass can be dropped entirely.
    B, C, H, W = x_nchw.shape
    x = jnp.transpose(x_nchw, (0, 2, 3, 1)).reshape(B, H * W, C)
    return jnp.pad(x, ((0, 0), (0, hw_pad - H * W), (0, c_pad - C)))


def _stack_pair(p, k_top, k_bot, c, c_pad):
    wt = jnp.pad(p[k_top], ((0, c_pad - c), (0, c_pad - c)))
    wb = jnp.pad(p[k_bot], ((0, c_pad - c), (0, c_pad - c)))
    return jnp.concatenate([wt, wb], axis=0).astype(jnp.bfloat16)   # (2*c_pad, c_pad)


def _time_bias(p, temb, c, c_pad):
    wt = jnp.pad(p["wt"], ((0, 0), (0, c_pad - c)))          # (T, c_pad)
    b = jnp.pad(p["b"], ((0, 0), (0, c_pad - c)))            # (1, c_pad)
    tb = temb @ wt + b                                       # (B, c_pad)
    return tb[:, None, :].astype(jnp.float32)                # (B, 1, c_pad)


def s2td_forward(params, LRHS, HRMS, LRHS_noisy, time_emb):
    B, C, H, W = LRHS.shape
    HW = H * W
    TILE = _choose_tile(HW, B)
    n_tiles = pl.cdiv(HW, TILE)
    hw_pad = n_tiles * TILE

    lrhs = _to_flat_padded(LRHS, hw_pad, C_PAD)
    hrms = _to_flat_padded(HRMS, hw_pad, C_PAD)
    lrhs_n = _to_flat_padded(LRHS_noisy, hw_pad, C_PAD)

    temb = time_emb.reshape(B, -1).astype(jnp.float32)
    spat_tb = _time_bias(params["spat"], temb, C, C_PAD)
    spec_tb = _time_bias(params["spec"], temb, C, C_PAD)
    w14_spat = _stack_pair(params["spat"], "w1", "w4", C, C_PAD)
    w23_spat = _stack_pair(params["spat"], "w2", "w3", C, C_PAD)
    w14_spec = _stack_pair(params["spec"], "w1", "w4", C, C_PAD)
    w23_spec = _stack_pair(params["spec"], "w2", "w3", C, C_PAD)
    etas = jnp.stack([params["eta_spat"], params["eta_spec"]]).astype(jnp.float32)

    img_spec = pl.BlockSpec((1, TILE, C_PAD), lambda b, i: (b, i, 0))
    tb_spec = pl.BlockSpec((1, 1, C_PAD), lambda b, i: (b, 0, 0))
    vmem_resident = pl.BlockSpec(memory_space=pltpu.MemorySpace.VMEM)   # untiled, 1-buffer
    smem_spec = pl.BlockSpec(memory_space=pltpu.MemorySpace.SMEM)

    # Advisory cost estimate so XLA schedules the surrounding layout ops sensibly.
    steps = B * n_tiles
    k_total = 2 * (2 * C_PAD) + 2 * C_PAD + 4 * (2 * C_PAD)            # 14 * C_PAD
    cost = pl.CostEstimate(
        flops=steps * 2 * TILE * k_total * C_PAD,
        transcendentals=steps * 6 * TILE * C_PAD,
        bytes_accessed=(5 * B * hw_pad * C_PAD * 4            # 3 inputs + 2 outputs, f32
                        + 4 * 2 * C_PAD * C_PAD * 2            # bf16 weights
                        + 2 * B * C_PAD * 4 + 8))              # time bias + etas

    out_sds = jax.ShapeDtypeStruct((B, hw_pad, C_PAD), jnp.float32)
    X2_Spec, X2_Spat = pl.pallas_call(
        _s2td_kernel,
        out_shape=(out_sds, out_sds),
        grid=(B, n_tiles),
        in_specs=[smem_spec,
                  img_spec, img_spec, img_spec,
                  tb_spec, tb_spec,
                  vmem_resident, vmem_resident, vmem_resident, vmem_resident],
        out_specs=(img_spec, img_spec),
        compiler_params=pltpu.CompilerParams(
            dimension_semantics=("parallel", "parallel"),
            vmem_limit_bytes=48 * 1024 * 1024),
        cost_estimate=cost,
    )(etas, lrhs_n, lrhs, hrms, spat_tb, spec_tb,
      w14_spat, w23_spat, w14_spec, w23_spec)

    def unflat(x):
        x = x[:, :HW, :C].reshape(B, H, W, C)
        return jnp.transpose(x, (0, 3, 1, 2))

    return unflat(X2_Spec), unflat(X2_Spat)


# ----------------------------------------------------------------------------
# Parameter init
# ----------------------------------------------------------------------------
def init_prior_params(key, c, t):
    ks = jax.random.split(key, 6)
    s = 0.02
    return {
        "w1": s * jax.random.normal(ks[0], (c, c), jnp.float32),
        "w2": s * jax.random.normal(ks[1], (c, c), jnp.float32),
        "w3": s * jax.random.normal(ks[2], (c, c), jnp.float32),
        "w4": s * jax.random.normal(ks[3], (c, c), jnp.float32),
        "wt": s * jax.random.normal(ks[4], (t, c), jnp.float32),
        "b": s * jax.random.normal(ks[5], (1, c), jnp.float32),
    }


def init_s2td_params(key, c=HS_CHANNELS, t=TIME_DIM):
    k_spat, k_spec = jax.random.split(key)
    return {
        "spat": init_prior_params(k_spat, c, t),
        "spec": init_prior_params(k_spec, c, t),
        "eta_spat": jnp.float32(0.1),   # learnable/traceable scalars (SMEM input)
        "eta_spec": jnp.float32(0.1),
    }


# ----------------------------------------------------------------------------
if __name__ == "__main__":
    B, C, H, W, T = 2, HS_CHANNELS, 16, 16, TIME_DIM

    key = jax.random.PRNGKey(0)
    k_par, k1, k2, k3, k4 = jax.random.split(key, 5)

    params = init_s2td_params(k_par, C, T)

    LRHS = jax.random.normal(k1, (B, C, H, W), jnp.float32)
    HRMS = jax.random.normal(k2, (B, C, H, W), jnp.float32)
    LRHS_noisy = LRHS + 0.1 * jax.random.normal(k3, (B, C, H, W), jnp.float32)
    time_emb = jax.random.normal(k4, (B, T), jnp.float32)

    fwd = jax.jit(s2td_forward)
    X2_Spec, X2_Spat = fwd(params, LRHS, HRMS, LRHS_noisy, time_emb)
    jax.block_until_ready((X2_Spec, X2_Spat))

    assert X2_Spec.shape == (B, C, H, W) and X2_Spat.shape == (B, C, H, W)
    assert bool(jnp.all(jnp.isfinite(X2_Spec))) and bool(jnp.all(jnp.isfinite(X2_Spat)))
    print("KERNEL_OK")
</pallas_src>

<mosaic_0001>
module attributes {stable_mosaic.version = 11 : i64} {
  func.func @_s2td_kernel(%arg0: i32, %arg1: i32, %arg2: memref<2xf32, #tpu.memory_space<smem>>, %arg3: memref<1x256x128xf32, #tpu.memory_space<vmem>>, %arg4: memref<1x256x128xf32, #tpu.memory_space<vmem>>, %arg5: memref<1x256x128xf32, #tpu.memory_space<vmem>>, %arg6: memref<1x1x128xf32, #tpu.memory_space<vmem>>, %arg7: memref<1x1x128xf32, #tpu.memory_space<vmem>>, %arg8: memref<256x128xbf16, #tpu.memory_space<vmem>>, %arg9: memref<256x128xbf16, #tpu.memory_space<vmem>>, %arg10: memref<256x128xbf16, #tpu.memory_space<vmem>>, %arg11: memref<256x128xbf16, #tpu.memory_space<vmem>>, %arg12: memref<1x256x128xf32, #tpu.memory_space<vmem>>, %arg13: memref<1x256x128xf32, #tpu.memory_space<vmem>>) attributes {dimension_semantics = [#tpu.dimension_semantics<parallel>, #tpu.dimension_semantics<parallel>], iteration_bounds = array<i64: 2, 1>, scalar_prefetch = 0 : i64, scratch_operands = 0 : i64, tpu.core_type = #tpu.core_type<tc>, window_params = [{transform_indices = @transform_0, window_bounds = array<i64: 2>}, {transform_indices = @transform_1, window_bounds = array<i64: 1, 256, 128>}, {transform_indices = @transform_2, window_bounds = array<i64: 1, 256, 128>}, {transform_indices = @transform_3, window_bounds = array<i64: 1, 256, 128>}, {transform_indices = @transform_4, window_bounds = array<i64: 1, 1, 128>}, {transform_indices = @transform_5, window_bounds = array<i64: 1, 1, 128>}, {pipeline_mode = #tpu.pipeline_mode<synchronous>, transform_indices = @transform_6, window_bounds = array<i64: 256, 128>}, {pipeline_mode = #tpu.pipeline_mode<synchronous>, transform_indices = @transform_7, window_bounds = array<i64: 256, 128>}, {pipeline_mode = #tpu.pipeline_mode<synchronous>, transform_indices = @transform_8, window_bounds = array<i64: 256, 128>}, {pipeline_mode = #tpu.pipeline_mode<synchronous>, transform_indices = @transform_9, window_bounds = array<i64: 256, 128>}, {transform_indices = @transform_10, window_bounds = array<i64: 1, 256, 128>}, {transform_indices = @transform_11, window_bounds = array<i64: 1, 256, 128>}]} {
    %c0 = arith.constant 0 : index
    %c0_0 = arith.constant 0 : index
    %c0_1 = arith.constant 0 : index
    %0 = vector.load %arg3[%c0, %c0_0, %c0_1] : memref<1x256x128xf32, #tpu.memory_space<vmem>>, vector<1x256x128xf32>
    %1 = vector.shape_cast %0 : vector<1x256x128xf32> to vector<256x128xf32>
    %c0_2 = arith.constant 0 : index
    %c0_3 = arith.constant 0 : index
    %c0_4 = arith.constant 0 : index
    %2 = vector.load %arg4[%c0_2, %c0_3, %c0_4] : memref<1x256x128xf32, #tpu.memory_space<vmem>>, vector<1x256x128xf32>
    %3 = vector.shape_cast %2 : vector<1x256x128xf32> to vector<256x128xf32>
    %c0_5 = arith.constant 0 : index
    %c0_6 = arith.constant 0 : index
    %c0_7 = arith.constant 0 : index
    %4 = vector.load %arg5[%c0_5, %c0_6, %c0_7] : memref<1x256x128xf32, #tpu.memory_space<vmem>>, vector<1x256x128xf32>
    %5 = vector.shape_cast %4 : vector<1x256x128xf32> to vector<256x128xf32>
    %c0_8 = arith.constant 0 : index
    %c0_9 = arith.constant 0 : index
    %c0_10 = arith.constant 0 : index
    %6 = vector.load %arg6[%c0_8, %c0_9, %c0_10] : memref<1x1x128xf32, #tpu.memory_space<vmem>>, vector<1x1x128xf32>
    %7 = vector.shape_cast %6 : vector<1x1x128xf32> to vector<1x128xf32>
    %c0_11 = arith.constant 0 : index
    %c0_12 = arith.constant 0 : index
    %c0_13 = arith.constant 0 : index
    %8 = vector.load %arg7[%c0_11, %c0_12, %c0_13] : memref<1x1x128xf32, #tpu.memory_space<vmem>>, vector<1x1x128xf32>
    %9 = vector.shape_cast %8 : vector<1x1x128xf32> to vector<1x128xf32>
    %c0_14 = arith.constant 0 : index
    %10 = memref.load %arg2[%c0_14] : memref<2xf32, #tpu.memory_space<smem>>
    %c1 = arith.constant 1 : index
    %11 = memref.load %arg2[%c1] : memref<2xf32, #tpu.memory_space<smem>>
    %12 = arith.truncf %1 : vector<256x128xf32> to vector<256x128xbf16>
    %13 = arith.truncf %3 : vector<256x128xf32> to vector<256x128xbf16>
    %14 = arith.truncf %5 : vector<256x128xf32> to vector<256x128xbf16>
    %15 = tpu.concatenate %12, %14 in 1 : vector<256x128xbf16>, vector<256x128xbf16> -> vector<256x256xbf16>
    %c0_15 = arith.constant 0 : index
    %c0_16 = arith.constant 0 : index
    %16 = vector.load %arg8[%c0_15, %c0_16] : memref<256x128xbf16, #tpu.memory_space<vmem>>, vector<256x128xbf16>
    %cst = arith.constant dense<0.000000e+00> : vector<256x128xf32>
    %17 = tpu.matmul %15, %16, %cst {dimension_numbers = #tpu.dot_dimension_numbers<[1], [0], [0], [1], [0, 0, 1, 1], [], []>} : vector<256x256xbf16>, vector<256x128xbf16>, vector<256x128xf32> -> vector<256x128xf32>
    %18 = vector.broadcast %7 : vector<1x128xf32> to vector<256x128xf32>
    %19 = arith.addf %17, %18 : vector<256x128xf32>
    %20 = tpu.concatenate %12, %13 in 1 : vector<256x128xbf16>, vector<256x128xbf16> -> vector<256x256xbf16>
    %c0_17 = arith.constant 0 : index
    %c0_18 = arith.constant 0 : index
    %21 = vector.load %arg10[%c0_17, %c0_18] : memref<256x128xbf16, #tpu.memory_space<vmem>>, vector<256x128xbf16>
    %cst_19 = arith.constant dense<0.000000e+00> : vector<256x128xf32>
    %22 = tpu.matmul %20, %21, %cst_19 {dimension_numbers = #tpu.dot_dimension_numbers<[1], [0], [0], [1], [0, 0, 1, 1], [], []>} : vector<256x256xbf16>, vector<256x128xbf16>, vector<256x128xf32> -> vector<256x128xf32>
    %23 = vector.broadcast %9 : vector<1x128xf32> to vector<256x128xf32>
    %24 = arith.addf %22, %23 : vector<256x128xf32>
    %25 = arith.truncf %3 : vector<256x128xf32> to vector<256x128xbf16>
    %c0_20 = arith.constant 0 : index
    %c0_21 = arith.constant 0 : index
    %26 = vector.load %arg9[%c0_20, %c0_21] : memref<256x128xbf16, #tpu.memory_space<vmem>>, vector<128x128xbf16>
    %cst_22 = arith.constant dense<0.000000e+00> : vector<256x128xf32>
    %27 = tpu.matmul %25, %26, %cst_22 {dimension_numbers = #tpu.dot_dimension_numbers<[1], [0], [0], [1], [0, 0, 1, 1], [], []>} : vector<256x128xbf16>, vector<128x128xbf16>, vector<256x128xf32> -> vector<256x128xf32>
    %28 = arith.addf %19, %27 : vector<256x128xf32>
    %29 = math.tanh %28 : vector<256x128xf32>
    %30 = arith.addf %3, %29 : vector<256x128xf32>
    %31 = arith.truncf %3 : vector<256x128xf32> to vector<256x128xbf16>
    %c0_23 = arith.constant 0 : index
    %c0_24 = arith.constant 0 : index
    %32 = vector.load %arg11[%c0_23, %c0_24] : memref<256x128xbf16, #tpu.memory_space<vmem>>, vector<128x128xbf16>
    %cst_25 = arith.constant dense<0.000000e+00> : vector<256x128xf32>
    %33 = tpu.matmul %31, %32, %cst_25 {dimension_numbers = #tpu.dot_dimension_numbers<[1], [0], [0], [1], [0, 0, 1, 1], [], []>} : vector<256x128xbf16>, vector<128x128xbf16>, vector<256x128xf32> -> vector<256x128xf32>
    %34 = arith.addf %24, %33 : vector<256x128xf32>
    %35 = math.tanh %34 : vector<256x128xf32>
    %36 = arith.addf %3, %35 : vector<256x128xf32>
    %37 = arith.subf %3, %30 : vector<256x128xf32>
    %38 = vector.broadcast %10 : f32 to vector<256x128xf32>
    %39 = arith.mulf %38, %37 : vector<256x128xf32>
    %40 = arith.truncf %36 : vector<256x128xf32> to vector<256x128xbf16>
    %41 = arith.truncf %39 : vector<256x128xf32> to vector<256x128xbf16>
    %42 = tpu.concatenate %40, %41 in 1 : vector<256x128xbf16>, vector<256x128xbf16> -> vector<256x256xbf16>
    %c0_26 = arith.constant 0 : index
    %c0_27 = arith.constant 0 : index
    %43 = vector.load %arg9[%c0_26, %c0_27] : memref<256x128xbf16, #tpu.memory_space<vmem>>, vector<256x128xbf16>
    %cst_28 = arith.constant dense<0.000000e+00> : vector<256x128xf32>
    %44 = tpu.matmul %42, %43, %cst_28 {dimension_numbers = #tpu.dot_dimension_numbers<[1], [0], [0], [1], [0, 0, 1, 1], [], []>} : vector<256x256xbf16>, vector<256x128xbf16>, vector<256x128xf32> -> vector<256x128xf32>
    %45 = arith.addf %19, %44 : vector<256x128xf32>
    %46 = math.tanh %45 : vector<256x128xf32>
    %47 = arith.addf %36, %46 : vector<256x128xf32>
    %48 = arith.subf %5, %36 : vector<256x128xf32>
    %49 = vector.broadcast %11 : f32 to vector<256x128xf32>
    %50 = arith.mulf %49, %48 : vector<256x128xf32>
    %51 = arith.truncf %47 : vector<256x128xf32> to vector<256x128xbf16>
    %52 = arith.truncf %50 : vector<256x128xf32> to vector<256x128xbf16>
    %53 = tpu.concatenate %51, %52 in 1 : vector<256x128xbf16>, vector<256x128xbf16> -> vector<256x256xbf16>
    %c0_29 = arith.constant 0 : index
    %c0_30 = arith.constant 0 : index
    %54 = vector.load %arg11[%c0_29, %c0_30] : memref<256x128xbf16, #tpu.memory_space<vmem>>, vector<256x128xbf16>
    %cst_31 = arith.constant dense<0.000000e+00> : vector<256x128xf32>
    %55 = tpu.matmul %53, %54, %cst_31 {dimension_numbers = #tpu.dot_dimension_numbers<[1], [0], [0], [1], [0, 0, 1, 1], [], []>} : vector<256x256xbf16>, vector<256x128xbf16>, vector<256x128xf32> -> vector<256x128xf32>
    %56 = arith.addf %24, %55 : vector<256x128xf32>
    %57 = math.tanh %56 : vector<256x128xf32>
    %58 = arith.addf %47, %57 : vector<256x128xf32>
    %59 = arith.subf %3, %47 : vector<256x128xf32>
    %60 = vector.broadcast %10 : f32 to vector<256x128xf32>
    %61 = arith.mulf %60, %59 : vector<256x128xf32>
    %62 = arith.addf %39, %61 : vector<256x128xf32>
    %63 = arith.truncf %58 : vector<256x128xf32> to vector<256x128xbf16>
    %64 = arith.truncf %62 : vector<256x128xf32> to vector<256x128xbf16>
    %65 = tpu.concatenate %63, %64 in 1 : vector<256x128xbf16>, vector<256x128xbf16> -> vector<256x256xbf16>
    %c0_32 = arith.constant 0 : index
    %c0_33 = arith.constant 0 : index
    %66 = vector.load %arg9[%c0_32, %c0_33] : memref<256x128xbf16, #tpu.memory_space<vmem>>, vector<256x128xbf16>
    %cst_34 = arith.constant dense<0.000000e+00> : vector<256x128xf32>
    %67 = tpu.matmul %65, %66, %cst_34 {dimension_numbers = #tpu.dot_dimension_numbers<[1], [0], [0], [1], [0, 0, 1, 1], [], []>} : vector<256x256xbf16>, vector<256x128xbf16>, vector<256x128xf32> -> vector<256x128xf32>
    %68 = arith.addf %19, %67 : vector<256x128xf32>
    %69 = math.tanh %68 : vector<256x128xf32>
    %70 = arith.addf %58, %69 : vector<256x128xf32>
    %71 = arith.subf %5, %58 : vector<256x128xf32>
    %72 = vector.broadcast %11 : f32 to vector<256x128xf32>
    %73 = arith.mulf %72, %71 : vector<256x128xf32>
    %74 = arith.addf %50, %73 : vector<256x128xf32>
    %75 = arith.truncf %47 : vector<256x128xf32> to vector<256x128xbf16>
    %76 = arith.truncf %74 : vector<256x128xf32> to vector<256x128xbf16>
    %77 = tpu.concatenate %75, %76 in 1 : vector<256x128xbf16>, vector<256x128xbf16> -> vector<256x256xbf16>
    %c0_35 = arith.constant 0 : index
    %c0_36 = arith.constant 0 : index
    %78 = vector.load %arg11[%c0_35, %c0_36] : memref<256x128xbf16, #tpu.memory_space<vmem>>, vector<256x128xbf16>
    %cst_37 = arith.constant dense<0.000000e+00> : vector<256x128xf32>
    %79 = tpu.matmul %77, %78, %cst_37 {dimension_numbers = #tpu.dot_dimension_numbers<[1], [0], [0], [1], [0, 0, 1, 1], [], []>} : vector<256x256xbf16>, vector<256x128xbf16>, vector<256x128xf32> -> vector<256x128xf32>
    %80 = arith.addf %24, %79 : vector<256x128xf32>
    %81 = math.tanh %80 : vector<256x128xf32>
    %82 = arith.addf %47, %81 : vector<256x128xf32>
    %c0_38 = arith.constant 0 : index
    %c0_39 = arith.constant 0 : index
    %c0_40 = arith.constant 0 : index
    %83 = vector.load %arg12[%c0_38, %c0_39, %c0_40] : memref<1x256x128xf32, #tpu.memory_space<vmem>>, vector<1x256x128xf32>
    %84 = vector.shape_cast %83 : vector<1x256x128xf32> to vector<256x128xf32>
    %85 = vector.shape_cast %82 : vector<256x128xf32> to vector<1x256x128xf32>
    tpu.vector_store %arg12[%c0_38, %c0_39, %c0_40], %85 {strides = array<i32>} : memref<1x256x128xf32, #tpu.memory_space<vmem>>, vector<1x256x128xf32>,
    %c0_41 = arith.constant 0 : index
    %c0_42 = arith.constant 0 : index
    %c0_43 = arith.constant 0 : index
    %86 = vector.load %arg13[%c0_41, %c0_42, %c0_43] : memref<1x256x128xf32, #tpu.memory_space<vmem>>, vector<1x256x128xf32>
    %87 = vector.shape_cast %86 : vector<1x256x128xf32> to vector<256x128xf32>
    %88 = vector.shape_cast %70 : vector<256x128xf32> to vector<1x256x128xf32>
    tpu.vector_store %arg13[%c0_41, %c0_42, %c0_43], %88 {strides = array<i32>} : memref<1x256x128xf32, #tpu.memory_space<vmem>>, vector<1x256x128xf32>,
    return
  }
  func.func @transform_0(%arg0: i32, %arg1: i32) -> i32 {
    %c0_i32 = arith.constant 0 : i32
    %c0_i32_0 = arith.constant 0 : i32
    return %c0_i32 : i32
  }
  func.func @transform_1(%arg0: i32, %arg1: i32) -> (i32, i32, i32) {
    %c0_i32 = arith.constant 0 : i32
    %c0_i32_0 = arith.constant 0 : i32
    return %arg0, %arg1, %c0_i32 : i32, i32, i32
  }
  func.func @transform_2(%arg0: i32, %arg1: i32) -> (i32, i32, i32) {
    %c0_i32 = arith.constant 0 : i32
    %c0_i32_0 = arith.constant 0 : i32
    return %arg0, %arg1, %c0_i32 : i32, i32, i32
  }
  func.func @transform_3(%arg0: i32, %arg1: i32) -> (i32, i32, i32) {
    %c0_i32 = arith.constant 0 : i32
    %c0_i32_0 = arith.constant 0 : i32
    return %arg0, %arg1, %c0_i32 : i32, i32, i32
  }
  func.func @transform_4(%arg0: i32, %arg1: i32) -> (i32, i32, i32) {
    %c0_i32 = arith.constant 0 : i32
    %c0_i32_0 = arith.constant 0 : i32
    %c0_i32_1 = arith.constant 0 : i32
    return %arg0, %c0_i32, %c0_i32_0 : i32, i32, i32
  }
  func.func @transform_5(%arg0: i32, %arg1: i32) -> (i32, i32, i32) {
    %c0_i32 = arith.constant 0 : i32
    %c0_i32_0 = arith.constant 0 : i32
    %c0_i32_1 = arith.constant 0 : i32
    return %arg0, %c0_i32, %c0_i32_0 : i32, i32, i32
  }
  func.func @transform_6(%arg0: i32, %arg1: i32) -> (i32, i32) {
    %c0_i32 = arith.constant 0 : i32
    %c0_i32_0 = arith.constant 0 : i32
    %c0_i32_1 = arith.constant 0 : i32
    return %c0_i32, %c0_i32_0 : i32, i32
  }
  func.func @transform_7(%arg0: i32, %arg1: i32) -> (i32, i32) {
    %c0_i32 = arith.constant 0 : i32
    %c0_i32_0 = arith.constant 0 : i32
    %c0_i32_1 = arith.constant 0 : i32
    return %c0_i32, %c0_i32_0 : i32, i32
  }
  func.func @transform_8(%arg0: i32, %arg1: i32) -> (i32, i32) {
    %c0_i32 = arith.constant 0 : i32
    %c0_i32_0 = arith.constant 0 : i32
    %c0_i32_1 = arith.constant 0 : i32
    return %c0_i32, %c0_i32_0 : i32, i32
  }
  func.func @transform_9(%arg0: i32, %arg1: i32) -> (i32, i32) {
    %c0_i32 = arith.constant 0 : i32
    %c0_i32_0 = arith.constant 0 : i32
    %c0_i32_1 = arith.constant 0 : i32
    return %c0_i32, %c0_i32_0 : i32, i32
  }
  func.func @transform_10(%arg0: i32, %arg1: i32) -> (i32, i32, i32) {
    %c0_i32 = arith.constant 0 : i32
    %c0_i32_0 = arith.constant 0 : i32
    return %arg0, %arg1, %c0_i32 : i32, i32, i32
  }
  func.func @transform_11(%arg0: i32, %arg1: i32) -> (i32, i32, i32) {
    %c0_i32 = arith.constant 0 : i32
    %c0_i32_0 = arith.constant 0 : i32
    return %arg0, %arg1, %c0_i32 : i32, i32, i32
  }
}

</mosaic_0001>

<llo_original>
// kernel: s2td_forward.1
$region0: #{s2td_forward.1}
  #allocation0 [shape = 'u32[]', space=smem, size = 0x4, offset = 0x4, fixed_abs, tag = 'smem constant byte address 0x4 - core index']
  #allocation1 [shape = 'u32[72,128]{1,0:T(1,128)}', space=vmem, size = 0x9000, scoped, tag = 'internal scratch']
  %s0 = inlined_call_operand.vmem [shape: f32[2], index: 0, kind: input, shape index: {}]
  %s1 = inlined_call_operand.vmem [shape: f32[2,256,128], index: 1, kind: input, shape index: {}]
  %s2 = inlined_call_operand.vmem [shape: f32[2,256,128], index: 2, kind: input, shape index: {}]
  %s3 = inlined_call_operand.vmem [shape: f32[2,256,128], index: 3, kind: input, shape index: {}]
  %s4 = inlined_call_operand.vmem [shape: f32[2,1,128], index: 4, kind: input, shape index: {}]
  %s5 = inlined_call_operand.vmem [shape: f32[2,1,128], index: 5, kind: input, shape index: {}]
  %s6 = inlined_call_operand.vmem [shape: bf16[256,128], index: 6, kind: input, shape index: {}]
  %s7 = inlined_call_operand.vmem [shape: bf16[256,128], index: 7, kind: input, shape index: {}]
  %s8 = inlined_call_operand.vmem [shape: bf16[256,128], index: 8, kind: input, shape index: {}]
  %s9 = inlined_call_operand.vmem [shape: bf16[256,128], index: 9, kind: input, shape index: {}]
  %s10 = inlined_call_operand.hbm [shape: f32[2,256,128], index: 10, kind: output, shape index: {0}]
  %s11 = inlined_call_operand.hbm [shape: f32[2,256,128], index: 11, kind: output, shape index: {1}]
  %12 = xla_tuple %s10, %s11
  %s13 = sld [smem:[#allocation0]]
  $region85: #{s2td_forward.1} parent=0
    _
  %s15 = ssub.s32 1, %s13
  %s16 = scalar_select 0, %s15, %s13
  $region1: #{s2td_forward.1} parent=0
    #allocation2 [shape = 'u8[512]{0}', space=smem, size = 0x200, scoped, tag = 'input window, operand 0, single buffered']
    #allocation3 [shape = 's32[2]{0}', space=sflag, size = 0x8, scoped, tag = 'scoped memory for s2td_forward.1']
    #allocation4 [shape = 's32[2]{0}', space=sflag, size = 0x8, scoped, tag = 'scoped memory for s2td_forward.1']
    #allocation5 [shape = 'u8[262144]{0}', space=vmem, size = 0x40000, scoped, tag = 'output window, operand 0']
    #allocation6 [shape = 'u8[262144]{0}', space=vmem, size = 0x40000, scoped, tag = 'output window, operand 1']
    #allocation7 [shape = 's32[2]{0}', space=sflag, size = 0x8, scoped, tag = 'scoped memory for s2td_forward.1']
    %17 = vsyncpa [#allocation4], 0
    %18 = vsyncpa [#allocation3], 0
    %s19 = scalar_lea.sflag [#allocation3], 1
    %20 = vsyncpa %s19, 0
    %21 = vsyncpa [#allocation7], 0
    %s22 = scalar_lea.sflag [#allocation7], 1
    %23 = vsyncpa %s22, 0
    loop: start=0, step=1, limit=4
    $region2: #{s2td_forward.1} parent=1 // loop_pre_header
      _
    $region3: #{s2td_forward.1} parent=1 // loop_header
      %s25 = sphi 0, %s29
      %p26 = scmp.ge.s32.totalorder %s25, 4
      %s32 = sphi 0, %s44
      %s33 = sphi 0, %s40
      %s34 = sphi 0, %s32
      %s35 = sphi 0, %s33
      %s36 = sphi 0, %s34
      %s37 = sphi 0, %s35
      %s45 = sphi 0, %s45
      %s47 = sphi 0, %s45
      %s48 = sphi 0, %s47
      %s62 = sphi 0, %s48
      %s70 = sphi 0, %s72
      %s73 = sphi 0, %s70
      %s74 = sphi 0, %s73
      %s90 = sphi 0, %s74
      %s98 = sphi 0, %s100
      %s101 = sphi 0, %s98
      %s102 = sphi 0, %s101
      %s118 = sphi 0, %s102
      %s126 = sphi 0, %s128
      %s129 = sphi 0, %s126
      %s130 = sphi 0, %s129
      %s146 = sphi 0, %s130
      %s152 = sphi 0, %s154
      %s155 = sphi 0, %s152
      %s156 = sphi 0, %s155
      %s172 = sphi 0, %s156
      %s178 = sphi 0, %s180
      %s181 = sphi 0, %s178
      %s182 = sphi 0, %s181
      %s198 = sphi 0, %s182
      %s202 = sphi 0, %s202
      %s204 = sphi 0, %s202
      %s205 = sphi 0, %s204
      %s219 = sphi 0, %s205
      %s223 = sphi 0, %s223
      %s225 = sphi 0, %s223
      %s226 = sphi 0, %s225
      %s240 = sphi 0, %s226
      %s244 = sphi 0, %s244
      %s246 = sphi 0, %s244
      %s247 = sphi 0, %s246
      %s261 = sphi 0, %s247
      %s265 = sphi 0, %s265
      %s267 = sphi 0, %s265
      %s268 = sphi 0, %s267
      %s282 = sphi 0, %s268
      %s290 = sphi 0, %s292
      %s293 = sphi 0, %s290
      %s294 = sphi 0, %s293
      %s310 = sphi 0, %s294
      %s318 = sphi 0, %s320
      %s321 = sphi 0, %s318
      %s322 = sphi 0, %s321
      %s338 = sphi 0, %s322
    $region4: #{s2td_forward.1} parent=1 // loop_header_branch
      %28 = sbr.rel (%p26) target = $region8
    $region5: #{s2td_forward.1} parent=1 // loop_body
      %s30 = ssub.s32 %s25, 1
      %s31 = ssub.s32 %s25, 2
      %s38 = sadd.s32 1, %s33
      %p39 = scmp.ge.s32.totalorder %s38, 1
      %s40 = scalar_select %p39, 0, %s38
      %s41 = sadd.s32 1, %s32
      %s42 = scalar_select %p39, %s41, %s32
      %p43 = scmp.ge.s32.totalorder %s42, 2
      %s44 = scalar_select %p43, 0, %s42
      %s46 = sadd.s32 %s45, 1
      %p49 = scmp.eq.s32.totalorder %s25, 1
      %p50 = scmp.ne.s32.totalorder %s45, %s47
      %p51 = scmp.eq.s32.totalorder %s25, 0
      %p52 = por %p50, %p51
      %p53 = scmp.ne.s32.totalorder %s45, %s47
      %p54 = scmp.eq.s32.totalorder %s30, 1
      %p55 = por %p53, %p54
      %p56 = scmp.ne.s32.totalorder %s47, %s48
      %p57 = scmp.eq.s32.totalorder %s30, 0
      %p58 = por %p56, %p57
      %p59 = scmp.ne.s32.totalorder %s47, %s48
      %p60 = scmp.eq.s32.totalorder %s31, 1
      %p61 = por %p59, %p60
      %p63 = scmp.ne.s32.totalorder %s48, %s62
      %p64 = scmp.eq.s32.totalorder %s31, 0
      %p65 = por %p63, %p64
      %s66 = ssub.s32 %s32, %s44
      %s67 = ssub.s32 %s33, %s40
      %s68 = sor.u32 %s66, %s67
      %p69 = scmp.eq.s32.totalorder %s68, 0
      %s71 = sadd.s32 %s70, 1
      %s72 = scalar_select %p69, %s70, %s71
      %p75 = pneg %p69
      %p76 = scmp.eq.s32.totalorder %s25, 1
      %p77 = por %p75, %p76
      %p78 = scmp.ne.s32.totalorder %s70, %s73
      %p79 = scmp.eq.s32.totalorder %s25, 0
      %p80 = por %p78, %p79
      %p81 = scmp.ne.s32.totalorder %s70, %s73
      %p82 = scmp.eq.s32.totalorder %s30, 1
      %p83 = por %p81, %p82
      %p84 = scmp.ne.s32.totalorder %s73, %s74
      %p85 = scmp.eq.s32.totalorder %s30, 0
      %p86 = por %p84, %p85
      %p87 = scmp.ne.s32.totalorder %s73, %s74
      %p88 = scmp.eq.s32.totalorder %s31, 1
      %p89 = por %p87, %p88
      %p91 = scmp.ne.s32.totalorder %s74, %s90
      %p92 = scmp.eq.s32.totalorder %s31, 0
      %p93 = por %p91, %p92
      %s94 = ssub.s32 %s32, %s44
      %s95 = ssub.s32 %s33, %s40
      %s96 = sor.u32 %s94, %s95
      %p97 = scmp.eq.s32.totalorder %s96, 0
      %s99 = sadd.s32 %s98, 1
      %s100 = scalar_select %p97, %s98, %s99
      %p103 = pneg %p97
      %p104 = scmp.eq.s32.totalorder %s25, 1
      %p105 = por %p103, %p104
      %p106 = scmp.ne.s32.totalorder %s98, %s101
      %p107 = scmp.eq.s32.totalorder %s25, 0
      %p108 = por %p106, %p107
      %p109 = scmp.ne.s32.totalorder %s98, %s101
      %p110 = scmp.eq.s32.totalorder %s30, 1
      %p111 = por %p109, %p110
      %p112 = scmp.ne.s32.totalorder %s101, %s102
      %p113 = scmp.eq.s32.totalorder %s30, 0
      %p114 = por %p112, %p113
      %p115 = scmp.ne.s32.totalorder %s101, %s102
      %p116 = scmp.eq.s32.totalorder %s31, 1
      %p117 = por %p115, %p116
      %p119 = scmp.ne.s32.totalorder %s102, %s118
      %p120 = scmp.eq.s32.totalorder %s31, 0
      %p121 = por %p119, %p120
      %s122 = ssub.s32 %s32, %s44
      %s123 = ssub.s32 %s33, %s40
      %s124 = sor.u32 %s122, %s123
      %p125 = scmp.eq.s32.totalorder %s124, 0
      %s127 = sadd.s32 %s126, 1
      %s128 = scalar_select %p125, %s126, %s127
      %p131 = pneg %p125
      %p132 = scmp.eq.s32.totalorder %s25, 1
      %p133 = por %p131, %p132
      %p134 = scmp.ne.s32.totalorder %s126, %s129
      %p135 = scmp.eq.s32.totalorder %s25, 0
      %p136 = por %p134, %p135
      %p137 = scmp.ne.s32.totalorder %s126, %s129
      %p138 = scmp.eq.s32.totalorder %s30, 1
      %p139 = por %p137, %p138
      %p140 = scmp.ne.s32.totalorder %s129, %s130
      %p141 = scmp.eq.s32.totalorder %s30, 0
      %p142 = por %p140, %p141
      %p143 = scmp.ne.s32.totalorder %s129, %s130
      %p144 = scmp.eq.s32.totalorder %s31, 1
      %p145 = por %p143, %p144
      %p147 = scmp.ne.s32.totalorder %s130, %s146
      %p148 = scmp.eq.s32.totalorder %s31, 0
      %p149 = por %p147, %p148
      %s150 = ssub.s32 %s32, %s44
      %p151 = scmp.eq.s32.totalorder %s150, 0
      %s153 = sadd.s32 %s152, 1
      %s154 = scalar_select %p151, %s152, %s153
      %p157 = pneg %p151
      %p158 = scmp.eq.s32.totalorder %s25, 1
      %p159 = por %p157, %p158
      %p160 = scmp.ne.s32.totalorder %s152, %s155
      %p161 = scmp.eq.s32.totalorder %s25, 0
      %p162 = por %p160, %p161
      %p163 = scmp.ne.s32.totalorder %s152, %s155
      %p164 = scmp.eq.s32.totalorder %s30, 1
      %p165 = por %p163, %p164
      %p166 = scmp.ne.s32.totalorder %s155, %s156
      %p167 = scmp.eq.s32.totalorder %s30, 0
      %p168 = por %p166, %p167
      %p169 = scmp.ne.s32.totalorder %s155, %s156
      %p170 = scmp.eq.s32.totalorder %s31, 1
      %p171 = por %p169, %p170
      %p173 = scmp.ne.s32.totalorder %s156, %s172
      %p174 = scmp.eq.s32.totalorder %s31, 0
      %p175 = por %p173, %p174
      %s176 = ssub.s32 %s32, %s44
      %p177 = scmp.eq.s32.totalorder %s176, 0
      %s179 = sadd.s32 %s178, 1
      %s180 = scalar_select %p177, %s178, %s179
      %p183 = pneg %p177
      %p184 = scmp.eq.s32.totalorder %s25, 1
      %p185 = por %p183, %p184
      %p186 = scmp.ne.s32.totalorder %s178, %s181
      %p187 = scmp.eq.s32.totalorder %s25, 0
      %p188 = por %p186, %p187
      %p189 = scmp.ne.s32.totalorder %s178, %s181
      %p190 = scmp.eq.s32.totalorder %s30, 1
      %p191 = por %p189, %p190
      %p192 = scmp.ne.s32.totalorder %s181, %s182
      %p193 = scmp.eq.s32.totalorder %s30, 0
      %p194 = por %p192, %p193
      %p195 = scmp.ne.s32.totalorder %s181, %s182
      %p196 = scmp.eq.s32.totalorder %s31, 1
      %p197 = por %p195, %p196
      %p199 = scmp.ne.s32.totalorder %s182, %s198
      %p200 = scmp.eq.s32.totalorder %s31, 0
      %p201 = por %p199, %p200
      %s203 = sadd.s32 %s202, 1
      %p206 = scmp.eq.s32.totalorder %s25, 1
      %p207 = scmp.ne.s32.totalorder %s202, %s204
      %p208 = scmp.eq.s32.totalorder %s25, 0
      %p209 = por %p207, %p208
      %p210 = scmp.ne.s32.totalorder %s202, %s204
      %p211 = scmp.eq.s32.totalorder %s30, 1
      %p212 = por %p210, %p211
      %p213 = scmp.ne.s32.totalorder %s204, %s205
      %p214 = scmp.eq.s32.totalorder %s30, 0
      %p215 = por %p213, %p214
      %p216 = scmp.ne.s32.totalorder %s204, %s205
      %p217 = scmp.eq.s32.totalorder %s31, 1
      %p218 = por %p216, %p217
      %p220 = scmp.ne.s32.totalorder %s205, %s219
      %p221 = scmp.eq.s32.totalorder %s31, 0
      %p222 = por %p220, %p221
      %s224 = sadd.s32 %s223, 1
      %p227 = scmp.eq.s32.totalorder %s25, 1
      %p228 = scmp.ne.s32.totalorder %s223, %s225
      %p229 = scmp.eq.s32.totalorder %s25, 0
      %p230 = por %p228, %p229
      %p231 = scmp.ne.s32.totalorder %s223, %s225
      %p232 = scmp.eq.s32.totalorder %s30, 1
      %p233 = por %p231, %p232
      %p234 = scmp.ne.s32.totalorder %s225, %s226
      %p235 = scmp.eq.s32.totalorder %s30, 0
      %p236 = por %p234, %p235
      %p237 = scmp.ne.s32.totalorder %s225, %s226
      %p238 = scmp.eq.s32.totalorder %s31, 1
      %p239 = por %p237, %p238
      %p241 = scmp.ne.s32.totalorder %s226, %s240
      %p242 = scmp.eq.s32.totalorder %s31, 0
      %p243 = por %p241, %p242
      %s245 = sadd.s32 %s244, 1
      %p248 = scmp.eq.s32.totalorder %s25, 1
      %p249 = scmp.ne.s32.totalorder %s244, %s246
      %p250 = scmp.eq.s32.totalorder %s25, 0
      %p251 = por %p249, %p250
      %p252 = scmp.ne.s32.totalorder %s244, %s246
      %p253 = scmp.eq.s32.totalorder %s30, 1
      %p254 = por %p252, %p253
      %p255 = scmp.ne.s32.totalorder %s246, %s247
      %p256 = scmp.eq.s32.totalorder %s30, 0
      %p257 = por %p255, %p256
      %p258 = scmp.ne.s32.totalorder %s246, %s247
      %p259 = scmp.eq.s32.totalorder %s31, 1
      %p260 = por %p258, %p259
      %p262 = scmp.ne.s32.totalorder %s247, %s261
      %p263 = scmp.eq.s32.totalorder %s31, 0
      %p264 = por %p262, %p263
      %s266 = sadd.s32 %s265, 1
      %p269 = scmp.eq.s32.totalorder %s25, 1
      %p270 = scmp.ne.s32.totalorder %s265, %s267
      %p271 = scmp.eq.s32.totalorder %s25, 0
      %p272 = por %p270, %p271
      %p273 = scmp.ne.s32.totalorder %s265, %s267
      %p274 = scmp.eq.s32.totalorder %s30, 1
      %p275 = por %p273, %p274
      %p276 = scmp.ne.s32.totalorder %s267, %s268
      %p277 = scmp.eq.s32.totalorder %s30, 0
      %p278 = por %p276, %p277
      %p279 = scmp.ne.s32.totalorder %s267, %s268
      %p280 = scmp.eq.s32.totalorder %s31, 1
      %p281 = por %p279, %p280
      %p283 = scmp.ne.s32.totalorder %s268, %s282
      %p284 = scmp.eq.s32.totalorder %s31, 0
      %p285 = por %p283, %p284
      %s286 = ssub.s32 %s32, %s44
      %s287 = ssub.s32 %s33, %s40
      %s288 = sor.u32 %s286, %s287
      %p289 = scmp.eq.s32.totalorder %s288, 0
      %s291 = sadd.s32 %s290, 1
      %s292 = scalar_select %p289, %s290, %s291
      %p295 = pneg %p289
      %p296 = scmp.eq.s32.totalorder %s25, 1
      %p297 = por %p295, %p296
      %p298 = scmp.ne.s32.totalorder %s290, %s293
      %p299 = scmp.eq.s32.totalorder %s25, 0
      %p300 = por %p298, %p299
      %p301 = scmp.ne.s32.totalorder %s290, %s293
      %p302 = scmp.eq.s32.totalorder %s30, 1
      %p303 = por %p301, %p302
      %p304 = scmp.ne.s32.totalorder %s293, %s294
      %p305 = scmp.eq.s32.totalorder %s30, 0
      %p306 = por %p304, %p305
      %p307 = scmp.ne.s32.totalorder %s293, %s294
      %p308 = scmp.eq.s32.totalorder %s31, 1
      %p309 = por %p307, %p308
      %p311 = scmp.ne.s32.totalorder %s294, %s310
      %p312 = scmp.eq.s32.totalorder %s31, 0
      %p313 = por %p311, %p312
      %s314 = ssub.s32 %s32, %s44
      %s315 = ssub.s32 %s33, %s40
      %s316 = sor.u32 %s314, %s315
      %p317 = scmp.eq.s32.totalorder %s316, 0
      %s319 = sadd.s32 %s318, 1
      %s320 = scalar_select %p317, %s318, %s319
      %p323 = pneg %p317
      %p324 = scmp.eq.s32.totalorder %s25, 1
      %p325 = por %p323, %p324
      %p326 = scmp.ne.s32.totalorder %s318, %s321
      %p327 = scmp.eq.s32.totalorder %s25, 0
      %p328 = por %p326, %p327
      %p329 = scmp.ne.s32.totalorder %s318, %s321
      %p330 = scmp.eq.s32.totalorder %s30, 1
      %p331 = por %p329, %p330
      %p332 = scmp.ne.s32.totalorder %s321, %s322
      %p333 = scmp.eq.s32.totalorder %s30, 0
      %p334 = por %p332, %p333
      %p335 = scmp.ne.s32.totalorder %s321, %s322
      %p336 = scmp.eq.s32.totalorder %s31, 1
      %p337 = por %p335, %p336
      %p339 = scmp.ne.s32.totalorder %s322, %s338
      %p340 = scmp.eq.s32.totalorder %s31, 0
      %p341 = por %p339, %p340
      %p342 = scmp.le.s32.totalorder 1, %s25
      %p343 = scmp.lt.s32.totalorder %s25, 3
      %p344 = pnand %p342, %p343
      %p345 = pneg %p344
      // Predicated region
      $region9: #{s2td_forward.1} parent=5 // pred_check
        _
      $region10: #{s2td_forward.1} parent=5 // pred_check_branch
        %347 = sbr.rel (%p344) target = $region12
      $region11: #{s2td_forward.1} parent=5 // pred_region
        %s348 = ssub.s32 %s25, 1
        // Predicated region
        $region13: #{s2td_forward.1} parent=11 // pred_check
          %p349 = pneg %p58
        $region14: #{s2td_forward.1} parent=11 // pred_check_branch
          %351 = sbr.rel (%p349) target = $region16
        $region15: #{s2td_forward.1} parent=11 // pred_region
          %353 = vsyncadd [#allocation4], 0
          %s355 = sshll.u32 %s0, 4
          %s356 = int_to_ptr.vmem [resolvable:$true] %s355
          %358 = dma.vmem_to_smem %s356, 16, [#allocation2], [#allocation4]
        $region16: #{s2td_forward.1} parent=11 // pred_fallthru
          _
        // Predicated region
        $region17: #{s2td_forward.1} parent=11 // pred_check
          %p359 = pneg %p215
        $region18: #{s2td_forward.1} parent=11 // pred_check_branch
          %361 = sbr.rel (%p359) target = $region20
        $region19: #{s2td_forward.1} parent=11 // pred_region
          _
        $region20: #{s2td_forward.1} parent=11 // pred_fallthru
          _
        // Predicated region
        $region21: #{s2td_forward.1} parent=11 // pred_check
          %p362 = pneg %p236
        $region22: #{s2td_forward.1} parent=11 // pred_check_branch
          %364 = sbr.rel (%p362) target = $region24
        $region23: #{s2td_forward.1} parent=11 // pred_region
          _
        $region24: #{s2td_forward.1} parent=11 // pred_fallthru
          _
        // Predicated region
        $region25: #{s2td_forward.1} parent=11 // pred_check
          %p365 = pneg %p257
        $region26: #{s2td_forward.1} parent=11 // pred_check_branch
          %367 = sbr.rel (%p365) target = $region28
        $region27: #{s2td_forward.1} parent=11 // pred_region
          _
        $region28: #{s2td_forward.1} parent=11 // pred_fallthru
          _
        // Predicated region
        $region29: #{s2td_forward.1} parent=11 // pred_check
          %p368 = pneg %p278
        $region30: #{s2td_forward.1} parent=11 // pred_check_branch
          %370 = sbr.rel (%p368) target = $region32
        $region31: #{s2td_forward.1} parent=11 // pred_region
          _
        $region32: #{s2td_forward.1} parent=11 // pred_fallthru
          _
      $region12: #{s2td_forward.1} parent=5 // pred_fallthru
        _
      %p371 = scmp.lt.s32.totalorder %s25, 2
      // Predicated region
      $region33: #{s2td_forward.1} parent=5 // pred_check
        %p372 = pneg %p371
      $region34: #{s2td_forward.1} parent=5 // pred_check_branch
        %374 = sbr.rel (%p372) target = $region36
      $region35: #{s2td_forward.1} parent=5 // pred_region
        // Predicated region
        $region37: #{s2td_forward.1} parent=35 // pred_check
          %p375 = pneg %p80
        $region38: #{s2td_forward.1} parent=35 // pred_check_branch
          %377 = sbr.rel (%p375) target = $region40
        $region39: #{s2td_forward.1} parent=35 // pred_region
          %s378 = smul.u32 32, %s33
          %p379 = scmp.lt.s32.totalorder %s32, 1
          %s380 = scalar_select %p379, %s32, 1
          %p381 = scmp.lt.s32.totalorder %s378, 31
          %s382 = scalar_select %p381, %s378, 31
          %s383 = smul.addr %s380, 32
          %s384 = sadd.s32 %s382, %s383
          %s385 = smul.addr %s384, 8
          %s386 = scalar_lea.vmem %s1, %s385
          %s387 = smul.u32 32, %s33
        $region40: #{s2td_forward.1} parent=35 // pred_fallthru
          _
        // Predicated region
        $region41: #{s2td_forward.1} parent=35 // pred_check
          %p388 = pneg %p108
        $region42: #{s2td_forward.1} parent=35 // pred_check_branch
          %390 = sbr.rel (%p388) target = $region44
        $region43: #{s2td_forward.1} parent=35 // pred_region
          %s391 = smul.u32 32, %s33
          %p392 = scmp.lt.s32.totalorder %s32, 1
          %s393 = scalar_select %p392, %s32, 1
          %p394 = scmp.lt.s32.totalorder %s391, 31
          %s395 = scalar_select %p394, %s391, 31
          %s396 = smul.addr %s393, 32
          %s397 = sadd.s32 %s395, %s396
          %s398 = smul.addr %s397, 8
          %s399 = scalar_lea.vmem %s2, %s398
          %s400 = smul.u32 32, %s33
        $region44: #{s2td_forward.1} parent=35 // pred_fallthru
          _
        // Predicated region
        $region45: #{s2td_forward.1} parent=35 // pred_check
          %p401 = pneg %p136
        $region46: #{s2td_forward.1} parent=35 // pred_check_branch
          %403 = sbr.rel (%p401) target = $region48
        $region47: #{s2td_forward.1} parent=35 // pred_region
          %s404 = smul.u32 32, %s33
          %p405 = scmp.lt.s32.totalorder %s32, 1
          %s406 = scalar_select %p405, %s32, 1
          %p407 = scmp.lt.s32.totalorder %s404, 31
          %s408 = scalar_select %p407, %s404, 31
          %s409 = smul.addr %s406, 32
          %s410 = sadd.s32 %s408, %s409
          %s411 = smul.addr %s410, 8
          %s412 = scalar_lea.vmem %s3, %s411
          %s413 = smul.u32 32, %s33
        $region48: #{s2td_forward.1} parent=35 // pred_fallthru
          _
        // Predicated region
        $region49: #{s2td_forward.1} parent=35 // pred_check
          %p414 = pneg %p162
        $region50: #{s2td_forward.1} parent=35 // pred_check_branch
          %416 = sbr.rel (%p414) target = $region52
        $region51: #{s2td_forward.1} parent=35 // pred_region
          %p417 = scmp.lt.s32.totalorder %s32, 1
          %s418 = scalar_select %p417, %s32, 1
          %s419 = scalar_lea.vmem %s4, %s418
        $region52: #{s2td_forward.1} parent=35 // pred_fallthru
          _
        // Predicated region
        $region53: #{s2td_forward.1} parent=35 // pred_check
          %p420 = pneg %p188
        $region54: #{s2td_forward.1} parent=35 // pred_check_branch
          %422 = sbr.rel (%p420) target = $region56
        $region55: #{s2td_forward.1} parent=35 // pred_region
          %p423 = scmp.lt.s32.totalorder %s32, 1
          %s424 = scalar_select %p423, %s32, 1
          %s425 = scalar_lea.vmem %s5, %s424
        $region56: #{s2td_forward.1} parent=35 // pred_fallthru
          _
      $region36: #{s2td_forward.1} parent=5 // pred_fallthru
        _
      %p426 = scmp.le.s32.totalorder 1, %s25
      %p427 = scmp.lt.s32.totalorder %s25, 3
      %p428 = pnand %p426, %p427
      %p429 = pneg %p428
      // Predicated region
      $region57: #{s2td_forward.1} parent=5 // pred_check
        _
      $region58: #{s2td_forward.1} parent=5 // pred_check_branch
        %431 = sbr.rel (%p428) target = $region60
      $region59: #{s2td_forward.1} parent=5 // pred_region
        %s432 = ssub.s32 %s25, 1
        // Predicated region
        $region61: #{s2td_forward.1} parent=59 // pred_check
          %p433 = pneg %p58
        $region62: #{s2td_forward.1} parent=59 // pred_check_branch
          %435 = sbr.rel (%p433) target = $region64
        $region63: #{s2td_forward.1} parent=59 // pred_region
          %437 = dma.done [#allocation4], 16
        $region64: #{s2td_forward.1} parent=59 // pred_fallthru
          _
        %438 = sfence
        %p439 = pneg %p58
        %p440 = pneg %p55
        %s441 = smul.u32 32, %s35
        %p442 = scmp.lt.s32.totalorder %s34, 1
        %s443 = scalar_select %p442, %s34, 1
        %p444 = scmp.lt.s32.totalorder %s441, 31
        %s445 = scalar_select %p444, %s441, 31
        %s446 = smul.addr %s443, 32
        %s447 = sadd.s32 %s445, %s446
        %s448 = smul.addr %s447, 8
        %s449 = scalar_lea.vmem %s1, %s448
        %p450 = pneg %p86
        %p451 = pneg %p83
        %s452 = smul.u32 32, %s35
        %p453 = scmp.lt.s32.totalorder %s34, 1
        %s454 = scalar_select %p453, %s34, 1
        %p455 = scmp.lt.s32.totalorder %s452, 31
        %s456 = scalar_select %p455, %s452, 31
        %s457 = smul.addr %s454, 32
        %s458 = sadd.s32 %s456, %s457
        %s459 = smul.addr %s458, 8
        %s460 = scalar_lea.vmem %s2, %s459
        %p461 = pneg %p114
        %p462 = pneg %p111
        %s463 = smul.u32 32, %s35
        %p464 = scmp.lt.s32.totalorder %s34, 1
        %s465 = scalar_select %p464, %s34, 1
        %p466 = scmp.lt.s32.totalorder %s463, 31
        %s467 = scalar_select %p466, %s463, 31
        %s468 = smul.addr %s465, 32
        %s469 = sadd.s32 %s467, %s468
        %s470 = smul.addr %s469, 8
        %s471 = scalar_lea.vmem %s3, %s470
        %p472 = pneg %p142
        %p473 = pneg %p139
        %p474 = scmp.lt.s32.totalorder %s34, 1
        %s475 = scalar_select %p474, %s34, 1
        %s476 = scalar_lea.vmem %s4, %s475
        %p477 = pneg %p168
        %p478 = pneg %p165
        %p479 = scmp.lt.s32.totalorder %s34, 1
        %s480 = scalar_select %p479, %s34, 1
        %s481 = scalar_lea.vmem %s5, %s480
        %p482 = pneg %p194
        %p483 = pneg %p191
        %p484 = pneg %p215
        %p485 = pneg %p212
        %p486 = pneg %p236
        %p487 = pneg %p233
        %p488 = pneg %p257
        %p489 = pneg %p254
        %p490 = pneg %p278
        %p491 = pneg %p275
        %p492 = pneg %p306
        %p493 = pneg %p303
        %s494 = sand.u32 %s293, 1
        %s495 = scalar_lea.sflag [#allocation3], %s494
        %s496 = sand.u32 %s293, 1
        %s497 = smul.addr %s496, 256
        %s498 = scalar_lea.vmem [#allocation5], %s497
        %p499 = pneg %p334
        %p500 = pneg %p331
        %s501 = sand.u32 %s321, 1
        %s502 = scalar_lea.sflag [#allocation7], %s501
        %s503 = sand.u32 %s321, 1
        %s504 = smul.addr %s503, 256
        %s505 = scalar_lea.vmem [#allocation6], %s504
        %s506 = smul.u32 32, %s35
        %p507 = scmp.lt.s32.totalorder %s34, 1
        %s508 = scalar_select %p507, %s34, 1
        %p509 = scmp.lt.s32.totalorder %s506, 31
        %s510 = scalar_select %p509, %s506, 31
        %s511 = smul.addr %s508, 32
        %s512 = sadd.s32 %s510, %s511
        %s513 = smul.addr %s512, 8
        %s514 = scalar_lea.vmem %s1, %s513
        %s515 = smul.u32 32, %s35
        %s516 = smul.u32 32, %s35
        %p517 = scmp.lt.s32.totalorder %s34, 1
        %s518 = scalar_select %p517, %s34, 1
        %p519 = scmp.lt.s32.totalorder %s516, 31
        %s520 = scalar_select %p519, %s516, 31
        %s521 = smul.addr %s518, 32
        %s522 = sadd.s32 %s520, %s521
        %s523 = smul.addr %s522, 8
        %s524 = scalar_lea.vmem %s2, %s523
        %s525 = smul.u32 32, %s35
        %s526 = smul.u32 32, %s35
        %p527 = scmp.lt.s32.totalorder %s34, 1
        %s528 = scalar_select %p527, %s34, 1
        %p529 = scmp.lt.s32.totalorder %s526, 31
        %s530 = scalar_select %p529, %s526, 31
        %s531 = smul.addr %s528, 32
        %s532 = sadd.s32 %s530, %s531
        %s533 = smul.addr %s532, 8
        %s534 = scalar_lea.vmem %s3, %s533
        %s535 = smul.u32 32, %s35
        %p536 = scmp.lt.s32.totalorder %s34, 1
        %s537 = scalar_select %p536, %s34, 1
        %s538 = scalar_lea.vmem %s4, %s537
        %p539 = scmp.lt.s32.totalorder %s34, 1
        %s540 = scalar_select %p539, %s34, 1
        %s541 = scalar_lea.vmem %s5, %s540
        %s542 = smul.u32 32, %s35
        %s543 = smul.u32 32, %s35
        %v544 = vld [vmem:[%s514] sm:$0xff]
        %v545 = vld [vmem:[%s514 + $0x8] sm:$0xff]
        %v546 = vld [vmem:[%s514 + $0x10] sm:$0xff]
        %v547 = vld [vmem:[%s514 + $0x18] sm:$0xff]
        %v548 = vld [vmem:[%s514 + $0x20] sm:$0xff]
        %v549 = vld [vmem:[%s514 + $0x28] sm:$0xff]
        %v550 = vld [vmem:[%s514 + $0x30] sm:$0xff]
        %v551 = vld [vmem:[%s514 + $0x38] sm:$0xff]
        %v552 = vld [vmem:[%s514 + $0x40] sm:$0xff]
        %v553 = vld [vmem:[%s514 + $0x48] sm:$0xff]
        %v554 = vld [vmem:[%s514 + $0x50] sm:$0xff]
        %v555 = vld [vmem:[%s514 + $0x58] sm:$0xff]
        %v556 = vld [vmem:[%s514 + $0x60] sm:$0xff]
        %v557 = vld [vmem:[%s514 + $0x68] sm:$0xff]
        %v558 = vld [vmem:[%s514 + $0x70] sm:$0xff]
        %v559 = vld [vmem:[%s514 + $0x78] sm:$0xff]
        %v560 = vld [vmem:[%s514 + $0x80] sm:$0xff]
        %v561 = vld [vmem:[%s514 + $0x88] sm:$0xff]
        %v562 = vld [vmem:[%s514 + $0x90] sm:$0xff]
        %v563 = vld [vmem:[%s514 + $0x98] sm:$0xff]
        %v564 = vld [vmem:[%s514 + $0xa0] sm:$0xff]
        %v565 = vld [vmem:[%s514 + $0xa8] sm:$0xff]
        %v566 = vld [vmem:[%s514 + $0xb0] sm:$0xff]
        %v567 = vld [vmem:[%s514 + $0xb8] sm:$0xff]
        %v568 = vld [vmem:[%s514 + $0xc0] sm:$0xff]
        %v569 = vld [vmem:[%s514 + $0xc8] sm:$0xff]
        %v570 = vld [vmem:[%s514 + $0xd0] sm:$0xff]
        %v571 = vld [vmem:[%s514 + $0xd8] sm:$0xff]
        %v572 = vld [vmem:[%s514 + $0xe0] sm:$0xff]
        %v573 = vld [vmem:[%s514 + $0xe8] sm:$0xff]
        %v574 = vld [vmem:[%s514 + $0xf0] sm:$0xff]
        %v575 = vld [vmem:[%s514 + $0xf8] sm:$0xff]
        %v576 = vld [vmem:[%s524] sm:$0xff]
        %v577 = vld [vmem:[%s524 + $0x8] sm:$0xff]
        %v578 = vld [vmem:[%s524 + $0x10] sm:$0xff]
        %v579 = vld [vmem:[%s524 + $0x18] sm:$0xff]
        %v580 = vld [vmem:[%s524 + $0x20] sm:$0xff]
        %v581 = vld [vmem:[%s524 + $0x28] sm:$0xff]
        %v582 = vld [vmem:[%s524 + $0x30] sm:$0xff]
        %v583 = vld [vmem:[%s524 + $0x38] sm:$0xff]
        %v584 = vld [vmem:[%s524 + $0x40] sm:$0xff]
        %v585 = vld [vmem:[%s524 + $0x48] sm:$0xff]
        %v586 = vld [vmem:[%s524 + $0x50] sm:$0xff]
        %v587 = vld [vmem:[%s524 + $0x58] sm:$0xff]
        %v588 = vld [vmem:[%s524 + $0x60] sm:$0xff]
        %v589 = vld [vmem:[%s524 + $0x68] sm:$0xff]
        %v590 = vld [vmem:[%s524 + $0x70] sm:$0xff]
        %v591 = vld [vmem:[%s524 + $0x78] sm:$0xff]
        %v592 = vld [vmem:[%s524 + $0x80] sm:$0xff]
        %v593 = vld [vmem:[%s524 + $0x88] sm:$0xff]
        %v594 = vld [vmem:[%s524 + $0x90] sm:$0xff]
        %v595 = vld [vmem:[%s524 + $0x98] sm:$0xff]
        %v596 = vld [vmem:[%s524 + $0xa0] sm:$0xff]
        %v597 = vld [vmem:[%s524 + $0xa8] sm:$0xff]
        %v598 = vld [vmem:[%s524 + $0xb0] sm:$0xff]
        %v599 = vld [vmem:[%s524 + $0xb8] sm:$0xff]
        %v600 = vld [vmem:[%s524 + $0xc0] sm:$0xff]
        %v601 = vld [vmem:[%s524 + $0xc8] sm:$0xff]
        %v602 = vld [vmem:[%s524 + $0xd0] sm:$0xff]
        %v603 = vld [vmem:[%s524 + $0xd8] sm:$0xff]
        %v604 = vld [vmem:[%s524 + $0xe0] sm:$0xff]
        %v605 = vld [vmem:[%s524 + $0xe8] sm:$0xff]
        %v606 = vld [vmem:[%s524 + $0xf0] sm:$0xff]
        %v607 = vld [vmem:[%s524 + $0xf8] sm:$0xff]
        %v608 = vld [vmem:[%s534] sm:$0xff]
        %v609 = vld [vmem:[%s534 + $0x8] sm:$0xff]
        %v610 = vld [vmem:[%s534 + $0x10] sm:$0xff]
        %v611 = vld [vmem:[%s534 + $0x18] sm:$0xff]
        %v612 = vld [vmem:[%s534 + $0x20] sm:$0xff]
        %v613 = vld [vmem:[%s534 + $0x28] sm:$0xff]
        %v614 = vld [vmem:[%s534 + $0x30] sm:$0xff]
        %v615 = vld [vmem:[%s534 + $0x38] sm:$0xff]
        %v616 = vld [vmem:[%s534 + $0x40] sm:$0xff]
        %v617 = vld [vmem:[%s534 + $0x48] sm:$0xff]
        %v618 = vld [vmem:[%s534 + $0x50] sm:$0xff]
        %v619 = vld [vmem:[%s534 + $0x58] sm:$0xff]
        %v620 = vld [vmem:[%s534 + $0x60] sm:$0xff]
        %v621 = vld [vmem:[%s534 + $0x68] sm:$0xff]
        %v622 = vld [vmem:[%s534 + $0x70] sm:$0xff]
        %v623 = vld [vmem:[%s534 + $0x78] sm:$0xff]
        %v624 = vld [vmem:[%s534 + $0x80] sm:$0xff]
        %v625 = vld [vmem:[%s534 + $0x88] sm:$0xff]
        %v626 = vld [vmem:[%s534 + $0x90] sm:$0xff]
        %v627 = vld [vmem:[%s534 + $0x98] sm:$0xff]
        %v628 = vld [vmem:[%s534 + $0xa0] sm:$0xff]
        %v629 = vld [vmem:[%s534 + $0xa8] sm:$0xff]
        %v630 = vld [vmem:[%s534 + $0xb0] sm:$0xff]
        %v631 = vld [vmem:[%s534 + $0xb8] sm:$0xff]
        %v632 = vld [vmem:[%s534 + $0xc0] sm:$0xff]
        %v633 = vld [vmem:[%s534 + $0xc8] sm:$0xff]
        %v634 = vld [vmem:[%s534 + $0xd0] sm:$0xff]
        %v635 = vld [vmem:[%s534 + $0xd8] sm:$0xff]
        %v636 = vld [vmem:[%s534 + $0xe0] sm:$0xff]
        %v637 = vld [vmem:[%s534 + $0xe8] sm:$0xff]
        %v638 = vld [vmem:[%s534 + $0xf0] sm:$0xff]
        %v639 = vld [vmem:[%s534 + $0xf8] sm:$0xff]
        %v640 = vld [vmem:[%s538] sm:$0x1]
        %v641 = vld [vmem:[%s541] sm:$0x1]
        %s642 = sld [smem:[#allocation2]]
        %s643 = sld [smem:[#allocation2 + $0x1]]
        %v644 = vpack.c.bf16 %v544, %v544
        %v645 = vpack.c.bf16 %v545, %v545
        %v646 = vpack.c.bf16 %v546, %v546
        %v647 = vpack.c.bf16 %v547, %v547
        %v648 = vpack.c.bf16 %v548, %v548
        %v649 = vpack.c.bf16 %v549, %v549
        %v650 = vpack.c.bf16 %v550, %v550
        %v651 = vpack.c.bf16 %v551, %v551
        %v652 = vpack.c.bf16 %v552, %v552
        %v653 = vpack.c.bf16 %v553, %v553
        %v654 = vpack.c.bf16 %v554, %v554
        %v655 = vpack.c.bf16 %v555, %v555
        %v656 = vpack.c.bf16 %v556, %v556
        %v657 = vpack.c.bf16 %v557, %v557
        %v658 = vpack.c.bf16 %v558, %v558
        %v659 = vpack.c.bf16 %v559, %v559
        %v660 = vpack.c.bf16 %v560, %v560
        %v661 = vpack.c.bf16 %v561, %v561
        %v662 = vpack.c.bf16 %v562, %v562
        %v663 = vpack.c.bf16 %v563, %v563
        %v664 = vpack.c.bf16 %v564, %v564
        %v665 = vpack.c.bf16 %v565, %v565
        %v666 = vpack.c.bf16 %v566, %v566
        %v667 = vpack.c.bf16 %v567, %v567
        %v668 = vpack.c.bf16 %v568, %v568
        %v669 = vpack.c.bf16 %v569, %v569
        %v670 = vpack.c.bf16 %v570, %v570
        %v671 = vpack.c.bf16 %v571, %v571
        %v672 = vpack.c.bf16 %v572, %v572
        %v673 = vpack.c.bf16 %v573, %v573
        %v674 = vpack.c.bf16 %v574, %v574
        %v675 = vpack.c.bf16 %v575, %v575
        %v676 = vpack.c.bf16 %v576, %v576
        %v677 = vpack.c.bf16 %v577, %v577
        %v678 = vpack.c.bf16 %v578, %v578
        %v679 = vpack.c.bf16 %v579, %v579
        %v680 = vpack.c.bf16 %v580, %v580
        %v681 = vpack.c.bf16 %v581, %v581
        %v682 = vpack.c.bf16 %v582, %v582
        %v683 = vpack.c.bf16 %v583, %v583
        %v684 = vpack.c.bf16 %v584, %v584
        %v685 = vpack.c.bf16 %v585, %v585
        %v686 = vpack.c.bf16 %v586, %v586
        %v687 = vpack.c.bf16 %v587, %v587
        %v688 = vpack.c.bf16 %v588, %v588
        %v689 = vpack.c.bf16 %v589, %v589
        %v690 = vpack.c.bf16 %v590, %v590
        %v691 = vpack.c.bf16 %v591, %v591
        %v692 = vpack.c.bf16 %v592, %v592
        %v693 = vpack.c.bf16 %v593, %v593
        %v694 = vpack.c.bf16 %v594, %v594
        %v695 = vpack.c.bf16 %v595, %v595
        %v696 = vpack.c.bf16 %v596, %v596
        %v697 = vpack.c.bf16 %v597, %v597
        %v698 = vpack.c.bf16 %v598, %v598
        %v699 = vpack.c.bf16 %v599, %v599
        %v700 = vpack.c.bf16 %v600, %v600
        %v701 = vpack.c.bf16 %v601, %v601
        %v702 = vpack.c.bf16 %v602, %v602
        %v703 = vpack.c.bf16 %v603, %v603
        %v704 = vpack.c.bf16 %v604, %v604
        %v705 = vpack.c.bf16 %v605, %v605
        %v706 = vpack.c.bf16 %v606, %v606
        %v707 = vpack.c.bf16 %v607, %v607
        %v708 = vpack.c.bf16 %v608, %v608
        %v709 = vpack.c.bf16 %v609, %v609
        %v710 = vpack.c.bf16 %v610, %v610
        %v711 = vpack.c.bf16 %v611, %v611
        %v712 = vpack.c.bf16 %v612, %v612
        %v713 = vpack.c.bf16 %v613, %v613
        %v714 = vpack.c.bf16 %v614, %v614
        %v715 = vpack.c.bf16 %v615, %v615
        %v716 = vpack.c.bf16 %v616, %v616
        %v717 = vpack.c.bf16 %v617, %v617
        %v718 = vpack.c.bf16 %v618, %v618
        %v719 = vpack.c.bf16 %v619, %v619
        %v720 = vpack.c.bf16 %v620, %v620
        %v721 = vpack.c.bf16 %v621, %v621
        %v722 = vpack.c.bf16 %v622, %v622
        %v723 = vpack.c.bf16 %v623, %v623
        %v724 = vpack.c.bf16 %v624, %v624
        %v725 = vpack.c.bf16 %v625, %v625
        %v726 = vpack.c.bf16 %v626, %v626
        %v727 = vpack.c.bf16 %v627, %v627
        %v728 = vpack.c.bf16 %v628, %v628
        %v729 = vpack.c.bf16 %v629, %v629
        %v730 = vpack.c.bf16 %v630, %v630
        %v731 = vpack.c.bf16 %v631, %v631
        %v732 = vpack.c.bf16 %v632, %v632
        %v733 = vpack.c.bf16 %v633, %v633
        %v734 = vpack.c.bf16 %v634, %v634
        %v735 = vpack.c.bf16 %v635, %v635
        %v736 = vpack.c.bf16 %v636, %v636
        %v737 = vpack.c.bf16 %v637, %v637
        %v738 = vpack.c.bf16 %v638, %v638
        %v739 = vpack.c.bf16 %v639, %v639
        %v772 = vunpack.c.l.b16 %v644
        %v773 = vunpack.c.l.b16 %v645
        %v774 = vunpack.c.l.b16 %v646
        %v775 = vunpack.c.l.b16 %v647
        %v776 = vunpack.c.l.b16 %v648
        %v777 = vunpack.c.l.b16 %v649
        %v778 = vunpack.c.l.b16 %v650
        %v779 = vunpack.c.l.b16 %v651
        %v780 = vunpack.c.l.b16 %v652
        %v781 = vunpack.c.l.b16 %v653
        %v782 = vunpack.c.l.b16 %v654
        %v783 = vunpack.c.l.b16 %v655
        %v784 = vunpack.c.l.b16 %v656
        %v785 = vunpack.c.l.b16 %v657
        %v786 = vunpack.c.l.b16 %v658
        %v787 = vunpack.c.l.b16 %v659
        %v788 = vunpack.c.l.b16 %v660
        %v789 = vunpack.c.l.b16 %v661
        %v790 = vunpack.c.l.b16 %v662
        %v791 = vunpack.c.l.b16 %v663
        %v792 = vunpack.c.l.b16 %v664
        %v793 = vunpack.c.l.b16 %v665
        %v794 = vunpack.c.l.b16 %v666
        %v795 = vunpack.c.l.b16 %v667
        %v796 = vunpack.c.l.b16 %v668
        %v797 = vunpack.c.l.b16 %v669
        %v798 = vunpack.c.l.b16 %v670
        %v799 = vunpack.c.l.b16 %v671
        %v800 = vunpack.c.l.b16 %v672
        %v801 = vunpack.c.l.b16 %v673
        %v802 = vunpack.c.l.b16 %v674
        %v803 = vunpack.c.l.b16 %v675
        %v804 = vpack.c.b16 %v773, %v772
        %v805 = vpack.c.b16 %v775, %v774
        %v806 = vpack.c.b16 %v777, %v776
        %v807 = vpack.c.b16 %v779, %v778
        %v808 = vpack.c.b16 %v781, %v780
        %v809 = vpack.c.b16 %v783, %v782
        %v810 = vpack.c.b16 %v785, %v784
        %v811 = vpack.c.b16 %v787, %v786
        %v812 = vpack.c.b16 %v789, %v788
        %v813 = vpack.c.b16 %v791, %v790
        %v814 = vpack.c.b16 %v793, %v792
        %v815 = vpack.c.b16 %v795, %v794
        %v816 = vpack.c.b16 %v797, %v796
        %v817 = vpack.c.b16 %v799, %v798
        %v818 = vpack.c.b16 %v801, %v800
        %v819 = vpack.c.b16 %v803, %v802
        %v868 = vunpack.c.l.b16 %v708
        %v869 = vunpack.c.l.b16 %v709
        %v870 = vunpack.c.l.b16 %v710
        %v871 = vunpack.c.l.b16 %v711
        %v872 = vunpack.c.l.b16 %v712
        %v873 = vunpack.c.l.b16 %v713
        %v874 = vunpack.c.l.b16 %v714
        %v875 = vunpack.c.l.b16 %v715
        %v876 = vunpack.c.l.b16 %v716
        %v877 = vunpack.c.l.b16 %v717
        %v878 = vunpack.c.l.b16 %v718
        %v879 = vunpack.c.l.b16 %v719
        %v880 = vunpack.c.l.b16 %v720
        %v881 = vunpack.c.l.b16 %v721
        %v882 = vunpack.c.l.b16 %v722
        %v883 = vunpack.c.l.b16 %v723
        %v884 = vunpack.c.l.b16 %v724
        %v885 = vunpack.c.l.b16 %v725
        %v886 = vunpack.c.l.b16 %v726
        %v887 = vunpack.c.l.b16 %v727
        %v888 = vunpack.c.l.b16 %v728
        %v889 = vunpack.c.l.b16 %v729
        %v890 = vunpack.c.l.b16 %v730
        %v891 = vunpack.c.l.b16 %v731
        %v892 = vunpack.c.l.b16 %v732
        %v893 = vunpack.c.l.b16 %v733
        %v894 = vunpack.c.l.b16 %v734
        %v895 = vunpack.c.l.b16 %v735
        %v896 = vunpack.c.l.b16 %v736
        %v897 = vunpack.c.l.b16 %v737
        %v898 = vunpack.c.l.b16 %v738
        %v899 = vunpack.c.l.b16 %v739
        %v900 = vpack.c.b16 %v869, %v868
        %v901 = vpack.c.b16 %v871, %v870
        %v902 = vpack.c.b16 %v873, %v872
        %v903 = vpack.c.b16 %v875, %v874
        %v904 = vpack.c.b16 %v877, %v876
        %v905 = vpack.c.b16 %v879, %v878
        %v906 = vpack.c.b16 %v881, %v880
        %v907 = vpack.c.b16 %v883, %v882
        %v908 = vpack.c.b16 %v885, %v884
        %v909 = vpack.c.b16 %v887, %v886
        %v910 = vpack.c.b16 %v889, %v888
        %v911 = vpack.c.b16 %v891, %v890
        %v912 = vpack.c.b16 %v893, %v892
        %v913 = vpack.c.b16 %v895, %v894
        %v914 = vpack.c.b16 %v897, %v896
        %v915 = vpack.c.b16 %v899, %v898
        %v932 = vld [vmem:[%s6] sm:$0xf]
        %v933 = vld [vmem:[%s6 + $0x4] sm:$0xf]
        %v934 = vld [vmem:[%s6 + $0x8] sm:$0xf]
        %v935 = vld [vmem:[%s6 + $0xc] sm:$0xf]
        %v936 = vld [vmem:[%s6 + $0x10] sm:$0xf]
        %v937 = vld [vmem:[%s6 + $0x14] sm:$0xf]
        %v938 = vld [vmem:[%s6 + $0x18] sm:$0xf]
        %v939 = vld [vmem:[%s6 + $0x1c] sm:$0xf]
        %v940 = vld [vmem:[%s6 + $0x20] sm:$0xf]
        %v941 = vld [vmem:[%s6 + $0x24] sm:$0xf]
        %v942 = vld [vmem:[%s6 + $0x28] sm:$0xf]
        %v943 = vld [vmem:[%s6 + $0x2c] sm:$0xf]
        %v944 = vld [vmem:[%s6 + $0x30] sm:$0xf]
        %v945 = vld [vmem:[%s6 + $0x34] sm:$0xf]
        %v946 = vld [vmem:[%s6 + $0x38] sm:$0xf]
        %v947 = vld [vmem:[%s6 + $0x3c] sm:$0xf]
        %v948 = vld [vmem:[%s6 + $0x40] sm:$0xf]
        %v949 = vld [vmem:[%s6 + $0x44] sm:$0xf]
        %v950 = vld [vmem:[%s6 + $0x48] sm:$0xf]
        %v951 = vld [vmem:[%s6 + $0x4c] sm:$0xf]
        %v952 = vld [vmem:[%s6 + $0x50] sm:$0xf]
        %v953 = vld [vmem:[%s6 + $0x54] sm:$0xf]
        %v954 = vld [vmem:[%s6 + $0x58] sm:$0xf]
        %v955 = vld [vmem:[%s6 + $0x5c] sm:$0xf]
        %v956 = vld [vmem:[%s6 + $0x60] sm:$0xf]
        %v957 = vld [vmem:[%s6 + $0x64] sm:$0xf]
        %v958 = vld [vmem:[%s6 + $0x68] sm:$0xf]
        %v959 = vld [vmem:[%s6 + $0x6c] sm:$0xf]
        %v960 = vld [vmem:[%s6 + $0x70] sm:$0xf]
        %v961 = vld [vmem:[%s6 + $0x74] sm:$0xf]
        %v962 = vld [vmem:[%s6 + $0x78] sm:$0xf]
        %v963 = vld [vmem:[%s6 + $0x7c] sm:$0xf]
        %v965 = vperm.slane %v640, 0
        %v999 = vunpack.c.l.b16 %v932
        %v1000 = vunpack.c.l.b16 %v933
        %v1001 = vunpack.c.l.b16 %v934
        %v1002 = vunpack.c.l.b16 %v935
        %v1003 = vunpack.c.l.b16 %v936
        %v1004 = vunpack.c.l.b16 %v937
        %v1005 = vunpack.c.l.b16 %v938
        %v1006 = vunpack.c.l.b16 %v939
        %v1007 = vunpack.c.l.b16 %v940
        %v1008 = vunpack.c.l.b16 %v941
        %v1009 = vunpack.c.l.b16 %v942
        %v1010 = vunpack.c.l.b16 %v943
        %v1011 = vunpack.c.l.b16 %v944
        %v1012 = vunpack.c.l.b16 %v945
        %v1013 = vunpack.c.l.b16 %v946
        %v1014 = vunpack.c.l.b16 %v947
        %v1015 = vunpack.c.l.b16 %v948
        %v1016 = vunpack.c.l.b16 %v949
        %v1017 = vunpack.c.l.b16 %v950
        %v1018 = vunpack.c.l.b16 %v951
        %v1019 = vunpack.c.l.b16 %v952
        %v1020 = vunpack.c.l.b16 %v953
        %v1021 = vunpack.c.l.b16 %v954
        %v1022 = vunpack.c.l.b16 %v955
        %v1023 = vunpack.c.l.b16 %v956
        %v1024 = vunpack.c.l.b16 %v957
        %v1025 = vunpack.c.l.b16 %v958
        %v1026 = vunpack.c.l.b16 %v959
        %v1027 = vunpack.c.l.b16 %v960
        %v1028 = vunpack.c.l.b16 %v961
        %v1029 = vunpack.c.l.b16 %v962
        %v1030 = vunpack.c.l.b16 %v963
        %v1031 = vpack.c.b16 %v1000, %v999
        %v1032 = vpack.c.b16 %v1002, %v1001
        %v1033 = vpack.c.b16 %v1004, %v1003
        %v1034 = vpack.c.b16 %v1006, %v1005
        %v1035 = vpack.c.b16 %v1008, %v1007
        %v1036 = vpack.c.b16 %v1010, %v1009
        %v1037 = vpack.c.b16 %v1012, %v1011
        %v1038 = vpack.c.b16 %v1014, %v1013
        %v1039 = vpack.c.b16 %v1016, %v1015
        %v1040 = vpack.c.b16 %v1018, %v1017
        %v1041 = vpack.c.b16 %v1020, %v1019
        %v1042 = vpack.c.b16 %v1022, %v1021
        %v1043 = vpack.c.b16 %v1024, %v1023
        %v1044 = vpack.c.b16 %v1026, %v1025
        %v1045 = vpack.c.b16 %v1028, %v1027
        %v1046 = vpack.c.b16 %v1030, %v1029
        %1063 = vmatpush.bf16.msra.mxu0 %v1038
        %1064 = vmatpush.bf16.msra.mxu0 %v1037
        %1065 = vmatpush.bf16.msra.mxu0 %v1036
        %1066 = vmatpush.bf16.msra.mxu0 %v1035
        %1067 = vmatpush.bf16.msra.mxu0 %v1034
        %1068 = vmatpush.bf16.msra.mxu0 %v1033
        %1069 = vmatpush.bf16.msra.mxu0 %v1032
        %1070 = vmatpush.bf16.msra.mxu0 %v1031
        %1071 = vmatmul.bf16.gmra.mxu0 %v804
        %v1072 = vpop.f32.mrf.mxu0
        %v1073 = vadd.f32 %v965, %v1072
        %v1074 = vpop.f32.mrf.mxu0
        %v1075 = vadd.f32 %v965, %v1074
        %1076 = vmatmul.bf16.gmra.mxu0 %v805
        %v1077 = vpop.f32.mrf.mxu0
        %v1078 = vadd.f32 %v965, %v1077
        %v1079 = vpop.f32.mrf.mxu0
        %v1080 = vadd.f32 %v965, %v1079
        %1081 = vmatmul.bf16.gmra.mxu0 %v806
        %v1082 = vpop.f32.mrf.mxu0
        %v1083 = vadd.f32 %v965, %v1082
        %v1084 = vpop.f32.mrf.mxu0
        %v1085 = vadd.f32 %v965, %v1084
        %1086 = vmatmul.bf16.gmra.mxu0 %v807
        %v1087 = vpop.f32.mrf.mxu0
        %v1088 = vadd.f32 %v965, %v1087
        %v1089 = vpop.f32.mrf.mxu0
        %v1090 = vadd.f32 %v965, %v1089
        %1091 = vmatmul.bf16.gmra.mxu0 %v808
        %v1092 = vpop.f32.mrf.mxu0
        %v1093 = vadd.f32 %v965, %v1092
        %v1094 = vpop.f32.mrf.mxu0
        %v1095 = vadd.f32 %v965, %v1094
        %1096 = vmatmul.bf16.gmra.mxu0 %v809
        %v1097 = vpop.f32.mrf.mxu0
        %v1098 = vadd.f32 %v965, %v1097
        %v1099 = vpop.f32.mrf.mxu0
        %v1100 = vadd.f32 %v965, %v1099
        %1101 = vmatmul.bf16.gmra.mxu0 %v810
        %v1102 = vpop.f32.mrf.mxu0
        %v1103 = vadd.f32 %v965, %v1102
        %v1104 = vpop.f32.mrf.mxu0
        %v1105 = vadd.f32 %v965, %v1104
        %1106 = vmatmul.bf16.gmra.mxu0 %v811
        %v1107 = vpop.f32.mrf.mxu0
        %v1108 = vadd.f32 %v965, %v1107
        %v1109 = vpop.f32.mrf.mxu0
        %v1110 = vadd.f32 %v965, %v1109
        %1111 = vmatmul.bf16.gmra.mxu0 %v812
        %v1112 = vpop.f32.mrf.mxu0
        %v1113 = vadd.f32 %v965, %v1112
        %v1114 = vpop.f32.mrf.mxu0
        %v1115 = vadd.f32 %v965, %v1114
        %1116 = vmatmul.bf16.gmra.mxu0 %v813
        %v1117 = vpop.f32.mrf.mxu0
        %v1118 = vadd.f32 %v965, %v1117
        %v1119 = vpop.f32.mrf.mxu0
        %v1120 = vadd.f32 %v965, %v1119
        %1121 = vmatmul.bf16.gmra.mxu0 %v814
        %v1122 = vpop.f32.mrf.mxu0
        %v1123 = vadd.f32 %v965, %v1122
        %v1124 = vpop.f32.mrf.mxu0
        %v1125 = vadd.f32 %v965, %v1124
        %1126 = vmatmul.bf16.gmra.mxu0 %v815
        %v1127 = vpop.f32.mrf.mxu0
        %v1128 = vadd.f32 %v965, %v1127
        %v1129 = vpop.f32.mrf.mxu0
        %v1130 = vadd.f32 %v965, %v1129
        %1131 = vmatmul.bf16.gmra.mxu0 %v816
        %v1132 = vpop.f32.mrf.mxu0
        %v1133 = vadd.f32 %v965, %v1132
        %v1134 = vpop.f32.mrf.mxu0
        %v1135 = vadd.f32 %v965, %v1134
        %1136 = vmatmul.bf16.gmra.mxu0 %v817
        %v1137 = vpop.f32.mrf.mxu0
        %v1138 = vadd.f32 %v965, %v1137
        %v1139 = vpop.f32.mrf.mxu0
        %v1140 = vadd.f32 %v965, %v1139
        %1141 = vmatmul.bf16.gmra.mxu0 %v818
        %v1142 = vpop.f32.mrf.mxu0
        %v1143 = vadd.f32 %v965, %v1142
        %v1144 = vpop.f32.mrf.mxu0
        %v1145 = vadd.f32 %v965, %v1144
        %1146 = vmatmul.bf16.gmra.mxu0 %v819
        %v1147 = vpop.f32.mrf.mxu0
        %v1148 = vadd.f32 %v965, %v1147
        %v1149 = vpop.f32.mrf.mxu0
        %v1150 = vadd.f32 %v965, %v1149
        %1151 = vdwg.mxu0
        %1152 = vmatpush.bf16.msra.mxu0 %v1046
        %1153 = vmatpush.bf16.msra.mxu0 %v1045
        %1154 = vmatpush.bf16.msra.mxu0 %v1044
        %1155 = vmatpush.bf16.msra.mxu0 %v1043
        %1156 = vmatpush.bf16.msra.mxu0 %v1042
        %1157 = vmatpush.bf16.msra.mxu0 %v1041
        %1158 = vmatpush.bf16.msra.mxu0 %v1040
        %1159 = vmatpush.bf16.msra.mxu0 %v1039
        %1160 = vmatmul.bf16.gmra.mxu0 %v900
        %v1161 = vpop.f32.mrf.mxu0
        %v1162 = vadd.f32 %v1073, %v1161
        %v1163 = vpop.f32.mrf.mxu0
        %v1164 = vadd.f32 %v1075, %v1163
        %1165 = vmatmul.bf16.gmra.mxu0 %v901
        %v1166 = vpop.f32.mrf.mxu0
        %v1167 = vadd.f32 %v1078, %v1166
        %v1168 = vpop.f32.mrf.mxu0
        %v1169 = vadd.f32 %v1080, %v1168
        %1170 = vmatmul.bf16.gmra.mxu0 %v902
        %v1171 = vpop.f32.mrf.mxu0
        %v1172 = vadd.f32 %v1083, %v1171
        %v1173 = vpop.f32.mrf.mxu0
        %v1174 = vadd.f32 %v1085, %v1173
        %1175 = vmatmul.bf16.gmra.mxu0 %v903
        %v1176 = vpop.f32.mrf.mxu0
        %v1177 = vadd.f32 %v1088, %v1176
        %v1178 = vpop.f32.mrf.mxu0
        %v1179 = vadd.f32 %v1090, %v1178
        %1180 = vmatmul.bf16.gmra.mxu0 %v904
        %v1181 = vpop.f32.mrf.mxu0
        %v1182 = vadd.f32 %v1093, %v1181
        %v1183 = vpop.f32.mrf.mxu0
        %v1184 = vadd.f32 %v1095, %v1183
        %1185 = vmatmul.bf16.gmra.mxu0 %v905
        %v1186 = vpop.f32.mrf.mxu0
        %v1187 = vadd.f32 %v1098, %v1186
        %v1188 = vpop.f32.mrf.mxu0
        %v1189 = vadd.f32 %v1100, %v1188
        %1190 = vmatmul.bf16.gmra.mxu0 %v906
        %v1191 = vpop.f32.mrf.mxu0
        %v1192 = vadd.f32 %v1103, %v1191
        %v1193 = vpop.f32.mrf.mxu0
        %v1194 = vadd.f32 %v1105, %v1193
        %1195 = vmatmul.bf16.gmra.mxu0 %v907
        %v1196 = vpop.f32.mrf.mxu0
        %v1197 = vadd.f32 %v1108, %v1196
        %v1198 = vpop.f32.mrf.mxu0
        %v1199 = vadd.f32 %v1110, %v1198
        %1200 = vmatmul.bf16.gmra.mxu0 %v908
        %v1201 = vpop.f32.mrf.mxu0
        %v1202 = vadd.f32 %v1113, %v1201
        %v1203 = vpop.f32.mrf.mxu0
        %v1204 = vadd.f32 %v1115, %v1203
        %1205 = vmatmul.bf16.gmra.mxu0 %v909
        %v1206 = vpop.f32.mrf.mxu0
        %v1207 = vadd.f32 %v1118, %v1206
        %v1208 = vpop.f32.mrf.mxu0
        %v1209 = vadd.f32 %v1120, %v1208
        %1210 = vmatmul.bf16.gmra.mxu0 %v910
        %v1211 = vpop.f32.mrf.mxu0
        %v1212 = vadd.f32 %v1123, %v1211
        %v1213 = vpop.f32.mrf.mxu0
        %v1214 = vadd.f32 %v1125, %v1213
        %1215 = vmatmul.bf16.gmra.mxu0 %v911
        %v1216 = vpop.f32.mrf.mxu0
        %v1217 = vadd.f32 %v1128, %v1216
        %v1218 = vpop.f32.mrf.mxu0
        %v1219 = vadd.f32 %v1130, %v1218
        %1220 = vmatmul.bf16.gmra.mxu0 %v912
        %v1221 = vpop.f32.mrf.mxu0
        %v1222 = vadd.f32 %v1133, %v1221
        %v1223 = vpop.f32.mrf.mxu0
        %v1224 = vadd.f32 %v1135, %v1223
        %1225 = vmatmul.bf16.gmra.mxu0 %v913
        %v1226 = vpop.f32.mrf.mxu0
        %v1227 = vadd.f32 %v1138, %v1226
        %v1228 = vpop.f32.mrf.mxu0
        %v1229 = vadd.f32 %v1140, %v1228
        %1230 = vmatmul.bf16.gmra.mxu0 %v914
        %v1231 = vpop.f32.mrf.mxu0
        %v1232 = vadd.f32 %v1143, %v1231
        %v1233 = vpop.f32.mrf.mxu0
        %v1234 = vadd.f32 %v1145, %v1233
        %1235 = vmatmul.bf16.gmra.mxu0 %v915
        %v1236 = vpop.f32.mrf.mxu0
        %v1237 = vadd.f32 %v1148, %v1236
        %v1238 = vpop.f32.mrf.mxu0
        %v1239 = vadd.f32 %v1150, %v1238
        %1240 = vdwg.mxu0
        %v1273 = vunpack.c.l.b16 %v676
        %v1274 = vunpack.c.l.b16 %v677
        %v1275 = vunpack.c.l.b16 %v678
        %v1276 = vunpack.c.l.b16 %v679
        %v1277 = vunpack.c.l.b16 %v680
        %v1278 = vunpack.c.l.b16 %v681
        %v1279 = vunpack.c.l.b16 %v682
        %v1280 = vunpack.c.l.b16 %v683
        %v1281 = vunpack.c.l.b16 %v684
        %v1282 = vunpack.c.l.b16 %v685
        %v1283 = vunpack.c.l.b16 %v686
        %v1284 = vunpack.c.l.b16 %v687
        %v1285 = vunpack.c.l.b16 %v688
        %v1286 = vunpack.c.l.b16 %v689
        %v1287 = vunpack.c.l.b16 %v690
        %v1288 = vunpack.c.l.b16 %v691
        %v1289 = vunpack.c.l.b16 %v692
        %v1290 = vunpack.c.l.b16 %v693
        %v1291 = vunpack.c.l.b16 %v694
        %v1292 = vunpack.c.l.b16 %v695
        %v1293 = vunpack.c.l.b16 %v696
        %v1294 = vunpack.c.l.b16 %v697
        %v1295 = vunpack.c.l.b16 %v698
        %v1296 = vunpack.c.l.b16 %v699
        %v1297 = vunpack.c.l.b16 %v700
        %v1298 = vunpack.c.l.b16 %v701
        %v1299 = vunpack.c.l.b16 %v702
        %v1300 = vunpack.c.l.b16 %v703
        %v1301 = vunpack.c.l.b16 %v704
        %v1302 = vunpack.c.l.b16 %v705
        %v1303 = vunpack.c.l.b16 %v706
        %v1304 = vunpack.c.l.b16 %v707
        %v1305 = vpack.c.b16 %v1274, %v1273
        %v1306 = vpack.c.b16 %v1276, %v1275
        %v1307 = vpack.c.b16 %v1278, %v1277
        %v1308 = vpack.c.b16 %v1280, %v1279
        %v1309 = vpack.c.b16 %v1282, %v1281
        %v1310 = vpack.c.b16 %v1284, %v1283
        %v1311 = vpack.c.b16 %v1286, %v1285
        %v1312 = vpack.c.b16 %v1288, %v1287
        %v1313 = vpack.c.b16 %v1290, %v1289
        %v1314 = vpack.c.b16 %v1292, %v1291
        %v1315 = vpack.c.b16 %v1294, %v1293
        %v1316 = vpack.c.b16 %v1296, %v1295
        %v1317 = vpack.c.b16 %v1298, %v1297
        %v1318 = vpack.c.b16 %v1300, %v1299
        %v1319 = vpack.c.b16 %v1302, %v1301
        %v1320 = vpack.c.b16 %v1304, %v1303
        %v1337 = vld [vmem:[%s8] sm:$0xf]
        %v1338 = vld [vmem:[%s8 + $0x4] sm:$0xf]
        %v1339 = vld [vmem:[%s8 + $0x8] sm:$0xf]
        %v1340 = vld [vmem:[%s8 + $0xc] sm:$0xf]
        %v1341 = vld [vmem:[%s8 + $0x10] sm:$0xf]
        %v1342 = vld [vmem:[%s8 + $0x14] sm:$0xf]
        %v1343 = vld [vmem:[%s8 + $0x18] sm:$0xf]
        %v1344 = vld [vmem:[%s8 + $0x1c] sm:$0xf]
        %v1345 = vld [vmem:[%s8 + $0x20] sm:$0xf]
        %v1346 = vld [vmem:[%s8 + $0x24] sm:$0xf]
        %v1347 = vld [vmem:[%s8 + $0x28] sm:$0xf]
        %v1348 = vld [vmem:[%s8 + $0x2c] sm:$0xf]
        %v1349 = vld [vmem:[%s8 + $0x30] sm:$0xf]
        %v1350 = vld [vmem:[%s8 + $0x34] sm:$0xf]
        %v1351 = vld [vmem:[%s8 + $0x38] sm:$0xf]
        %v1352 = vld [vmem:[%s8 + $0x3c] sm:$0xf]
        %v1353 = vld [vmem:[%s8 + $0x40] sm:$0xf]
        %v1354 = vld [vmem:[%s8 + $0x44] sm:$0xf]
        %v1355 = vld [vmem:[%s8 + $0x48] sm:$0xf]
        %v1356 = vld [vmem:[%s8 + $0x4c] sm:$0xf]
        %v1357 = vld [vmem:[%s8 + $0x50] sm:$0xf]
        %v1358 = vld [vmem:[%s8 + $0x54] sm:$0xf]
        %v1359 = vld [vmem:[%s8 + $0x58] sm:$0xf]
        %v1360 = vld [vmem:[%s8 + $0x5c] sm:$0xf]
        %v1361 = vld [vmem:[%s8 + $0x60] sm:$0xf]
        %v1362 = vld [vmem:[%s8 + $0x64] sm:$0xf]
        %v1363 = vld [vmem:[%s8 + $0x68] sm:$0xf]
        %v1364 = vld [vmem:[%s8 + $0x6c] sm:$0xf]
        %v1365 = vld [vmem:[%s8 + $0x70] sm:$0xf]
        %v1366 = vld [vmem:[%s8 + $0x74] sm:$0xf]
        %v1367 = vld [vmem:[%s8 + $0x78] sm:$0xf]
        %v1368 = vld [vmem:[%s8 + $0x7c] sm:$0xf]
        %v1370 = vperm.slane %v641, 0
        %v1404 = vunpack.c.l.b16 %v1337
        %v1405 = vunpack.c.l.b16 %v1338
        %v1406 = vunpack.c.l.b16 %v1339
        %v1407 = vunpack.c.l.b16 %v1340
        %v1408 = vunpack.c.l.b16 %v1341
        %v1409 = vunpack.c.l.b16 %v1342
        %v1410 = vunpack.c.l.b16 %v1343
        %v1411 = vunpack.c.l.b16 %v1344
        %v1412 = vunpack.c.l.b16 %v1345
        %v1413 = vunpack.c.l.b16 %v1346
        %v1414 = vunpack.c.l.b16 %v1347
        %v1415 = vunpack.c.l.b16 %v1348
        %v1416 = vunpack.c.l.b16 %v1349
        %v1417 = vunpack.c.l.b16 %v1350
        %v1418 = vunpack.c.l.b16 %v1351
        %v1419 = vunpack.c.l.b16 %v1352
        %v1420 = vunpack.c.l.b16 %v1353
        %v1421 = vunpack.c.l.b16 %v1354
        %v1422 = vunpack.c.l.b16 %v1355
        %v1423 = vunpack.c.l.b16 %v1356
        %v1424 = vunpack.c.l.b16 %v1357
        %v1425 = vunpack.c.l.b16 %v1358
        %v1426 = vunpack.c.l.b16 %v1359
        %v1427 = vunpack.c.l.b16 %v1360
        %v1428 = vunpack.c.l.b16 %v1361
        %v1429 = vunpack.c.l.b16 %v1362
        %v1430 = vunpack.c.l.b16 %v1363
        %v1431 = vunpack.c.l.b16 %v1364
        %v1432 = vunpack.c.l.b16 %v1365
        %v1433 = vunpack.c.l.b16 %v1366
        %v1434 = vunpack.c.l.b16 %v1367
        %v1435 = vunpack.c.l.b16 %v1368
        %v1436 = vpack.c.b16 %v1405, %v1404
        %v1437 = vpack.c.b16 %v1407, %v1406
        %v1438 = vpack.c.b16 %v1409, %v1408
        %v1439 = vpack.c.b16 %v1411, %v1410
        %v1440 = vpack.c.b16 %v1413, %v1412
        %v1441 = vpack.c.b16 %v1415, %v1414
        %v1442 = vpack.c.b16 %v1417, %v1416
        %v1443 = vpack.c.b16 %v1419, %v1418
        %v1444 = vpack.c.b16 %v1421, %v1420
        %v1445 = vpack.c.b16 %v1423, %v1422
        %v1446 = vpack.c.b16 %v1425, %v1424
        %v1447 = vpack.c.b16 %v1427, %v1426
        %v1448 = vpack.c.b16 %v1429, %v1428
        %v1449 = vpack.c.b16 %v1431, %v1430
        %v1450 = vpack.c.b16 %v1433, %v1432
        %v1451 = vpack.c.b16 %v1435, %v1434
        %1468 = vmatpush.bf16.msra.mxu0 %v1443
        %1469 = vmatpush.bf16.msra.mxu0 %v1442
        %1470 = vmatpush.bf16.msra.mxu0 %v1441
        %1471 = vmatpush.bf16.msra.mxu0 %v1440
        %1472 = vmatpush.bf16.msra.mxu0 %v1439
        %1473 = vmatpush.bf16.msra.mxu0 %v1438
        %1474 = vmatpush.bf16.msra.mxu0 %v1437
        %1475 = vmatpush.bf16.msra.mxu0 %v1436
        %1476 = vmatmul.bf16.gmra.mxu0 %v804
        %v1477 = vpop.f32.mrf.mxu0
        %v1478 = vadd.f32 %v1370, %v1477
        %v1479 = vpop.f32.mrf.mxu0
        %v1480 = vadd.f32 %v1370, %v1479
        %1481 = vmatmul.bf16.gmra.mxu0 %v805
        %v1482 = vpop.f32.mrf.mxu0
        %v1483 = vadd.f32 %v1370, %v1482
        %v1484 = vpop.f32.mrf.mxu0
        %v1485 = vadd.f32 %v1370, %v1484
        %1486 = vmatmul.bf16.gmra.mxu0 %v806
        %v1487 = vpop.f32.mrf.mxu0
        %v1488 = vadd.f32 %v1370, %v1487
        %v1489 = vpop.f32.mrf.mxu0
        %v1490 = vadd.f32 %v1370, %v1489
        %1491 = vmatmul.bf16.gmra.mxu0 %v807
        %v1492 = vpop.f32.mrf.mxu0
        %v1493 = vadd.f32 %v1370, %v1492
        %v1494 = vpop.f32.mrf.mxu0
        %v1495 = vadd.f32 %v1370, %v1494
        %1496 = vmatmul.bf16.gmra.mxu0 %v808
        %v1497 = vpop.f32.mrf.mxu0
        %v1498 = vadd.f32 %v1370, %v1497
        %v1499 = vpop.f32.mrf.mxu0
        %v1500 = vadd.f32 %v1370, %v1499
        %1501 = vmatmul.bf16.gmra.mxu0 %v809
        %v1502 = vpop.f32.mrf.mxu0
        %v1503 = vadd.f32 %v1370, %v1502
        %v1504 = vpop.f32.mrf.mxu0
        %v1505 = vadd.f32 %v1370, %v1504
        %1506 = vmatmul.bf16.gmra.mxu0 %v810
        %v1507 = vpop.f32.mrf.mxu0
        %v1508 = vadd.f32 %v1370, %v1507
        %v1509 = vpop.f32.mrf.mxu0
        %v1510 = vadd.f32 %v1370, %v1509
        %1511 = vmatmul.bf16.gmra.mxu0 %v811
        %v1512 = vpop.f32.mrf.mxu0
        %v1513 = vadd.f32 %v1370, %v1512
        %v1514 = vpop.f32.mrf.mxu0
        %v1515 = vadd.f32 %v1370, %v1514
        %1516 = vmatmul.bf16.gmra.mxu0 %v812
        %v1517 = vpop.f32.mrf.mxu0
        %v1518 = vadd.f32 %v1370, %v1517
        %v1519 = vpop.f32.mrf.mxu0
        %v1520 = vadd.f32 %v1370, %v1519
        %1521 = vmatmul.bf16.gmra.mxu0 %v813
        %v1522 = vpop.f32.mrf.mxu0
        %v1523 = vadd.f32 %v1370, %v1522
        %v1524 = vpop.f32.mrf.mxu0
        %v1525 = vadd.f32 %v1370, %v1524
        %1526 = vmatmul.bf16.gmra.mxu0 %v814
        %v1527 = vpop.f32.mrf.mxu0
        %v1528 = vadd.f32 %v1370, %v1527
        %v1529 = vpop.f32.mrf.mxu0
        %v1530 = vadd.f32 %v1370, %v1529
        %1531 = vmatmul.bf16.gmra.mxu0 %v815
        %v1532 = vpop.f32.mrf.mxu0
        %v1533 = vadd.f32 %v1370, %v1532
        %v1534 = vpop.f32.mrf.mxu0
        %v1535 = vadd.f32 %v1370, %v1534
        %1536 = vmatmul.bf16.gmra.mxu0 %v816
        %v1537 = vpop.f32.mrf.mxu0
        %v1538 = vadd.f32 %v1370, %v1537
        %v1539 = vpop.f32.mrf.mxu0
        %v1540 = vadd.f32 %v1370, %v1539
        %1541 = vmatmul.bf16.gmra.mxu0 %v817
        %v1542 = vpop.f32.mrf.mxu0
        %v1543 = vadd.f32 %v1370, %v1542
        %v1544 = vpop.f32.mrf.mxu0
        %v1545 = vadd.f32 %v1370, %v1544
        %1546 = vmatmul.bf16.gmra.mxu0 %v818
        %v1547 = vpop.f32.mrf.mxu0
        %v1548 = vadd.f32 %v1370, %v1547
        %v1549 = vpop.f32.mrf.mxu0
        %v1550 = vadd.f32 %v1370, %v1549
        %1551 = vmatmul.bf16.gmra.mxu0 %v819
        %v1552 = vpop.f32.mrf.mxu0
        %v1553 = vadd.f32 %v1370, %v1552
        %v1554 = vpop.f32.mrf.mxu0
        %v1555 = vadd.f32 %v1370, %v1554
        %1556 = vdwg.mxu0
        %1557 = vmatpush.bf16.msra.mxu0 %v1451
        %1558 = vmatpush.bf16.msra.mxu0 %v1450
        %1559 = vmatpush.bf16.msra.mxu0 %v1449
        %1560 = vmatpush.bf16.msra.mxu0 %v1448
        %1561 = vmatpush.bf16.msra.mxu0 %v1447
        %1562 = vmatpush.bf16.msra.mxu0 %v1446
        %1563 = vmatpush.bf16.msra.mxu0 %v1445
        %1564 = vmatpush.bf16.msra.mxu0 %v1444
        %1565 = vmatmul.bf16.gmra.mxu0 %v1305
        %v1566 = vpop.f32.mrf.mxu0
        %v1567 = vadd.f32 %v1478, %v1566
        %v1568 = vpop.f32.mrf.mxu0
        %v1569 = vadd.f32 %v1480, %v1568
        %1570 = vmatmul.bf16.gmra.mxu0 %v1306
        %v1571 = vpop.f32.mrf.mxu0
        %v1572 = vadd.f32 %v1483, %v1571
        %v1573 = vpop.f32.mrf.mxu0
        %v1574 = vadd.f32 %v1485, %v1573
        %1575 = vmatmul.bf16.gmra.mxu0 %v1307
        %v1576 = vpop.f32.mrf.mxu0
        %v1577 = vadd.f32 %v1488, %v1576
        %v1578 = vpop.f32.mrf.mxu0
        %v1579 = vadd.f32 %v1490, %v1578
        %1580 = vmatmul.bf16.gmra.mxu0 %v1308
        %v1581 = vpop.f32.mrf.mxu0
        %v1582 = vadd.f32 %v1493, %v1581
        %v1583 = vpop.f32.mrf.mxu0
        %v1584 = vadd.f32 %v1495, %v1583
        %1585 = vmatmul.bf16.gmra.mxu0 %v1309
        %v1586 = vpop.f32.mrf.mxu0
        %v1587 = vadd.f32 %v1498, %v1586
        %v1588 = vpop.f32.mrf.mxu0
        %v1589 = vadd.f32 %v1500, %v1588
        %1590 = vmatmul.bf16.gmra.mxu0 %v1310
        %v1591 = vpop.f32.mrf.mxu0
        %v1592 = vadd.f32 %v1503, %v1591
        %v1593 = vpop.f32.mrf.mxu0
        %v1594 = vadd.f32 %v1505, %v1593
        %1595 = vmatmul.bf16.gmra.mxu0 %v1311
        %v1596 = vpop.f32.mrf.mxu0
        %v1597 = vadd.f32 %v1508, %v1596
        %v1598 = vpop.f32.mrf.mxu0
        %v1599 = vadd.f32 %v1510, %v1598
        %1600 = vmatmul.bf16.gmra.mxu0 %v1312
        %v1601 = vpop.f32.mrf.mxu0
        %v1602 = vadd.f32 %v1513, %v1601
        %v1603 = vpop.f32.mrf.mxu0
        %v1604 = vadd.f32 %v1515, %v1603
        %1605 = vmatmul.bf16.gmra.mxu0 %v1313
        %v1606 = vpop.f32.mrf.mxu0
        %v1607 = vadd.f32 %v1518, %v1606
        %v1608 = vpop.f32.mrf.mxu0
        %v1609 = vadd.f32 %v1520, %v1608
        %1610 = vmatmul.bf16.gmra.mxu0 %v1314
        %v1611 = vpop.f32.mrf.mxu0
        %v1612 = vadd.f32 %v1523, %v1611
        %v1613 = vpop.f32.mrf.mxu0
        %v1614 = vadd.f32 %v1525, %v1613
        %1615 = vmatmul.bf16.gmra.mxu0 %v1315
        %v1616 = vpop.f32.mrf.mxu0
        %v1617 = vadd.f32 %v1528, %v1616
        %v1618 = vpop.f32.mrf.mxu0
        %v1619 = vadd.f32 %v1530, %v1618
        %1620 = vmatmul.bf16.gmra.mxu0 %v1316
        %v1621 = vpop.f32.mrf.mxu0
        %v1622 = vadd.f32 %v1533, %v1621
        %v1623 = vpop.f32.mrf.mxu0
        %v1624 = vadd.f32 %v1535, %v1623
        %1625 = vmatmul.bf16.gmra.mxu0 %v1317
        %v1626 = vpop.f32.mrf.mxu0
        %v1627 = vadd.f32 %v1538, %v1626
        %v1628 = vpop.f32.mrf.mxu0
        %v1629 = vadd.f32 %v1540, %v1628
        %1630 = vmatmul.bf16.gmra.mxu0 %v1318
        %v1631 = vpop.f32.mrf.mxu0
        %v1632 = vadd.f32 %v1543, %v1631
        %v1633 = vpop.f32.mrf.mxu0
        %v1634 = vadd.f32 %v1545, %v1633
        %1635 = vmatmul.bf16.gmra.mxu0 %v1319
        %v1636 = vpop.f32.mrf.mxu0
        %v1637 = vadd.f32 %v1548, %v1636
        %v1638 = vpop.f32.mrf.mxu0
        %v1639 = vadd.f32 %v1550, %v1638
        %1640 = vmatmul.bf16.gmra.mxu0 %v1320
        %v1641 = vpop.f32.mrf.mxu0
        %v1642 = vadd.f32 %v1553, %v1641
        %v1643 = vpop.f32.mrf.mxu0
        %v1644 = vadd.f32 %v1555, %v1643
        %1645 = vdwg.mxu0
        %v1646 = vld [vmem:[%s7] sm:$0xf]
        %v1647 = vld [vmem:[%s7 + $0x4] sm:$0xf]
        %v1648 = vld [vmem:[%s7 + $0x8] sm:$0xf]
        %v1649 = vld [vmem:[%s7 + $0xc] sm:$0xf]
        %v1650 = vld [vmem:[%s7 + $0x10] sm:$0xf]
        %v1651 = vld [vmem:[%s7 + $0x14] sm:$0xf]
        %v1652 = vld [vmem:[%s7 + $0x18] sm:$0xf]
        %v1653 = vld [vmem:[%s7 + $0x1c] sm:$0xf]
        %v1654 = vld [vmem:[%s7 + $0x20] sm:$0xf]
        %v1655 = vld [vmem:[%s7 + $0x24] sm:$0xf]
        %v1656 = vld [vmem:[%s7 + $0x28] sm:$0xf]
        %v1657 = vld [vmem:[%s7 + $0x2c] sm:$0xf]
        %v1658 = vld [vmem:[%s7 + $0x30] sm:$0xf]
        %v1659 = vld [vmem:[%s7 + $0x34] sm:$0xf]
        %v1660 = vld [vmem:[%s7 + $0x38] sm:$0xf]
        %v1661 = vld [vmem:[%s7 + $0x3c] sm:$0xf]
        %v1678 = vunpack.c.l.b16 %v1646
        %v1679 = vunpack.c.l.b16 %v1647
        %v1680 = vunpack.c.l.b16 %v1648
        %v1681 = vunpack.c.l.b16 %v1649
        %v1682 = vunpack.c.l.b16 %v1650
        %v1683 = vunpack.c.l.b16 %v1651
        %v1684 = vunpack.c.l.b16 %v1652
        %v1685 = vunpack.c.l.b16 %v1653
        %v1686 = vunpack.c.l.b16 %v1654
        %v1687 = vunpack.c.l.b16 %v1655
        %v1688 = vunpack.c.l.b16 %v1656
        %v1689 = vunpack.c.l.b16 %v1657
        %v1690 = vunpack.c.l.b16 %v1658
        %v1691 = vunpack.c.l.b16 %v1659
        %v1692 = vunpack.c.l.b16 %v1660
        %v1693 = vunpack.c.l.b16 %v1661
        %v1694 = vpack.c.b16 %v1679, %v1678
        %v1695 = vpack.c.b16 %v1681, %v1680
        %v1696 = vpack.c.b16 %v1683, %v1682
        %v1697 = vpack.c.b16 %v1685, %v1684
        %v1698 = vpack.c.b16 %v1687, %v1686
        %v1699 = vpack.c.b16 %v1689, %v1688
        %v1700 = vpack.c.b16 %v1691, %v1690
        %v1701 = vpack.c.b16 %v1693, %v1692
        %1710 = vmatpush.bf16.msra.mxu0 %v1701
        %1711 = vmatpush.bf16.msra.mxu0 %v1700
        %1712 = vmatpush.bf16.msra.mxu0 %v1699
        %1713 = vmatpush.bf16.msra.mxu0 %v1698
        %1714 = vmatpush.bf16.msra.mxu0 %v1697
        %1715 = vmatpush.bf16.msra.mxu0 %v1696
        %1716 = vmatpush.bf16.msra.mxu0 %v1695
        %1717 = vmatpush.bf16.msra.mxu0 %v1694
        %1718 = vmatmul.bf16.gmra.mxu0 %v1305
        %v1719 = vpop.f32.mrf.mxu0
        %v1720 = vadd.f32 0.0, %v1719
        %v1721 = vpop.f32.mrf.mxu0
        %v1722 = vadd.f32 0.0, %v1721
        %1723 = vmatmul.bf16.gmra.mxu0 %v1306
        %v1724 = vpop.f32.mrf.mxu0
        %v1725 = vadd.f32 0.0, %v1724
        %v1726 = vpop.f32.mrf.mxu0
        %v1727 = vadd.f32 0.0, %v1726
        %1728 = vmatmul.bf16.gmra.mxu0 %v1307
        %v1729 = vpop.f32.mrf.mxu0
        %v1730 = vadd.f32 0.0, %v1729
        %v1731 = vpop.f32.mrf.mxu0
        %v1732 = vadd.f32 0.0, %v1731
        %1733 = vmatmul.bf16.gmra.mxu0 %v1308
        %v1734 = vpop.f32.mrf.mxu0
        %v1735 = vadd.f32 0.0, %v1734
        %v1736 = vpop.f32.mrf.mxu0
        %v1737 = vadd.f32 0.0, %v1736
        %1738 = vmatmul.bf16.gmra.mxu0 %v1309
        %v1739 = vpop.f32.mrf.mxu0
        %v1740 = vadd.f32 0.0, %v1739
        %v1741 = vpop.f32.mrf.mxu0
        %v1742 = vadd.f32 0.0, %v1741
        %1743 = vmatmul.bf16.gmra.mxu0 %v1310
        %v1744 = vpop.f32.mrf.mxu0
        %v1745 = vadd.f32 0.0, %v1744
        %v1746 = vpop.f32.mrf.mxu0
        %v1747 = vadd.f32 0.0, %v1746
        %1748 = vmatmul.bf16.gmra.mxu0 %v1311
        %v1749 = vpop.f32.mrf.mxu0
        %v1750 = vadd.f32 0.0, %v1749
        %v1751 = vpop.f32.mrf.mxu0
        %v1752 = vadd.f32 0.0, %v1751
        %1753 = vmatmul.bf16.gmra.mxu0 %v1312
        %v1754 = vpop.f32.mrf.mxu0
        %v1755 = vadd.f32 0.0, %v1754
        %v1756 = vpop.f32.mrf.mxu0
        %v1757 = vadd.f32 0.0, %v1756
        %1758 = vmatmul.bf16.gmra.mxu0 %v1313
        %v1759 = vpop.f32.mrf.mxu0
        %v1760 = vadd.f32 0.0, %v1759
        %v1761 = vpop.f32.mrf.mxu0
        %v1762 = vadd.f32 0.0, %v1761
        %1763 = vmatmul.bf16.gmra.mxu0 %v1314
        %v1764 = vpop.f32.mrf.mxu0
        %v1765 = vadd.f32 0.0, %v1764
        %v1766 = vpop.f32.mrf.mxu0
        %v1767 = vadd.f32 0.0, %v1766
        %1768 = vmatmul.bf16.gmra.mxu0 %v1315
        %v1769 = vpop.f32.mrf.mxu0
        %v1770 = vadd.f32 0.0, %v1769
        %v1771 = vpop.f32.mrf.mxu0
        %v1772 = vadd.f32 0.0, %v1771
        %1773 = vmatmul.bf16.gmra.mxu0 %v1316
        %v1774 = vpop.f32.mrf.mxu0
        %v1775 = vadd.f32 0.0, %v1774
        %v1776 = vpop.f32.mrf.mxu0
        %v1777 = vadd.f32 0.0, %v1776
        %1778 = vmatmul.bf16.gmra.mxu0 %v1317
        %v1779 = vpop.f32.mrf.mxu0
        %v1780 = vadd.f32 0.0, %v1779
        %v1781 = vpop.f32.mrf.mxu0
        %v1782 = vadd.f32 0.0, %v1781
        %1783 = vmatmul.bf16.gmra.mxu0 %v1318
        %v1784 = vpop.f32.mrf.mxu0
        %v1785 = vadd.f32 0.0, %v1784
        %v1786 = vpop.f32.mrf.mxu0
        %v1787 = vadd.f32 0.0, %v1786
        %1788 = vmatmul.bf16.gmra.mxu0 %v1319
        %v1789 = vpop.f32.mrf.mxu0
        %v1790 = vadd.f32 0.0, %v1789
        %v1791 = vpop.f32.mrf.mxu0
        %v1792 = vadd.f32 0.0, %v1791
        %1793 = vmatmul.bf16.gmra.mxu0 %v1320
        %v1794 = vpop.f32.mrf.mxu0
        %v1795 = vadd.f32 0.0, %v1794
        %v1796 = vpop.f32.mrf.mxu0
        %v1797 = vadd.f32 0.0, %v1796
        %1798 = vdwg.mxu0
        %v1799 = vadd.f32 %v1162, %v1720
        %v1800 = vadd.f32 %v1164, %v1722
        %v1801 = vadd.f32 %v1167, %v1725
        %v1802 = vadd.f32 %v1169, %v1727
        %v1803 = vadd.f32 %v1172, %v1730
        %v1804 = vadd.f32 %v1174, %v1732
        %v1805 = vadd.f32 %v1177, %v1735
        %v1806 = vadd.f32 %v1179, %v1737
        %v1807 = vadd.f32 %v1182, %v1740
        %v1808 = vadd.f32 %v1184, %v1742
        %v1809 = vadd.f32 %v1187, %v1745
        %v1810 = vadd.f32 %v1189, %v1747
        %v1811 = vadd.f32 %v1192, %v1750
        %v1812 = vadd.f32 %v1194, %v1752
        %v1813 = vadd.f32 %v1197, %v1755
        %v1814 = vadd.f32 %v1199, %v1757
        %v1815 = vadd.f32 %v1202, %v1760
        %v1816 = vadd.f32 %v1204, %v1762
        %v1817 = vadd.f32 %v1207, %v1765
        %v1818 = vadd.f32 %v1209, %v1767
        %v1819 = vadd.f32 %v1212, %v1770
        %v1820 = vadd.f32 %v1214, %v1772
        %v1821 = vadd.f32 %v1217, %v1775
        %v1822 = vadd.f32 %v1219, %v1777
        %v1823 = vadd.f32 %v1222, %v1780
        %v1824 = vadd.f32 %v1224, %v1782
        %v1825 = vadd.f32 %v1227, %v1785
        %v1826 = vadd.f32 %v1229, %v1787
        %v1827 = vadd.f32 %v1232, %v1790
        %v1828 = vadd.f32 %v1234, %v1792
        %v1829 = vadd.f32 %v1237, %v1795
        %v1830 = vadd.f32 %v1239, %v1797
        %v1831 = vtanh.pop %v1799
        %v1832 = vtanh.pop %v1800
        %v1833 = vtanh.pop %v1801
        %v1834 = vtanh.pop %v1802
        %v1835 = vtanh.pop %v1803
        %v1836 = vtanh.pop %v1804
        %v1837 = vtanh.pop %v1805
        %v1838 = vtanh.pop %v1806
        %v1839 = vtanh.pop %v1807
        %v1840 = vtanh.pop %v1808
        %v1841 = vtanh.pop %v1809
        %v1842 = vtanh.pop %v1810
        %v1843 = vtanh.pop %v1811
        %v1844 = vtanh.pop %v1812
        %v1845 = vtanh.pop %v1813
        %v1846 = vtanh.pop %v1814
        %v1847 = vtanh.pop %v1815
        %v1848 = vtanh.pop %v1816
        %v1849 = vtanh.pop %v1817
        %v1850 = vtanh.pop %v1818
        %v1851 = vtanh.pop %v1819
        %v1852 = vtanh.pop %v1820
        %v1853 = vtanh.pop %v1821
        %v1854 = vtanh.pop %v1822
        %v1855 = vtanh.pop %v1823
        %v1856 = vtanh.pop %v1824
        %v1857 = vtanh.pop %v1825
        %v1858 = vtanh.pop %v1826
        %v1859 = vtanh.pop %v1827
        %v1860 = vtanh.pop %v1828
        %v1861 = vtanh.pop %v1829
        %v1862 = vtanh.pop %v1830
        %v1863 = vadd.f32 %v576, %v1831
        %v1864 = vadd.f32 %v577, %v1832
        %v1865 = vadd.f32 %v578, %v1833
        %v1866 = vadd.f32 %v579, %v1834
        %v1867 = vadd.f32 %v580, %v1835
        %v1868 = vadd.f32 %v581, %v1836
        %v1869 = vadd.f32 %v582, %v1837
        %v1870 = vadd.f32 %v583, %v1838
        %v1871 = vadd.f32 %v584, %v1839
        %v1872 = vadd.f32 %v585, %v1840
        %v1873 = vadd.f32 %v586, %v1841
        %v1874 = vadd.f32 %v587, %v1842
        %v1875 = vadd.f32 %v588, %v1843
        %v1876 = vadd.f32 %v589, %v1844
        %v1877 = vadd.f32 %v590, %v1845
        %v1878 = vadd.f32 %v591, %v1846
        %v1879 = vadd.f32 %v592, %v1847
        %v1880 = vadd.f32 %v593, %v1848
        %v1881 = vadd.f32 %v594, %v1849
        %v1882 = vadd.f32 %v595, %v1850
        %v1883 = vadd.f32 %v596, %v1851
        %v1884 = vadd.f32 %v597, %v1852
        %v1885 = vadd.f32 %v598, %v1853
        %v1886 = vadd.f32 %v599, %v1854
        %v1887 = vadd.f32 %v600, %v1855
        %v1888 = vadd.f32 %v601, %v1856
        %v1889 = vadd.f32 %v602, %v1857
        %v1890 = vadd.f32 %v603, %v1858
        %v1891 = vadd.f32 %v604, %v1859
        %v1892 = vadd.f32 %v605, %v1860
        %v1893 = vadd.f32 %v606, %v1861
        %v1894 = vadd.f32 %v607, %v1862
        %v1895 = vld [vmem:[%s9] sm:$0xf]
        %v1896 = vld [vmem:[%s9 + $0x4] sm:$0xf]
        %v1897 = vld [vmem:[%s9 + $0x8] sm:$0xf]
        %v1898 = vld [vmem:[%s9 + $0xc] sm:$0xf]
        %v1899 = vld [vmem:[%s9 + $0x10] sm:$0xf]
        %v1900 = vld [vmem:[%s9 + $0x14] sm:$0xf]
        %v1901 = vld [vmem:[%s9 + $0x18] sm:$0xf]
        %v1902 = vld [vmem:[%s9 + $0x1c] sm:$0xf]
        %v1903 = vld [vmem:[%s9 + $0x20] sm:$0xf]
        %v1904 = vld [vmem:[%s9 + $0x24] sm:$0xf]
        %v1905 = vld [vmem:[%s9 + $0x28] sm:$0xf]
        %v1906 = vld [vmem:[%s9 + $0x2c] sm:$0xf]
        %v1907 = vld [vmem:[%s9 + $0x30] sm:$0xf]
        %v1908 = vld [vmem:[%s9 + $0x34] sm:$0xf]
        %v1909 = vld [vmem:[%s9 + $0x38] sm:$0xf]
        %v1910 = vld [vmem:[%s9 + $0x3c] sm:$0xf]
        %v1927 = vunpack.c.l.b16 %v1895
        %v1928 = vunpack.c.l.b16 %v1896
        %v1929 = vunpack.c.l.b16 %v1897
        %v1930 = vunpack.c.l.b16 %v1898
        %v1931 = vunpack.c.l.b16 %v1899
        %v1932 = vunpack.c.l.b16 %v1900
        %v1933 = vunpack.c.l.b16 %v1901
        %v1934 = vunpack.c.l.b16 %v1902
        %v1935 = vunpack.c.l.b16 %v1903
        %v1936 = vunpack.c.l.b16 %v1904
        %v1937 = vunpack.c.l.b16 %v1905
        %v1938 = vunpack.c.l.b16 %v1906
        %v1939 = vunpack.c.l.b16 %v1907
        %v1940 = vunpack.c.l.b16 %v1908
        %v1941 = vunpack.c.l.b16 %v1909
        %v1942 = vunpack.c.l.b16 %v1910
        %v1943 = vpack.c.b16 %v1928, %v1927
        %v1944 = vpack.c.b16 %v1930, %v1929
        %v1945 = vpack.c.b16 %v1932, %v1931
        %v1946 = vpack.c.b16 %v1934, %v1933
        %v1947 = vpack.c.b16 %v1936, %v1935
        %v1948 = vpack.c.b16 %v1938, %v1937
        %v1949 = vpack.c.b16 %v1940, %v1939
        %v1950 = vpack.c.b16 %v1942, %v1941
        %1959 = vmatpush.bf16.msra.mxu0 %v1950
        %1960 = vmatpush.bf16.msra.mxu0 %v1949
        %1961 = vmatpush.bf16.msra.mxu0 %v1948
        %1962 = vmatpush.bf16.msra.mxu0 %v1947
        %1963 = vmatpush.bf16.msra.mxu0 %v1946
        %1964 = vmatpush.bf16.msra.mxu0 %v1945
        %1965 = vmatpush.bf16.msra.mxu0 %v1944
        %1966 = vmatpush.bf16.msra.mxu0 %v1943
        %1967 = vmatmul.bf16.gmra.mxu0 %v1305
        %v1968 = vpop.f32.mrf.mxu0
        %v1969 = vadd.f32 0.0, %v1968
        %v1970 = vpop.f32.mrf.mxu0
        %v1971 = vadd.f32 0.0, %v1970
        %1972 = vmatmul.bf16.gmra.mxu0 %v1306
        %v1973 = vpop.f32.mrf.mxu0
        %v1974 = vadd.f32 0.0, %v1973
        %v1975 = vpop.f32.mrf.mxu0
        %v1976 = vadd.f32 0.0, %v1975
        %1977 = vmatmul.bf16.gmra.mxu0 %v1307
        %v1978 = vpop.f32.mrf.mxu0
        %v1979 = vadd.f32 0.0, %v1978
        %v1980 = vpop.f32.mrf.mxu0
        %v1981 = vadd.f32 0.0, %v1980
        %1982 = vmatmul.bf16.gmra.mxu0 %v1308
        %v1983 = vpop.f32.mrf.mxu0
        %v1984 = vadd.f32 0.0, %v1983
        %v1985 = vpop.f32.mrf.mxu0
        %v1986 = vadd.f32 0.0, %v1985
        %1987 = vmatmul.bf16.gmra.mxu0 %v1309
        %v1988 = vpop.f32.mrf.mxu0
        %v1989 = vadd.f32 0.0, %v1988
        %v1990 = vpop.f32.mrf.mxu0
        %v1991 = vadd.f32 0.0, %v1990
        %1992 = vmatmul.bf16.gmra.mxu0 %v1310
        %v1993 = vpop.f32.mrf.mxu0
        %v1994 = vadd.f32 0.0, %v1993
        %v1995 = vpop.f32.mrf.mxu0
        %v1996 = vadd.f32 0.0, %v1995
        %1997 = vmatmul.bf16.gmra.mxu0 %v1311
        %v1998 = vpop.f32.mrf.mxu0
        %v1999 = vadd.f32 0.0, %v1998
        %v2000 = vpop.f32.mrf.mxu0
        %v2001 = vadd.f32 0.0, %v2000
        %2002 = vmatmul.bf16.gmra.mxu0 %v1312
        %v2003 = vpop.f32.mrf.mxu0
        %v2004 = vadd.f32 0.0, %v2003
        %v2005 = vpop.f32.mrf.mxu0
        %v2006 = vadd.f32 0.0, %v2005
        %2007 = vmatmul.bf16.gmra.mxu0 %v1313
        %v2008 = vpop.f32.mrf.mxu0
        %v2009 = vadd.f32 0.0, %v2008
        %v2010 = vpop.f32.mrf.mxu0
        %v2011 = vadd.f32 0.0, %v2010
        %2012 = vmatmul.bf16.gmra.mxu0 %v1314
        %v2013 = vpop.f32.mrf.mxu0
        %v2014 = vadd.f32 0.0, %v2013
        %v2015 = vpop.f32.mrf.mxu0
        %v2016 = vadd.f32 0.0, %v2015
        %2017 = vmatmul.bf16.gmra.mxu0 %v1315
        %v2018 = vpop.f32.mrf.mxu0
        %v2019 = vadd.f32 0.0, %v2018
        %v2020 = vpop.f32.mrf.mxu0
        %v2021 = vadd.f32 0.0, %v2020
        %2022 = vmatmul.bf16.gmra.mxu0 %v1316
        %v2023 = vpop.f32.mrf.mxu0
        %v2024 = vadd.f32 0.0, %v2023
        %v2025 = vpop.f32.mrf.mxu0
        %v2026 = vadd.f32 0.0, %v2025
        %2027 = vmatmul.bf16.gmra.mxu0 %v1317
        %v2028 = vpop.f32.mrf.mxu0
        %v2029 = vadd.f32 0.0, %v2028
        %v2030 = vpop.f32.mrf.mxu0
        %v2031 = vadd.f32 0.0, %v2030
        %2032 = vmatmul.bf16.gmra.mxu0 %v1318
        %v2033 = vpop.f32.mrf.mxu0
        %v2034 = vadd.f32 0.0, %v2033
        %v2035 = vpop.f32.mrf.mxu0
        %v2036 = vadd.f32 0.0, %v2035
        %2037 = vmatmul.bf16.gmra.mxu0 %v1319
        %v2038 = vpop.f32.mrf.mxu0
        %v2039 = vadd.f32 0.0, %v2038
        %v2040 = vpop.f32.mrf.mxu0
        %v2041 = vadd.f32 0.0, %v2040
        %2042 = vmatmul.bf16.gmra.mxu0 %v1320
        %v2043 = vpop.f32.mrf.mxu0
        %v2044 = vadd.f32 0.0, %v2043
        %v2045 = vpop.f32.mrf.mxu0
        %v2046 = vadd.f32 0.0, %v2045
        %2047 = vdwg.mxu0
        %v2048 = vadd.f32 %v1567, %v1969
        %v2049 = vadd.f32 %v1569, %v1971
        %v2050 = vadd.f32 %v1572, %v1974
        %v2051 = vadd.f32 %v1574, %v1976
        %v2052 = vadd.f32 %v1577, %v1979
        %v2053 = vadd.f32 %v1579, %v1981
        %v2054 = vadd.f32 %v1582, %v1984
        %v2055 = vadd.f32 %v1584, %v1986
        %v2056 = vadd.f32 %v1587, %v1989
        %v2057 = vadd.f32 %v1589, %v1991
        %v2058 = vadd.f32 %v1592, %v1994
        %v2059 = vadd.f32 %v1594, %v1996
        %v2060 = vadd.f32 %v1597, %v1999
        %v2061 = vadd.f32 %v1599, %v2001
        %v2062 = vadd.f32 %v1602, %v2004
        %v2063 = vadd.f32 %v1604, %v2006
        %v2064 = vadd.f32 %v1607, %v2009
        %v2065 = vadd.f32 %v1609, %v2011
        %v2066 = vadd.f32 %v1612, %v2014
        %v2067 = vadd.f32 %v1614, %v2016
        %v2068 = vadd.f32 %v1617, %v2019
        %v2069 = vadd.f32 %v1619, %v2021
        %v2070 = vadd.f32 %v1622, %v2024
        %v2071 = vadd.f32 %v1624, %v2026
        %v2072 = vadd.f32 %v1627, %v2029
        %v2073 = vadd.f32 %v1629, %v2031
        %v2074 = vadd.f32 %v1632, %v2034
        %v2075 = vadd.f32 %v1634, %v2036
        %v2076 = vadd.f32 %v1637, %v2039
        %v2077 = vadd.f32 %v1639, %v2041
        %v2078 = vadd.f32 %v1642, %v2044
        %v2079 = vadd.f32 %v1644, %v2046
        %v2080 = vtanh.pop %v2048
        %v2081 = vtanh.pop %v2049
        %v2082 = vtanh.pop %v2050
        %v2083 = vtanh.pop %v2051
        %v2084 = vtanh.pop %v2052
        %v2085 = vtanh.pop %v2053
        %v2086 = vtanh.pop %v2054
        %v2087 = vtanh.pop %v2055
        %v2088 = vtanh.pop %v2056
        %v2089 = vtanh.pop %v2057
        %v2090 = vtanh.pop %v2058
        %v2091 = vtanh.pop %v2059
        %v2092 = vtanh.pop %v2060
        %v2093 = vtanh.pop %v2061
        %v2094 = vtanh.pop %v2062
        %v2095 = vtanh.pop %v2063
        %v2096 = vtanh.pop %v2064
        %v2097 = vtanh.pop %v2065
        %v2098 = vtanh.pop %v2066
        %v2099 = vtanh.pop %v2067
        %v2100 = vtanh.pop %v2068
        %v2101 = vtanh.pop %v2069
        %v2102 = vtanh.pop %v2070
        %v2103 = vtanh.pop %v2071
        %v2104 = vtanh.pop %v2072
        %v2105 = vtanh.pop %v2073
        %v2106 = vtanh.pop %v2074
        %v2107 = vtanh.pop %v2075
        %v2108 = vtanh.pop %v2076
        %v2109 = vtanh.pop %v2077
        %v2110 = vtanh.pop %v2078
        %v2111 = vtanh.pop %v2079
        %v2112 = vadd.f32 %v576, %v2080
        %v2113 = vadd.f32 %v577, %v2081
        %v2114 = vadd.f32 %v578, %v2082
        %v2115 = vadd.f32 %v579, %v2083
        %v2116 = vadd.f32 %v580, %v2084
        %v2117 = vadd.f32 %v581, %v2085
        %v2118 = vadd.f32 %v582, %v2086
        %v2119 = vadd.f32 %v583, %v2087
        %v2120 = vadd.f32 %v584, %v2088
        %v2121 = vadd.f32 %v585, %v2089
        %v2122 = vadd.f32 %v586, %v2090
        %v2123 = vadd.f32 %v587, %v2091
        %v2124 = vadd.f32 %v588, %v2092
        %v2125 = vadd.f32 %v589, %v2093
        %v2126 = vadd.f32 %v590, %v2094
        %v2127 = vadd.f32 %v591, %v2095
        %v2128 = vadd.f32 %v592, %v2096
        %v2129 = vadd.f32 %v593, %v2097
        %v2130 = vadd.f32 %v594, %v2098
        %v2131 = vadd.f32 %v595, %v2099
        %v2132 = vadd.f32 %v596, %v2100
        %v2133 = vadd.f32 %v597, %v2101
        %v2134 = vadd.f32 %v598, %v2102
        %v2135 = vadd.f32 %v599, %v2103
        %v2136 = vadd.f32 %v600, %v2104
        %v2137 = vadd.f32 %v601, %v2105
        %v2138 = vadd.f32 %v602, %v2106
        %v2139 = vadd.f32 %v603, %v2107
        %v2140 = vadd.f32 %v604, %v2108
        %v2141 = vadd.f32 %v605, %v2109
        %v2142 = vadd.f32 %v606, %v2110
        %v2143 = vadd.f32 %v607, %v2111
        %v2144 = vsub.f32 %v576, %v1863
        %v2145 = vsub.f32 %v577, %v1864
        %v2146 = vsub.f32 %v578, %v1865
        %v2147 = vsub.f32 %v579, %v1866
        %v2148 = vsub.f32 %v580, %v1867
        %v2149 = vsub.f32 %v581, %v1868
        %v2150 = vsub.f32 %v582, %v1869
        %v2151 = vsub.f32 %v583, %v1870
        %v2152 = vsub.f32 %v584, %v1871
        %v2153 = vsub.f32 %v585, %v1872
        %v2154 = vsub.f32 %v586, %v1873
        %v2155 = vsub.f32 %v587, %v1874
        %v2156 = vsub.f32 %v588, %v1875
        %v2157 = vsub.f32 %v589, %v1876
        %v2158 = vsub.f32 %v590, %v1877
        %v2159 = vsub.f32 %v591, %v1878
        %v2160 = vsub.f32 %v592, %v1879
        %v2161 = vsub.f32 %v593, %v1880
        %v2162 = vsub.f32 %v594, %v1881
        %v2163 = vsub.f32 %v595, %v1882
        %v2164 = vsub.f32 %v596, %v1883
        %v2165 = vsub.f32 %v597, %v1884
        %v2166 = vsub.f32 %v598, %v1885
        %v2167 = vsub.f32 %v599, %v1886
        %v2168 = vsub.f32 %v600, %v1887
        %v2169 = vsub.f32 %v601, %v1888
        %v2170 = vsub.f32 %v602, %v1889
        %v2171 = vsub.f32 %v603, %v1890
        %v2172 = vsub.f32 %v604, %v1891
        %v2173 = vsub.f32 %v605, %v1892
        %v2174 = vsub.f32 %v606, %v1893
        %v2175 = vsub.f32 %v607, %v1894
        %v2176 = vstv %s642
        %v2177 = vmul.f32 %v2176, %v2144
        %v2178 = vmul.f32 %v2176, %v2145
        %v2179 = vmul.f32 %v2176, %v2146
        %v2180 = vmul.f32 %v2176, %v2147
        %v2181 = vmul.f32 %v2176, %v2148
        %v2182 = vmul.f32 %v2176, %v2149
        %v2183 = vmul.f32 %v2176, %v2150
        %v2184 = vmul.f32 %v2176, %v2151
        %v2185 = vmul.f32 %v2176, %v2152
        %v2186 = vmul.f32 %v2176, %v2153
        %v2187 = vmul.f32 %v2176, %v2154
        %v2188 = vmul.f32 %v2176, %v2155
        %v2189 = vmul.f32 %v2176, %v2156
        %v2190 = vmul.f32 %v2176, %v2157
        %v2191 = vmul.f32 %v2176, %v2158
        %v2192 = vmul.f32 %v2176, %v2159
        %v2193 = vmul.f32 %v2176, %v2160
        %v2194 = vmul.f32 %v2176, %v2161
        %v2195 = vmul.f32 %v2176, %v2162
        %v2196 = vmul.f32 %v2176, %v2163
        %v2197 = vmul.f32 %v2176, %v2164
        %v2198 = vmul.f32 %v2176, %v2165
        %v2199 = vmul.f32 %v2176, %v2166
        %v2200 = vmul.f32 %v2176, %v2167
        %v2201 = vmul.f32 %v2176, %v2168
        %v2202 = vmul.f32 %v2176, %v2169
        %v2203 = vmul.f32 %v2176, %v2170
        %v2204 = vmul.f32 %v2176, %v2171
        %v2205 = vmul.f32 %v2176, %v2172
        %v2206 = vmul.f32 %v2176, %v2173
        %v2207 = vmul.f32 %v2176, %v2174
        %v2208 = vmul.f32 %v2176, %v2175
        %v2209 = vpack.c.bf16 %v2112, %v2112
        %v2210 = vpack.c.bf16 %v2113, %v2113
        %v2211 = vpack.c.bf16 %v2114, %v2114
        %v2212 = vpack.c.bf16 %v2115, %v2115
        %v2213 = vpack.c.bf16 %v2116, %v2116
        %v2214 = vpack.c.bf16 %v2117, %v2117
        %v2215 = vpack.c.bf16 %v2118, %v2118
        %v2216 = vpack.c.bf16 %v2119, %v2119
        %v2217 = vpack.c.bf16 %v2120, %v2120
        %v2218 = vpack.c.bf16 %v2121, %v2121
        %v2219 = vpack.c.bf16 %v2122, %v2122
        %v2220 = vpack.c.bf16 %v2123, %v2123
        %v2221 = vpack.c.bf16 %v2124, %v2124
        %v2222 = vpack.c.bf16 %v2125, %v2125
        %v2223 = vpack.c.bf16 %v2126, %v2126
        %v2224 = vpack.c.bf16 %v2127, %v2127
        %v2225 = vpack.c.bf16 %v2128, %v2128
        %v2226 = vpack.c.bf16 %v2129, %v2129
        %v2227 = vpack.c.bf16 %v2130, %v2130
        %v2228 = vpack.c.bf16 %v2131, %v2131
        %v2229 = vpack.c.bf16 %v2132, %v2132
        %v2230 = vpack.c.bf16 %v2133, %v2133
        %v2231 = vpack.c.bf16 %v2134, %v2134
        %v2232 = vpack.c.bf16 %v2135, %v2135
        %v2233 = vpack.c.bf16 %v2136, %v2136
        %v2234 = vpack.c.bf16 %v2137, %v2137
        %v2235 = vpack.c.bf16 %v2138, %v2138
        %v2236 = vpack.c.bf16 %v2139, %v2139
        %v2237 = vpack.c.bf16 %v2140, %v2140
        %v2238 = vpack.c.bf16 %v2141, %v2141
        %v2239 = vpack.c.bf16 %v2142, %v2142
        %v2240 = vpack.c.bf16 %v2143, %v2143
        %v2241 = vpack.c.bf16 %v2177, %v2177
        %v2242 = vpack.c.bf16 %v2178, %v2178
        %v2243 = vpack.c.bf16 %v2179, %v2179
        %v2244 = vpack.c.bf16 %v2180, %v2180
        %v2245 = vpack.c.bf16 %v2181, %v2181
        %v2246 = vpack.c.bf16 %v2182, %v2182
        %v2247 = vpack.c.bf16 %v2183, %v2183
        %v2248 = vpack.c.bf16 %v2184, %v2184
        %v2249 = vpack.c.bf16 %v2185, %v2185
        %v2250 = vpack.c.bf16 %v2186, %v2186
        %v2251 = vpack.c.bf16 %v2187, %v2187
        %v2252 = vpack.c.bf16 %v2188, %v2188
        %v2253 = vpack.c.bf16 %v2189, %v2189
        %v2254 = vpack.c.bf16 %v2190, %v2190
        %v2255 = vpack.c.bf16 %v2191, %v2191
        %v2256 = vpack.c.bf16 %v2192, %v2192
        %v2257 = vpack.c.bf16 %v2193, %v2193
        %v2258 = vpack.c.bf16 %v2194, %v2194
        %v2259 = vpack.c.bf16 %v2195, %v2195
        %v2260 = vpack.c.bf16 %v2196, %v2196
        %v2261 = vpack.c.bf16 %v2197, %v2197
        %v2262 = vpack.c.bf16 %v2198, %v2198
        %v2263 = vpack.c.bf16 %v2199, %v2199
        %v2264 = vpack.c.bf16 %v2200, %v2200
        %v2265 = vpack.c.bf16 %v2201, %v2201
        %v2266 = vpack.c.bf16 %v2202, %v2202
        %v2267 = vpack.c.bf16 %v2203, %v2203
        %v2268 = vpack.c.bf16 %v2204, %v2204
        %v2269 = vpack.c.bf16 %v2205, %v2205
        %v2270 = vpack.c.bf16 %v2206, %v2206
        %v2271 = vpack.c.bf16 %v2207, %v2207
        %v2272 = vpack.c.bf16 %v2208, %v2208
        %v2305 = vunpack.c.l.b16 %v2209
        %v2306 = vunpack.c.l.b16 %v2210
        %v2307 = vunpack.c.l.b16 %v2211
        %v2308 = vunpack.c.l.b16 %v2212
        %v2309 = vunpack.c.l.b16 %v2213
        %v2310 = vunpack.c.l.b16 %v2214
        %v2311 = vunpack.c.l.b16 %v2215
        %v2312 = vunpack.c.l.b16 %v2216
        %v2313 = vunpack.c.l.b16 %v2217
        %v2314 = vunpack.c.l.b16 %v2218
        %v2315 = vunpack.c.l.b16 %v2219
        %v2316 = vunpack.c.l.b16 %v2220
        %v2317 = vunpack.c.l.b16 %v2221
        %v2318 = vunpack.c.l.b16 %v2222
        %v2319 = vunpack.c.l.b16 %v2223
        %v2320 = vunpack.c.l.b16 %v2224
        %v2321 = vunpack.c.l.b16 %v2225
        %v2322 = vunpack.c.l.b16 %v2226
        %v2323 = vunpack.c.l.b16 %v2227
        %v2324 = vunpack.c.l.b16 %v2228
        %v2325 = vunpack.c.l.b16 %v2229
        %v2326 = vunpack.c.l.b16 %v2230
        %v2327 = vunpack.c.l.b16 %v2231
        %v2328 = vunpack.c.l.b16 %v2232
        %v2329 = vunpack.c.l.b16 %v2233
        %v2330 = vunpack.c.l.b16 %v2234
        %v2331 = vunpack.c.l.b16 %v2235
        %v2332 = vunpack.c.l.b16 %v2236
        %v2333 = vunpack.c.l.b16 %v2237
        %v2334 = vunpack.c.l.b16 %v2238
        %v2335 = vunpack.c.l.b16 %v2239
        %v2336 = vunpack.c.l.b16 %v2240
        %v2337 = vpack.c.b16 %v2306, %v2305
        %v2338 = vpack.c.b16 %v2308, %v2307
        %v2339 = vpack.c.b16 %v2310, %v2309
        %v2340 = vpack.c.b16 %v2312, %v2311
        %v2341 = vpack.c.b16 %v2314, %v2313
        %v2342 = vpack.c.b16 %v2316, %v2315
        %v2343 = vpack.c.b16 %v2318, %v2317
        %v2344 = vpack.c.b16 %v2320, %v2319
        %v2345 = vpack.c.b16 %v2322, %v2321
        %v2346 = vpack.c.b16 %v2324, %v2323
        %v2347 = vpack.c.b16 %v2326, %v2325
        %v2348 = vpack.c.b16 %v2328, %v2327
        %v2349 = vpack.c.b16 %v2330, %v2329
        %v2350 = vpack.c.b16 %v2332, %v2331
        %v2351 = vpack.c.b16 %v2334, %v2333
        %v2352 = vpack.c.b16 %v2336, %v2335
        %v2401 = vunpack.c.l.b16 %v2241
        %v2402 = vunpack.c.l.b16 %v2242
        %v2403 = vunpack.c.l.b16 %v2243
        %v2404 = vunpack.c.l.b16 %v2244
        %v2405 = vunpack.c.l.b16 %v2245
        %v2406 = vunpack.c.l.b16 %v2246
        %v2407 = vunpack.c.l.b16 %v2247
        %v2408 = vunpack.c.l.b16 %v2248
        %v2409 = vunpack.c.l.b16 %v2249
        %v2410 = vunpack.c.l.b16 %v2250
        %v2411 = vunpack.c.l.b16 %v2251
        %v2412 = vunpack.c.l.b16 %v2252
        %v2413 = vunpack.c.l.b16 %v2253
        %v2414 = vunpack.c.l.b16 %v2254
        %v2415 = vunpack.c.l.b16 %v2255
        %v2416 = vunpack.c.l.b16 %v2256
        %v2417 = vunpack.c.l.b16 %v2257
        %v2418 = vunpack.c.l.b16 %v2258
        %v2419 = vunpack.c.l.b16 %v2259
        %v2420 = vunpack.c.l.b16 %v2260
        %v2421 = vunpack.c.l.b16 %v2261
        %v2422 = vunpack.c.l.b16 %v2262
        %v2423 = vunpack.c.l.b16 %v2263
        %v2424 = vunpack.c.l.b16 %v2264
        %v2425 = vunpack.c.l.b16 %v2265
        %v2426 = vunpack.c.l.b16 %v2266
        %v2427 = vunpack.c.l.b16 %v2267
        %v2428 = vunpack.c.l.b16 %v2268
        %v2429 = vunpack.c.l.b16 %v2269
        %v2430 = vunpack.c.l.b16 %v2270
        %v2431 = vunpack.c.l.b16 %v2271
        %v2432 = vunpack.c.l.b16 %v2272
        %v2433 = vpack.c.b16 %v2402, %v2401
        %v2434 = vpack.c.b16 %v2404, %v2403
        %v2435 = vpack.c.b16 %v2406, %v2405
        %v2436 = vpack.c.b16 %v2408, %v2407
        %v2437 = vpack.c.b16 %v2410, %v2409
        %v2438 = vpack.c.b16 %v2412, %v2411
        %v2439 = vpack.c.b16 %v2414, %v2413
        %v2440 = vpack.c.b16 %v2416, %v2415
        %v2441 = vpack.c.b16 %v2418, %v2417
        %v2442 = vpack.c.b16 %v2420, %v2419
        %v2443 = vpack.c.b16 %v2422, %v2421
        %v2444 = vpack.c.b16 %v2424, %v2423
        %v2445 = vpack.c.b16 %v2426, %v2425
        %v2446 = vpack.c.b16 %v2428, %v2427
        %v2447 = vpack.c.b16 %v2430, %v2429
        %v2448 = vpack.c.b16 %v2432, %v2431
        %v2465 = vld [vmem:[%s7] sm:$0xf]
        %v2466 = vld [vmem:[%s7 + $0x4] sm:$0xf]
        %v2467 = vld [vmem:[%s7 + $0x8] sm:$0xf]
        %v2468 = vld [vmem:[%s7 + $0xc] sm:$0xf]
        %v2469 = vld [vmem:[%s7 + $0x10] sm:$0xf]
        %v2470 = vld [vmem:[%s7 + $0x14] sm:$0xf]
        %v2471 = vld [vmem:[%s7 + $0x18] sm:$0xf]
        %v2472 = vld [vmem:[%s7 + $0x1c] sm:$0xf]
        %v2473 = vld [vmem:[%s7 + $0x20] sm:$0xf]
        %v2474 = vld [vmem:[%s7 + $0x24] sm:$0xf]
        %v2475 = vld [vmem:[%s7 + $0x28] sm:$0xf]
        %v2476 = vld [vmem:[%s7 + $0x2c] sm:$0xf]
        %v2477 = vld [vmem:[%s7 + $0x30] sm:$0xf]
        %v2478 = vld [vmem:[%s7 + $0x34] sm:$0xf]
        %v2479 = vld [vmem:[%s7 + $0x38] sm:$0xf]
        %v2480 = vld [vmem:[%s7 + $0x3c] sm:$0xf]
        %v2481 = vld [vmem:[%s7 + $0x40] sm:$0xf]
        %v2482 = vld [vmem:[%s7 + $0x44] sm:$0xf]
        %v2483 = vld [vmem:[%s7 + $0x48] sm:$0xf]
        %v2484 = vld [vmem:[%s7 + $0x4c] sm:$0xf]
        %v2485 = vld [vmem:[%s7 + $0x50] sm:$0xf]
        %v2486 = vld [vmem:[%s7 + $0x54] sm:$0xf]
        %v2487 = vld [vmem:[%s7 + $0x58] sm:$0xf]
        %v2488 = vld [vmem:[%s7 + $0x5c] sm:$0xf]
        %v2489 = vld [vmem:[%s7 + $0x60] sm:$0xf]
        %v2490 = vld [vmem:[%s7 + $0x64] sm:$0xf]
        %v2491 = vld [vmem:[%s7 + $0x68] sm:$0xf]
        %v2492 = vld [vmem:[%s7 + $0x6c] sm:$0xf]
        %v2493 = vld [vmem:[%s7 + $0x70] sm:$0xf]
        %v2494 = vld [vmem:[%s7 + $0x74] sm:$0xf]
        %v2495 = vld [vmem:[%s7 + $0x78] sm:$0xf]
        %v2496 = vld [vmem:[%s7 + $0x7c] sm:$0xf]
        %v2529 = vunpack.c.l.b16 %v2465
        %v2530 = vunpack.c.l.b16 %v2466
        %v2531 = vunpack.c.l.b16 %v2467
        %v2532 = vunpack.c.l.b16 %v2468
        %v2533 = vunpack.c.l.b16 %v2469
        %v2534 = vunpack.c.l.b16 %v2470
        %v2535 = vunpack.c.l.b16 %v2471
        %v2536 = vunpack.c.l.b16 %v2472
        %v2537 = vunpack.c.l.b16 %v2473
        %v2538 = vunpack.c.l.b16 %v2474
        %v2539 = vunpack.c.l.b16 %v2475
        %v2540 = vunpack.c.l.b16 %v2476
        %v2541 = vunpack.c.l.b16 %v2477
        %v2542 = vunpack.c.l.b16 %v2478
        %v2543 = vunpack.c.l.b16 %v2479
        %v2544 = vunpack.c.l.b16 %v2480
        %v2545 = vunpack.c.l.b16 %v2481
        %v2546 = vunpack.c.l.b16 %v2482
        %v2547 = vunpack.c.l.b16 %v2483
        %v2548 = vunpack.c.l.b16 %v2484
        %v2549 = vunpack.c.l.b16 %v2485
        %v2550 = vunpack.c.l.b16 %v2486
        %v2551 = vunpack.c.l.b16 %v2487
        %v2552 = vunpack.c.l.b16 %v2488
        %v2553 = vunpack.c.l.b16 %v2489
        %v2554 = vunpack.c.l.b16 %v2490
        %v2555 = vunpack.c.l.b16 %v2491
        %v2556 = vunpack.c.l.b16 %v2492
        %v2557 = vunpack.c.l.b16 %v2493
        %v2558 = vunpack.c.l.b16 %v2494
        %v2559 = vunpack.c.l.b16 %v2495
        %v2560 = vunpack.c.l.b16 %v2496
        %v2561 = vpack.c.b16 %v2530, %v2529
        %v2562 = vpack.c.b16 %v2532, %v2531
        %v2563 = vpack.c.b16 %v2534, %v2533
        %v2564 = vpack.c.b16 %v2536, %v2535
        %v2565 = vpack.c.b16 %v2538, %v2537
        %v2566 = vpack.c.b16 %v2540, %v2539
        %v2567 = vpack.c.b16 %v2542, %v2541
        %v2568 = vpack.c.b16 %v2544, %v2543
        %v2569 = vpack.c.b16 %v2546, %v2545
        %v2570 = vpack.c.b16 %v2548, %v2547
        %v2571 = vpack.c.b16 %v2550, %v2549
        %v2572 = vpack.c.b16 %v2552, %v2551
        %v2573 = vpack.c.b16 %v2554, %v2553
        %v2574 = vpack.c.b16 %v2556, %v2555
        %v2575 = vpack.c.b16 %v2558, %v2557
        %v2576 = vpack.c.b16 %v2560, %v2559
        %2593 = vmatpush.bf16.msra.mxu0 %v2568
        %2594 = vmatpush.bf16.msra.mxu0 %v2567
        %2595 = vmatpush.bf16.msra.mxu0 %v2566
        %2596 = vmatpush.bf16.msra.mxu0 %v2565
        %2597 = vmatpush.bf16.msra.mxu0 %v2564
        %2598 = vmatpush.bf16.msra.mxu0 %v2563
        %2599 = vmatpush.bf16.msra.mxu0 %v2562
        %2600 = vmatpush.bf16.msra.mxu0 %v2561
        %2601 = vmatmul.bf16.gmra.mxu0 %v2337
        %v2602 = vpop.f32.mrf.mxu0
        %v2603 = vadd.f32 0.0, %v2602
        %v2604 = vpop.f32.mrf.mxu0
        %v2605 = vadd.f32 0.0, %v2604
        %2606 = vmatmul.bf16.gmra.mxu0 %v2338
        %v2607 = vpop.f32.mrf.mxu0
        %v2608 = vadd.f32 0.0, %v2607
        %v2609 = vpop.f32.mrf.mxu0
        %v2610 = vadd.f32 0.0, %v2609
        %2611 = vmatmul.bf16.gmra.mxu0 %v2339
        %v2612 = vpop.f32.mrf.mxu0
        %v2613 = vadd.f32 0.0, %v2612
        %v2614 = vpop.f32.mrf.mxu0
        %v2615 = vadd.f32 0.0, %v2614
        %2616 = vmatmul.bf16.gmra.mxu0 %v2340
        %v2617 = vpop.f32.mrf.mxu0
        %v2618 = vadd.f32 0.0, %v2617
        %v2619 = vpop.f32.mrf.mxu0
        %v2620 = vadd.f32 0.0, %v2619
        %2621 = vmatmul.bf16.gmra.mxu0 %v2341
        %v2622 = vpop.f32.mrf.mxu0
        %v2623 = vadd.f32 0.0, %v2622
        %v2624 = vpop.f32.mrf.mxu0
        %v2625 = vadd.f32 0.0, %v2624
        %2626 = vmatmul.bf16.gmra.mxu0 %v2342
        %v2627 = vpop.f32.mrf.mxu0
        %v2628 = vadd.f32 0.0, %v2627
        %v2629 = vpop.f32.mrf.mxu0
        %v2630 = vadd.f32 0.0, %v2629
        %2631 = vmatmul.bf16.gmra.mxu0 %v2343
        %v2632 = vpop.f32.mrf.mxu0
        %v2633 = vadd.f32 0.0, %v2632
        %v2634 = vpop.f32.mrf.mxu0
        %v2635 = vadd.f32 0.0, %v2634
        %2636 = vmatmul.bf16.gmra.mxu0 %v2344
        %v2637 = vpop.f32.mrf.mxu0
        %v2638 = vadd.f32 0.0, %v2637
        %v2639 = vpop.f32.mrf.mxu0
        %v2640 = vadd.f32 0.0, %v2639
        %2641 = vmatmul.bf16.gmra.mxu0 %v2345
        %v2642 = vpop.f32.mrf.mxu0
        %v2643 = vadd.f32 0.0, %v2642
        %v2644 = vpop.f32.mrf.mxu0
        %v2645 = vadd.f32 0.0, %v2644
        %2646 = vmatmul.bf16.gmra.mxu0 %v2346
        %v2647 = vpop.f32.mrf.mxu0
        %v2648 = vadd.f32 0.0, %v2647
        %v2649 = vpop.f32.mrf.mxu0
        %v2650 = vadd.f32 0.0, %v2649
        %2651 = vmatmul.bf16.gmra.mxu0 %v2347
        %v2652 = vpop.f32.mrf.mxu0
        %v2653 = vadd.f32 0.0, %v2652
        %v2654 = vpop.f32.mrf.mxu0
        %v2655 = vadd.f32 0.0, %v2654
        %2656 = vmatmul.bf16.gmra.mxu0 %v2348
        %v2657 = vpop.f32.mrf.mxu0
        %v2658 = vadd.f32 0.0, %v2657
        %v2659 = vpop.f32.mrf.mxu0
        %v2660 = vadd.f32 0.0, %v2659
        %2661 = vmatmul.bf16.gmra.mxu0 %v2349
        %v2662 = vpop.f32.mrf.mxu0
        %v2663 = vadd.f32 0.0, %v2662
        %v2664 = vpop.f32.mrf.mxu0
        %v2665 = vadd.f32 0.0, %v2664
        %2666 = vmatmul.bf16.gmra.mxu0 %v2350
        %v2667 = vpop.f32.mrf.mxu0
        %v2668 = vadd.f32 0.0, %v2667
        %v2669 = vpop.f32.mrf.mxu0
        %v2670 = vadd.f32 0.0, %v2669
        %2671 = vmatmul.bf16.gmra.mxu0 %v2351
        %v2672 = vpop.f32.mrf.mxu0
        %v2673 = vadd.f32 0.0, %v2672
        %v2674 = vpop.f32.mrf.mxu0
        %v2675 = vadd.f32 0.0, %v2674
        %2676 = vmatmul.bf16.gmra.mxu0 %v2352
        %v2677 = vpop.f32.mrf.mxu0
        %v2678 = vadd.f32 0.0, %v2677
        %v2679 = vpop.f32.mrf.mxu0
        %v2680 = vadd.f32 0.0, %v2679
        %2681 = vdwg.mxu0
        %2682 = vmatpush.bf16.msra.mxu0 %v2576
        %2683 = vmatpush.bf16.msra.mxu0 %v2575
        %2684 = vmatpush.bf16.msra.mxu0 %v2574
        %2685 = vmatpush.bf16.msra.mxu0 %v2573
        %2686 = vmatpush.bf16.msra.mxu0 %v2572
        %2687 = vmatpush.bf16.msra.mxu0 %v2571
        %2688 = vmatpush.bf16.msra.mxu0 %v2570
        %2689 = vmatpush.bf16.msra.mxu0 %v2569
        %2690 = vmatmul.bf16.gmra.mxu0 %v2433
        %v2691 = vpop.f32.mrf.mxu0
        %v2692 = vadd.f32 %v2603, %v2691
        %v2693 = vpop.f32.mrf.mxu0
        %v2694 = vadd.f32 %v2605, %v2693
        %2695 = vmatmul.bf16.gmra.mxu0 %v2434
        %v2696 = vpop.f32.mrf.mxu0
        %v2697 = vadd.f32 %v2608, %v2696
        %v2698 = vpop.f32.mrf.mxu0
        %v2699 = vadd.f32 %v2610, %v2698
        %2700 = vmatmul.bf16.gmra.mxu0 %v2435
        %v2701 = vpop.f32.mrf.mxu0
        %v2702 = vadd.f32 %v2613, %v2701
        %v2703 = vpop.f32.mrf.mxu0
        %v2704 = vadd.f32 %v2615, %v2703
        %2705 = vmatmul.bf16.gmra.mxu0 %v2436
        %v2706 = vpop.f32.mrf.mxu0
        %v2707 = vadd.f32 %v2618, %v2706
        %v2708 = vpop.f32.mrf.mxu0
        %v2709 = vadd.f32 %v2620, %v2708
        %2710 = vmatmul.bf16.gmra.mxu0 %v2437
        %v2711 = vpop.f32.mrf.mxu0
        %v2712 = vadd.f32 %v2623, %v2711
        %v2713 = vpop.f32.mrf.mxu0
        %v2714 = vadd.f32 %v2625, %v2713
        %2715 = vmatmul.bf16.gmra.mxu0 %v2438
        %v2716 = vpop.f32.mrf.mxu0
        %v2717 = vadd.f32 %v2628, %v2716
        %v2718 = vpop.f32.mrf.mxu0
        %v2719 = vadd.f32 %v2630, %v2718
        %2720 = vmatmul.bf16.gmra.mxu0 %v2439
        %v2721 = vpop.f32.mrf.mxu0
        %v2722 = vadd.f32 %v2633, %v2721
        %v2723 = vpop.f32.mrf.mxu0
        %v2724 = vadd.f32 %v2635, %v2723
        %2725 = vmatmul.bf16.gmra.mxu0 %v2440
        %v2726 = vpop.f32.mrf.mxu0
        %v2727 = vadd.f32 %v2638, %v2726
        %v2728 = vpop.f32.mrf.mxu0
        %v2729 = vadd.f32 %v2640, %v2728
        %2730 = vmatmul.bf16.gmra.mxu0 %v2441
        %v2731 = vpop.f32.mrf.mxu0
        %v2732 = vadd.f32 %v2643, %v2731
        %v2733 = vpop.f32.mrf.mxu0
        %v2734 = vadd.f32 %v2645, %v2733
        %2735 = vmatmul.bf16.gmra.mxu0 %v2442
        %v2736 = vpop.f32.mrf.mxu0
        %v2737 = vadd.f32 %v2648, %v2736
        %v2738 = vpop.f32.mrf.mxu0
        %v2739 = vadd.f32 %v2650, %v2738
        %2740 = vmatmul.bf16.gmra.mxu0 %v2443
        %v2741 = vpop.f32.mrf.mxu0
        %v2742 = vadd.f32 %v2653, %v2741
        %v2743 = vpop.f32.mrf.mxu0
        %v2744 = vadd.f32 %v2655, %v2743
        %2745 = vmatmul.bf16.gmra.mxu0 %v2444
        %v2746 = vpop.f32.mrf.mxu0
        %v2747 = vadd.f32 %v2658, %v2746
        %v2748 = vpop.f32.mrf.mxu0
        %v2749 = vadd.f32 %v2660, %v2748
        %2750 = vmatmul.bf16.gmra.mxu0 %v2445
        %v2751 = vpop.f32.mrf.mxu0
        %v2752 = vadd.f32 %v2663, %v2751
        %v2753 = vpop.f32.mrf.mxu0
        %v2754 = vadd.f32 %v2665, %v2753
        %2755 = vmatmul.bf16.gmra.mxu0 %v2446
        %v2756 = vpop.f32.mrf.mxu0
        %v2757 = vadd.f32 %v2668, %v2756
        %v2758 = vpop.f32.mrf.mxu0
        %v2759 = vadd.f32 %v2670, %v2758
        %2760 = vmatmul.bf16.gmra.mxu0 %v2447
        %v2761 = vpop.f32.mrf.mxu0
        %v2762 = vadd.f32 %v2673, %v2761
        %v2763 = vpop.f32.mrf.mxu0
        %v2764 = vadd.f32 %v2675, %v2763
        %2765 = vmatmul.bf16.gmra.mxu0 %v2448
        %v2766 = vpop.f32.mrf.mxu0
        %v2767 = vadd.f32 %v2678, %v2766
        %v2768 = vpop.f32.mrf.mxu0
        %v2769 = vadd.f32 %v2680, %v2768
        %2770 = vdwg.mxu0
        %v2771 = vadd.f32 %v1162, %v2692
        %v2772 = vadd.f32 %v1164, %v2694
        %v2773 = vadd.f32 %v1167, %v2697
        %v2774 = vadd.f32 %v1169, %v2699
        %v2775 = vadd.f32 %v1172, %v2702
        %v2776 = vadd.f32 %v1174, %v2704
        %v2777 = vadd.f32 %v1177, %v2707
        %v2778 = vadd.f32 %v1179, %v2709
        %v2779 = vadd.f32 %v1182, %v2712
        %v2780 = vadd.f32 %v1184, %v2714
        %v2781 = vadd.f32 %v1187, %v2717
        %v2782 = vadd.f32 %v1189, %v2719
        %v2783 = vadd.f32 %v1192, %v2722
        %v2784 = vadd.f32 %v1194, %v2724
        %v2785 = vadd.f32 %v1197, %v2727
        %v2786 = vadd.f32 %v1199, %v2729
        %v2787 = vadd.f32 %v1202, %v2732
        %v2788 = vadd.f32 %v1204, %v2734
        %v2789 = vadd.f32 %v1207, %v2737
        %v2790 = vadd.f32 %v1209, %v2739
        %v2791 = vadd.f32 %v1212, %v2742
        %v2792 = vadd.f32 %v1214, %v2744
        %v2793 = vadd.f32 %v1217, %v2747
        %v2794 = vadd.f32 %v1219, %v2749
        %v2795 = vadd.f32 %v1222, %v2752
        %v2796 = vadd.f32 %v1224, %v2754
        %v2797 = vadd.f32 %v1227, %v2757
        %v2798 = vadd.f32 %v1229, %v2759
        %v2799 = vadd.f32 %v1232, %v2762
        %v2800 = vadd.f32 %v1234, %v2764
        %v2801 = vadd.f32 %v1237, %v2767
        %v2802 = vadd.f32 %v1239, %v2769
        %v2803 = vtanh.pop %v2771
        %v2804 = vtanh.pop %v2772
        %v2805 = vtanh.pop %v2773
        %v2806 = vtanh.pop %v2774
        %v2807 = vtanh.pop %v2775
        %v2808 = vtanh.pop %v2776
        %v2809 = vtanh.pop %v2777
        %v2810 = vtanh.pop %v2778
        %v2811 = vtanh.pop %v2779
        %v2812 = vtanh.pop %v2780
        %v2813 = vtanh.pop %v2781
        %v2814 = vtanh.pop %v2782
        %v2815 = vtanh.pop %v2783
        %v2816 = vtanh.pop %v2784
        %v2817 = vtanh.pop %v2785
        %v2818 = vtanh.pop %v2786
        %v2819 = vtanh.pop %v2787
        %v2820 = vtanh.pop %v2788
        %v2821 = vtanh.pop %v2789
        %v2822 = vtanh.pop %v2790
        %v2823 = vtanh.pop %v2791
        %v2824 = vtanh.pop %v2792
        %v2825 = vtanh.pop %v2793
        %v2826 = vtanh.pop %v2794
        %v2827 = vtanh.pop %v2795
        %v2828 = vtanh.pop %v2796
        %v2829 = vtanh.pop %v2797
        %v2830 = vtanh.pop %v2798
        %v2831 = vtanh.pop %v2799
        %v2832 = vtanh.pop %v2800
        %v2833 = vtanh.pop %v2801
        %v2834 = vtanh.pop %v2802
        %v2835 = vadd.f32 %v2112, %v2803
        %v2836 = vadd.f32 %v2113, %v2804
        %v2837 = vadd.f32 %v2114, %v2805
        %v2838 = vadd.f32 %v2115, %v2806
        %v2839 = vadd.f32 %v2116, %v2807
        %v2840 = vadd.f32 %v2117, %v2808
        %v2841 = vadd.f32 %v2118, %v2809
        %v2842 = vadd.f32 %v2119, %v2810
        %v2843 = vadd.f32 %v2120, %v2811
        %v2844 = vadd.f32 %v2121, %v2812
        %v2845 = vadd.f32 %v2122, %v2813
        %v2846 = vadd.f32 %v2123, %v2814
        %v2847 = vadd.f32 %v2124, %v2815
        %v2848 = vadd.f32 %v2125, %v2816
        %v2849 = vadd.f32 %v2126, %v2817
        %v2850 = vadd.f32 %v2127, %v2818
        %v2851 = vadd.f32 %v2128, %v2819
        %v2852 = vadd.f32 %v2129, %v2820
        %v2853 = vadd.f32 %v2130, %v2821
        %v2854 = vadd.f32 %v2131, %v2822
        %v2855 = vadd.f32 %v2132, %v2823
        %v2856 = vadd.f32 %v2133, %v2824
        %v2857 = vadd.f32 %v2134, %v2825
        %v2858 = vadd.f32 %v2135, %v2826
        %v2859 = vadd.f32 %v2136, %v2827
        %v2860 = vadd.f32 %v2137, %v2828
        %v2861 = vadd.f32 %v2138, %v2829
        %v2862 = vadd.f32 %v2139, %v2830
        %v2863 = vadd.f32 %v2140, %v2831
        %v2864 = vadd.f32 %v2141, %v2832
        %v2865 = vadd.f32 %v2142, %v2833
        %v2866 = vadd.f32 %v2143, %v2834
        %v2867 = vsub.f32 %v608, %v2112
        %v2868 = vsub.f32 %v609, %v2113
        %v2869 = vsub.f32 %v610, %v2114
        %v2870 = vsub.f32 %v611, %v2115
        %v2871 = vsub.f32 %v612, %v2116
        %v2872 = vsub.f32 %v613, %v2117
        %v2873 = vsub.f32 %v614, %v2118
        %v2874 = vsub.f32 %v615, %v2119
        %v2875 = vsub.f32 %v616, %v2120
        %v2876 = vsub.f32 %v617, %v2121
        %v2877 = vsub.f32 %v618, %v2122
        %v2878 = vsub.f32 %v619, %v2123
        %v2879 = vsub.f32 %v620, %v2124
        %v2880 = vsub.f32 %v621, %v2125
        %v2881 = vsub.f32 %v622, %v2126
        %v2882 = vsub.f32 %v623, %v2127
        %v2883 = vsub.f32 %v624, %v2128
        %v2884 = vsub.f32 %v625, %v2129
        %v2885 = vsub.f32 %v626, %v2130
        %v2886 = vsub.f32 %v627, %v2131
        %v2887 = vsub.f32 %v628, %v2132
        %v2888 = vsub.f32 %v629, %v2133
        %v2889 = vsub.f32 %v630, %v2134
        %v2890 = vsub.f32 %v631, %v2135
        %v2891 = vsub.f32 %v632, %v2136
        %v2892 = vsub.f32 %v633, %v2137
        %v2893 = vsub.f32 %v634, %v2138
        %v2894 = vsub.f32 %v635, %v2139
        %v2895 = vsub.f32 %v636, %v2140
        %v2896 = vsub.f32 %v637, %v2141
        %v2897 = vsub.f32 %v638, %v2142
        %v2898 = vsub.f32 %v639, %v2143
        %v2899 = vstv %s643
        %v2900 = vmul.f32 %v2899, %v2867
        %v2901 = vmul.f32 %v2899, %v2868
        %v2902 = vmul.f32 %v2899, %v2869
        %v2903 = vmul.f32 %v2899, %v2870
        %v2904 = vmul.f32 %v2899, %v2871
        %v2905 = vmul.f32 %v2899, %v2872
        %v2906 = vmul.f32 %v2899, %v2873
        %v2907 = vmul.f32 %v2899, %v2874
        %v2908 = vmul.f32 %v2899, %v2875
        %v2909 = vmul.f32 %v2899, %v2876
        %v2910 = vmul.f32 %v2899, %v2877
        %v2911 = vmul.f32 %v2899, %v2878
        %v2912 = vmul.f32 %v2899, %v2879
        %v2913 = vmul.f32 %v2899, %v2880
        %v2914 = vmul.f32 %v2899, %v2881
        %v2915 = vmul.f32 %v2899, %v2882
        %v2916 = vmul.f32 %v2899, %v2883
        %v2917 = vmul.f32 %v2899, %v2884
        %v2918 = vmul.f32 %v2899, %v2885
        %v2919 = vmul.f32 %v2899, %v2886
        %v2920 = vmul.f32 %v2899, %v2887
        %v2921 = vmul.f32 %v2899, %v2888
        %v2922 = vmul.f32 %v2899, %v2889
        %v2923 = vmul.f32 %v2899, %v2890
        %v2924 = vmul.f32 %v2899, %v2891
        %v2925 = vmul.f32 %v2899, %v2892
        %v2926 = vmul.f32 %v2899, %v2893
        %v2927 = vmul.f32 %v2899, %v2894
        %v2928 = vmul.f32 %v2899, %v2895
        %v2929 = vmul.f32 %v2899, %v2896
        %v2930 = vmul.f32 %v2899, %v2897
        %v2931 = vmul.f32 %v2899, %v2898
        %v2932 = vpack.c.bf16 %v2835, %v2835
        %v2933 = vpack.c.bf16 %v2836, %v2836
        %v2934 = vpack.c.bf16 %v2837, %v2837
        %v2935 = vpack.c.bf16 %v2838, %v2838
        %v2936 = vpack.c.bf16 %v2839, %v2839
        %v2937 = vpack.c.bf16 %v2840, %v2840
        %v2938 = vpack.c.bf16 %v2841, %v2841
        %v2939 = vpack.c.bf16 %v2842, %v2842
        %v2940 = vpack.c.bf16 %v2843, %v2843
        %v2941 = vpack.c.bf16 %v2844, %v2844
        %v2942 = vpack.c.bf16 %v2845, %v2845
        %v2943 = vpack.c.bf16 %v2846, %v2846
        %v2944 = vpack.c.bf16 %v2847, %v2847
        %v2945 = vpack.c.bf16 %v2848, %v2848
        %v2946 = vpack.c.bf16 %v2849, %v2849
        %v2947 = vpack.c.bf16 %v2850, %v2850
        %v2948 = vpack.c.bf16 %v2851, %v2851
        %v2949 = vpack.c.bf16 %v2852, %v2852
        %v2950 = vpack.c.bf16 %v2853, %v2853
        %v2951 = vpack.c.bf16 %v2854, %v2854
        %v2952 = vpack.c.bf16 %v2855, %v2855
        %v2953 = vpack.c.bf16 %v2856, %v2856
        %v2954 = vpack.c.bf16 %v2857, %v2857
        %v2955 = vpack.c.bf16 %v2858, %v2858
        %v2956 = vpack.c.bf16 %v2859, %v2859
        %v2957 = vpack.c.bf16 %v2860, %v2860
        %v2958 = vpack.c.bf16 %v2861, %v2861
        %v2959 = vpack.c.bf16 %v2862, %v2862
        %v2960 = vpack.c.bf16 %v2863, %v2863
        %v2961 = vpack.c.bf16 %v2864, %v2864
        %v2962 = vpack.c.bf16 %v2865, %v2865
        %v2963 = vpack.c.bf16 %v2866, %v2866
        %v2964 = vpack.c.bf16 %v2900, %v2900
        %v2965 = vpack.c.bf16 %v2901, %v2901
        %v2966 = vpack.c.bf16 %v2902, %v2902
        %v2967 = vpack.c.bf16 %v2903, %v2903
        %v2968 = vpack.c.bf16 %v2904, %v2904
        %v2969 = vpack.c.bf16 %v2905, %v2905
        %v2970 = vpack.c.bf16 %v2906, %v2906
        %v2971 = vpack.c.bf16 %v2907, %v2907
        %v2972 = vpack.c.bf16 %v2908, %v2908
        %v2973 = vpack.c.bf16 %v2909, %v2909
        %v2974 = vpack.c.bf16 %v2910, %v2910
        %v2975 = vpack.c.bf16 %v2911, %v2911
        %v2976 = vpack.c.bf16 %v2912, %v2912
        %v2977 = vpack.c.bf16 %v2913, %v2913
        %v2978 = vpack.c.bf16 %v2914, %v2914
        %v2979 = vpack.c.bf16 %v2915, %v2915
        %v2980 = vpack.c.bf16 %v2916, %v2916
        %v2981 = vpack.c.bf16 %v2917, %v2917
        %v2982 = vpack.c.bf16 %v2918, %v2918
        %v2983 = vpack.c.bf16 %v2919, %v2919
        %v2984 = vpack.c.bf16 %v2920, %v2920
        %v2985 = vpack.c.bf16 %v2921, %v2921
        %v2986 = vpack.c.bf16 %v2922, %v2922
        %v2987 = vpack.c.bf16 %v2923, %v2923
        %v2988 = vpack.c.bf16 %v2924, %v2924
        %v2989 = vpack.c.bf16 %v2925, %v2925
        %v2990 = vpack.c.bf16 %v2926, %v2926
        %v2991 = vpack.c.bf16 %v2927, %v2927
        %v2992 = vpack.c.bf16 %v2928, %v2928
        %v2993 = vpack.c.bf16 %v2929, %v2929
        %v2994 = vpack.c.bf16 %v2930, %v2930
        %v2995 = vpack.c.bf16 %v2931, %v2931
        %v3028 = vunpack.c.l.b16 %v2932
        %v3029 = vunpack.c.l.b16 %v2933
        %v3030 = vunpack.c.l.b16 %v2934
        %v3031 = vunpack.c.l.b16 %v2935
        %v3032 = vunpack.c.l.b16 %v2936
        %v3033 = vunpack.c.l.b16 %v2937
        %v3034 = vunpack.c.l.b16 %v2938
        %v3035 = vunpack.c.l.b16 %v2939
        %v3036 = vunpack.c.l.b16 %v2940
        %v3037 = vunpack.c.l.b16 %v2941
        %v3038 = vunpack.c.l.b16 %v2942
        %v3039 = vunpack.c.l.b16 %v2943
        %v3040 = vunpack.c.l.b16 %v2944
        %v3041 = vunpack.c.l.b16 %v2945
        %v3042 = vunpack.c.l.b16 %v2946
        %v3043 = vunpack.c.l.b16 %v2947
        %v3044 = vunpack.c.l.b16 %v2948
        %v3045 = vunpack.c.l.b16 %v2949
        %v3046 = vunpack.c.l.b16 %v2950
        %v3047 = vunpack.c.l.b16 %v2951
        %v3048 = vunpack.c.l.b16 %v2952
        %v3049 = vunpack.c.l.b16 %v2953
        %v3050 = vunpack.c.l.b16 %v2954
        %v3051 = vunpack.c.l.b16 %v2955
        %v3052 = vunpack.c.l.b16 %v2956
        %v3053 = vunpack.c.l.b16 %v2957
        %v3054 = vunpack.c.l.b16 %v2958
        %v3055 = vunpack.c.l.b16 %v2959
        %v3056 = vunpack.c.l.b16 %v2960
        %v3057 = vunpack.c.l.b16 %v2961
        %v3058 = vunpack.c.l.b16 %v2962
        %v3059 = vunpack.c.l.b16 %v2963
        %v3060 = vpack.c.b16 %v3029, %v3028
        %v3061 = vpack.c.b16 %v3031, %v3030
        %v3062 = vpack.c.b16 %v3033, %v3032
        %v3063 = vpack.c.b16 %v3035, %v3034
        %v3064 = vpack.c.b16 %v3037, %v3036
        %v3065 = vpack.c.b16 %v3039, %v3038
        %v3066 = vpack.c.b16 %v3041, %v3040
        %v3067 = vpack.c.b16 %v3043, %v3042
        %v3068 = vpack.c.b16 %v3045, %v3044
        %v3069 = vpack.c.b16 %v3047, %v3046
        %v3070 = vpack.c.b16 %v3049, %v3048
        %v3071 = vpack.c.b16 %v3051, %v3050
        %v3072 = vpack.c.b16 %v3053, %v3052
        %v3073 = vpack.c.b16 %v3055, %v3054
        %v3074 = vpack.c.b16 %v3057, %v3056
        %v3075 = vpack.c.b16 %v3059, %v3058
        %v3124 = vunpack.c.l.b16 %v2964
        %v3125 = vunpack.c.l.b16 %v2965
        %v3126 = vunpack.c.l.b16 %v2966
        %v3127 = vunpack.c.l.b16 %v2967
        %v3128 = vunpack.c.l.b16 %v2968
        %v3129 = vunpack.c.l.b16 %v2969
        %v3130 = vunpack.c.l.b16 %v2970
        %v3131 = vunpack.c.l.b16 %v2971
        %v3132 = vunpack.c.l.b16 %v2972
        %v3133 = vunpack.c.l.b16 %v2973
        %v3134 = vunpack.c.l.b16 %v2974
        %v3135 = vunpack.c.l.b16 %v2975
        %v3136 = vunpack.c.l.b16 %v2976
        %v3137 = vunpack.c.l.b16 %v2977
        %v3138 = vunpack.c.l.b16 %v2978
        %v3139 = vunpack.c.l.b16 %v2979
        %v3140 = vunpack.c.l.b16 %v2980
        %v3141 = vunpack.c.l.b16 %v2981
        %v3142 = vunpack.c.l.b16 %v2982
        %v3143 = vunpack.c.l.b16 %v2983
        %v3144 = vunpack.c.l.b16 %v2984
        %v3145 = vunpack.c.l.b16 %v2985
        %v3146 = vunpack.c.l.b16 %v2986
        %v3147 = vunpack.c.l.b16 %v2987
        %v3148 = vunpack.c.l.b16 %v2988
        %v3149 = vunpack.c.l.b16 %v2989
        %v3150 = vunpack.c.l.b16 %v2990
        %v3151 = vunpack.c.l.b16 %v2991
        %v3152 = vunpack.c.l.b16 %v2992
        %v3153 = vunpack.c.l.b16 %v2993
        %v3154 = vunpack.c.l.b16 %v2994
        %v3155 = vunpack.c.l.b16 %v2995
        %v3156 = vpack.c.b16 %v3125, %v3124
        %v3157 = vpack.c.b16 %v3127, %v3126
        %v3158 = vpack.c.b16 %v3129, %v3128
        %v3159 = vpack.c.b16 %v3131, %v3130
        %v3160 = vpack.c.b16 %v3133, %v3132
        %v3161 = vpack.c.b16 %v3135, %v3134
        %v3162 = vpack.c.b16 %v3137, %v3136
        %v3163 = vpack.c.b16 %v3139, %v3138
        %v3164 = vpack.c.b16 %v3141, %v3140
        %v3165 = vpack.c.b16 %v3143, %v3142
        %v3166 = vpack.c.b16 %v3145, %v3144
        %v3167 = vpack.c.b16 %v3147, %v3146
        %v3168 = vpack.c.b16 %v3149, %v3148
        %v3169 = vpack.c.b16 %v3151, %v3150
        %v3170 = vpack.c.b16 %v3153, %v3152
        %v3171 = vpack.c.b16 %v3155, %v3154
        %v3188 = vld [vmem:[%s9] sm:$0xf]
        %v3189 = vld [vmem:[%s9 + $0x4] sm:$0xf]
        %v3190 = vld [vmem:[%s9 + $0x8] sm:$0xf]
        %v3191 = vld [vmem:[%s9 + $0xc] sm:$0xf]
        %v3192 = vld [vmem:[%s9 + $0x10] sm:$0xf]
        %v3193 = vld [vmem:[%s9 + $0x14] sm:$0xf]
        %v3194 = vld [vmem:[%s9 + $0x18] sm:$0xf]
        %v3195 = vld [vmem:[%s9 + $0x1c] sm:$0xf]
        %v3196 = vld [vmem:[%s9 + $0x20] sm:$0xf]
        %v3197 = vld [vmem:[%s9 + $0x24] sm:$0xf]
        %v3198 = vld [vmem:[%s9 + $0x28] sm:$0xf]
        %v3199 = vld [vmem:[%s9 + $0x2c] sm:$0xf]
        %v3200 = vld [vmem:[%s9 + $0x30] sm:$0xf]
        %v3201 = vld [vmem:[%s9 + $0x34] sm:$0xf]
        %v3202 = vld [vmem:[%s9 + $0x38] sm:$0xf]
        %v3203 = vld [vmem:[%s9 + $0x3c] sm:$0xf]
        %v3204 = vld [vmem:[%s9 + $0x40] sm:$0xf]
        %v3205 = vld [vmem:[%s9 + $0x44] sm:$0xf]
        %v3206 = vld [vmem:[%s9 + $0x48] sm:$0xf]
        %v3207 = vld [vmem:[%s9 + $0x4c] sm:$0xf]
        %v3208 = vld [vmem:[%s9 + $0x50] sm:$0xf]
        %v3209 = vld [vmem:[%s9 + $0x54] sm:$0xf]
        %v3210 = vld [vmem:[%s9 + $0x58] sm:$0xf]
        %v3211 = vld [vmem:[%s9 + $0x5c] sm:$0xf]
        %v3212 = vld [vmem:[%s9 + $0x60] sm:$0xf]
        %v3213 = vld [vmem:[%s9 + $0x64] sm:$0xf]
        %v3214 = vld [vmem:[%s9 + $0x68] sm:$0xf]
        %v3215 = vld [vmem:[%s9 + $0x6c] sm:$0xf]
        %v3216 = vld [vmem:[%s9 + $0x70] sm:$0xf]
        %v3217 = vld [vmem:[%s9 + $0x74] sm:$0xf]
        %v3218 = vld [vmem:[%s9 + $0x78] sm:$0xf]
        %v3219 = vld [vmem:[%s9 + $0x7c] sm:$0xf]
        %v3252 = vunpack.c.l.b16 %v3188
        %v3253 = vunpack.c.l.b16 %v3189
        %v3254 = vunpack.c.l.b16 %v3190
        %v3255 = vunpack.c.l.b16 %v3191
        %v3256 = vunpack.c.l.b16 %v3192
        %v3257 = vunpack.c.l.b16 %v3193
        %v3258 = vunpack.c.l.b16 %v3194
        %v3259 = vunpack.c.l.b16 %v3195
        %v3260 = vunpack.c.l.b16 %v3196
        %v3261 = vunpack.c.l.b16 %v3197
        %v3262 = vunpack.c.l.b16 %v3198
        %v3263 = vunpack.c.l.b16 %v3199
        %v3264 = vunpack.c.l.b16 %v3200
        %v3265 = vunpack.c.l.b16 %v3201
        %v3266 = vunpack.c.l.b16 %v3202
        %v3267 = vunpack.c.l.b16 %v3203
        %v3268 = vunpack.c.l.b16 %v3204
        %v3269 = vunpack.c.l.b16 %v3205
        %v3270 = vunpack.c.l.b16 %v3206
        %v3271 = vunpack.c.l.b16 %v3207
        %v3272 = vunpack.c.l.b16 %v3208
        %v3273 = vunpack.c.l.b16 %v3209
        %v3274 = vunpack.c.l.b16 %v3210
        %v3275 = vunpack.c.l.b16 %v3211
        %v3276 = vunpack.c.l.b16 %v3212
        %v3277 = vunpack.c.l.b16 %v3213
        %v3278 = vunpack.c.l.b16 %v3214
        %v3279 = vunpack.c.l.b16 %v3215
        %v3280 = vunpack.c.l.b16 %v3216
        %v3281 = vunpack.c.l.b16 %v3217
        %v3282 = vunpack.c.l.b16 %v3218
        %v3283 = vunpack.c.l.b16 %v3219
        %v3284 = vpack.c.b16 %v3253, %v3252
        %v3285 = vpack.c.b16 %v3255, %v3254
        %v3286 = vpack.c.b16 %v3257, %v3256
        %v3287 = vpack.c.b16 %v3259, %v3258
        %v3288 = vpack.c.b16 %v3261, %v3260
        %v3289 = vpack.c.b16 %v3263, %v3262
        %v3290 = vpack.c.b16 %v3265, %v3264
        %v3291 = vpack.c.b16 %v3267, %v3266
        %v3292 = vpack.c.b16 %v3269, %v3268
        %v3293 = vpack.c.b16 %v3271, %v3270
        %v3294 = vpack.c.b16 %v3273, %v3272
        %v3295 = vpack.c.b16 %v3275, %v3274
        %v3296 = vpack.c.b16 %v3277, %v3276
        %v3297 = vpack.c.b16 %v3279, %v3278
        %v3298 = vpack.c.b16 %v3281, %v3280
        %v3299 = vpack.c.b16 %v3283, %v3282
        %3316 = vmatpush.bf16.msra.mxu0 %v3291
        %3317 = vmatpush.bf16.msra.mxu0 %v3290
        %3318 = vmatpush.bf16.msra.mxu0 %v3289
        %3319 = vmatpush.bf16.msra.mxu0 %v3288
        %3320 = vmatpush.bf16.msra.mxu0 %v3287
        %3321 = vmatpush.bf16.msra.mxu0 %v3286
        %3322 = vmatpush.bf16.msra.mxu0 %v3285
        %3323 = vmatpush.bf16.msra.mxu0 %v3284
        %3324 = vmatmul.bf16.gmra.mxu0 %v3060
        %v3325 = vpop.f32.mrf.mxu0
        %v3326 = vadd.f32 0.0, %v3325
        %v3327 = vpop.f32.mrf.mxu0
        %v3328 = vadd.f32 0.0, %v3327
        %3329 = vmatmul.bf16.gmra.mxu0 %v3061
        %v3330 = vpop.f32.mrf.mxu0
        %v3331 = vadd.f32 0.0, %v3330
        %v3332 = vpop.f32.mrf.mxu0
        %v3333 = vadd.f32 0.0, %v3332
        %3334 = vmatmul.bf16.gmra.mxu0 %v3062
        %v3335 = vpop.f32.mrf.mxu0
        %v3336 = vadd.f32 0.0, %v3335
        %v3337 = vpop.f32.mrf.mxu0
        %v3338 = vadd.f32 0.0, %v3337
        %3339 = vmatmul.bf16.gmra.mxu0 %v3063
        %v3340 = vpop.f32.mrf.mxu0
        %v3341 = vadd.f32 0.0, %v3340
        %v3342 = vpop.f32.mrf.mxu0
        %v3343 = vadd.f32 0.0, %v3342
        %3344 = vmatmul.bf16.gmra.mxu0 %v3064
        %v3345 = vpop.f32.mrf.mxu0
        %v3346 = vadd.f32 0.0, %v3345
        %v3347 = vpop.f32.mrf.mxu0
        %v3348 = vadd.f32 0.0, %v3347
        %3349 = vmatmul.bf16.gmra.mxu0 %v3065
        %v3350 = vpop.f32.mrf.mxu0
        %v3351 = vadd.f32 0.0, %v3350
        %v3352 = vpop.f32.mrf.mxu0
        %v3353 = vadd.f32 0.0, %v3352
        %3354 = vmatmul.bf16.gmra.mxu0 %v3066
        %v3355 = vpop.f32.mrf.mxu0
        %v3356 = vadd.f32 0.0, %v3355
        %v3357 = vpop.f32.mrf.mxu0
        %v3358 = vadd.f32 0.0, %v3357
        %3359 = vmatmul.bf16.gmra.mxu0 %v3067
        %v3360 = vpop.f32.mrf.mxu0
        %v3361 = vadd.f32 0.0, %v3360
        %v3362 = vpop.f32.mrf.mxu0
        %v3363 = vadd.f32 0.0, %v3362
        %3364 = vmatmul.bf16.gmra.mxu0 %v3068
        %v3365 = vpop.f32.mrf.mxu0
        %v3366 = vadd.f32 0.0, %v3365
        %v3367 = vpop.f32.mrf.mxu0
        %v3368 = vadd.f32 0.0, %v3367
        %3369 = vmatmul.bf16.gmra.mxu0 %v3069
        %v3370 = vpop.f32.mrf.mxu0
        %v3371 = vadd.f32 0.0, %v3370
        %v3372 = vpop.f32.mrf.mxu0
        %v3373 = vadd.f32 0.0, %v3372
        %3374 = vmatmul.bf16.gmra.mxu0 %v3070
        %v3375 = vpop.f32.mrf.mxu0
        %v3376 = vadd.f32 0.0, %v3375
        %v3377 = vpop.f32.mrf.mxu0
        %v3378 = vadd.f32 0.0, %v3377
        %3379 = vmatmul.bf16.gmra.mxu0 %v3071
        %v3380 = vpop.f32.mrf.mxu0
        %v3381 = vadd.f32 0.0, %v3380
        %v3382 = vpop.f32.mrf.mxu0
        %v3383 = vadd.f32 0.0, %v3382
        %3384 = vmatmul.bf16.gmra.mxu0 %v3072
        %v3385 = vpop.f32.mrf.mxu0
        %v3386 = vadd.f32 0.0, %v3385
        %v3387 = vpop.f32.mrf.mxu0
        %v3388 = vadd.f32 0.0, %v3387
        %3389 = vmatmul.bf16.gmra.mxu0 %v3073
        %v3390 = vpop.f32.mrf.mxu0
        %v3391 = vadd.f32 0.0, %v3390
        %v3392 = vpop.f32.mrf.mxu0
        %v3393 = vadd.f32 0.0, %v3392
        %3394 = vmatmul.bf16.gmra.mxu0 %v3074
        %v3395 = vpop.f32.mrf.mxu0
        %v3396 = vadd.f32 0.0, %v3395
        %v3397 = vpop.f32.mrf.mxu0
        %v3398 = vadd.f32 0.0, %v3397
        %3399 = vmatmul.bf16.gmra.mxu0 %v3075
        %v3400 = vpop.f32.mrf.mxu0
        %v3401 = vadd.f32 0.0, %v3400
        %v3402 = vpop.f32.mrf.mxu0
        %v3403 = vadd.f32 0.0, %v3402
        %3404 = vdwg.mxu0
        %3405 = vmatpush.bf16.msra.mxu0 %v3299
        %3406 = vmatpush.bf16.msra.mxu0 %v3298
        %3407 = vmatpush.bf16.msra.mxu0 %v3297
        %3408 = vmatpush.bf16.msra.mxu0 %v3296
        %3409 = vmatpush.bf16.msra.mxu0 %v3295
        %3410 = vmatpush.bf16.msra.mxu0 %v3294
        %3411 = vmatpush.bf16.msra.mxu0 %v3293
        %3412 = vmatpush.bf16.msra.mxu0 %v3292
        %3413 = vmatmul.bf16.gmra.mxu0 %v3156
        %v3414 = vpop.f32.mrf.mxu0
        %v3415 = vadd.f32 %v3326, %v3414
        %v3416 = vpop.f32.mrf.mxu0
        %v3417 = vadd.f32 %v3328, %v3416
        %3418 = vmatmul.bf16.gmra.mxu0 %v3157
        %v3419 = vpop.f32.mrf.mxu0
        %v3420 = vadd.f32 %v3331, %v3419
        %v3421 = vpop.f32.mrf.mxu0
        %v3422 = vadd.f32 %v3333, %v3421
        %3423 = vmatmul.bf16.gmra.mxu0 %v3158
        %v3424 = vpop.f32.mrf.mxu0
        %v3425 = vadd.f32 %v3336, %v3424
        %v3426 = vpop.f32.mrf.mxu0
        %v3427 = vadd.f32 %v3338, %v3426
        %3428 = vmatmul.bf16.gmra.mxu0 %v3159
        %v3429 = vpop.f32.mrf.mxu0
        %v3430 = vadd.f32 %v3341, %v3429
        %v3431 = vpop.f32.mrf.mxu0
        %v3432 = vadd.f32 %v3343, %v3431
        %3433 = vmatmul.bf16.gmra.mxu0 %v3160
        %v3434 = vpop.f32.mrf.mxu0
        %v3435 = vadd.f32 %v3346, %v3434
        %v3436 = vpop.f32.mrf.mxu0
        %v3437 = vadd.f32 %v3348, %v3436
        %3438 = vmatmul.bf16.gmra.mxu0 %v3161
        %v3439 = vpop.f32.mrf.mxu0
        %v3440 = vadd.f32 %v3351, %v3439
        %v3441 = vpop.f32.mrf.mxu0
        %v3442 = vadd.f32 %v3353, %v3441
        %3443 = vmatmul.bf16.gmra.mxu0 %v3162
        %v3444 = vpop.f32.mrf.mxu0
        %v3445 = vadd.f32 %v3356, %v3444
        %v3446 = vpop.f32.mrf.mxu0
        %v3447 = vadd.f32 %v3358, %v3446
        %3448 = vmatmul.bf16.gmra.mxu0 %v3163
        %v3449 = vpop.f32.mrf.mxu0
        %v3450 = vadd.f32 %v3361, %v3449
        %v3451 = vpop.f32.mrf.mxu0
        %v3452 = vadd.f32 %v3363, %v3451
        %3453 = vmatmul.bf16.gmra.mxu0 %v3164
        %v3454 = vpop.f32.mrf.mxu0
        %v3455 = vadd.f32 %v3366, %v3454
        %v3456 = vpop.f32.mrf.mxu0
        %v3457 = vadd.f32 %v3368, %v3456
        %3458 = vmatmul.bf16.gmra.mxu0 %v3165
        %v3459 = vpop.f32.mrf.mxu0
        %v3460 = vadd.f32 %v3371, %v3459
        %v3461 = vpop.f32.mrf.mxu0
        %v3462 = vadd.f32 %v3373, %v3461
        %3463 = vmatmul.bf16.gmra.mxu0 %v3166
        %v3464 = vpop.f32.mrf.mxu0
        %v3465 = vadd.f32 %v3376, %v3464
        %v3466 = vpop.f32.mrf.mxu0
        %v3467 = vadd.f32 %v3378, %v3466
        %3468 = vmatmul.bf16.gmra.mxu0 %v3167
        %v3469 = vpop.f32.mrf.mxu0
        %v3470 = vadd.f32 %v3381, %v3469
        %v3471 = vpop.f32.mrf.mxu0
        %v3472 = vadd.f32 %v3383, %v3471
        %3473 = vmatmul.bf16.gmra.mxu0 %v3168
        %v3474 = vpop.f32.mrf.mxu0
        %v3475 = vadd.f32 %v3386, %v3474
        %v3476 = vpop.f32.mrf.mxu0
        %v3477 = vadd.f32 %v3388, %v3476
        %3478 = vmatmul.bf16.gmra.mxu0 %v3169
        %v3479 = vpop.f32.mrf.mxu0
        %v3480 = vadd.f32 %v3391, %v3479
        %v3481 = vpop.f32.mrf.mxu0
        %v3482 = vadd.f32 %v3393, %v3481
        %3483 = vmatmul.bf16.gmra.mxu0 %v3170
        %v3484 = vpop.f32.mrf.mxu0
        %v3485 = vadd.f32 %v3396, %v3484
        %v3486 = vpop.f32.mrf.mxu0
        %v3487 = vadd.f32 %v3398, %v3486
        %3488 = vmatmul.bf16.gmra.mxu0 %v3171
        %v3489 = vpop.f32.mrf.mxu0
        %v3490 = vadd.f32 %v3401, %v3489
        %v3491 = vpop.f32.mrf.mxu0
        %v3492 = vadd.f32 %v3403, %v3491
        %3493 = vdwg.mxu0
        %v3494 = vadd.f32 %v1567, %v3415
        %v3495 = vadd.f32 %v1569, %v3417
        %v3496 = vadd.f32 %v1572, %v3420
        %v3497 = vadd.f32 %v1574, %v3422
        %v3498 = vadd.f32 %v1577, %v3425
        %v3499 = vadd.f32 %v1579, %v3427
        %v3500 = vadd.f32 %v1582, %v3430
        %v3501 = vadd.f32 %v1584, %v3432
        %v3502 = vadd.f32 %v1587, %v3435
        %v3503 = vadd.f32 %v1589, %v3437
        %v3504 = vadd.f32 %v1592, %v3440
        %v3505 = vadd.f32 %v1594, %v3442
        %v3506 = vadd.f32 %v1597, %v3445
        %v3507 = vadd.f32 %v1599, %v3447
        %v3508 = vadd.f32 %v1602, %v3450
        %v3509 = vadd.f32 %v1604, %v3452
        %v3510 = vadd.f32 %v1607, %v3455
        %v3511 = vadd.f32 %v1609, %v3457
        %v3512 = vadd.f32 %v1612, %v3460
        %v3513 = vadd.f32 %v1614, %v3462
        %v3514 = vadd.f32 %v1617, %v3465
        %v3515 = vadd.f32 %v1619, %v3467
        %v3516 = vadd.f32 %v1622, %v3470
        %v3517 = vadd.f32 %v1624, %v3472
        %v3518 = vadd.f32 %v1627, %v3475
        %v3519 = vadd.f32 %v1629, %v3477
        %v3520 = vadd.f32 %v1632, %v3480
        %v3521 = vadd.f32 %v1634, %v3482
        %v3522 = vadd.f32 %v1637, %v3485
        %v3523 = vadd.f32 %v1639, %v3487
        %v3524 = vadd.f32 %v1642, %v3490
        %v3525 = vadd.f32 %v1644, %v3492
        %v3526 = vtanh.pop %v3494
        %v3527 = vtanh.pop %v3495
        %v3528 = vtanh.pop %v3496
        %v3529 = vtanh.pop %v3497
        %v3530 = vtanh.pop %v3498
        %v3531 = vtanh.pop %v3499
        %v3532 = vtanh.pop %v3500
        %v3533 = vtanh.pop %v3501
        %v3534 = vtanh.pop %v3502
        %v3535 = vtanh.pop %v3503
        %v3536 = vtanh.pop %v3504
        %v3537 = vtanh.pop %v3505
        %v3538 = vtanh.pop %v3506
        %v3539 = vtanh.pop %v3507
        %v3540 = vtanh.pop %v3508
        %v3541 = vtanh.pop %v3509
        %v3542 = vtanh.pop %v3510
        %v3543 = vtanh.pop %v3511
        %v3544 = vtanh.pop %v3512
        %v3545 = vtanh.pop %v3513
        %v3546 = vtanh.pop %v3514
        %v3547 = vtanh.pop %v3515
        %v3548 = vtanh.pop %v3516
        %v3549 = vtanh.pop %v3517
        %v3550 = vtanh.pop %v3518
        %v3551 = vtanh.pop %v3519
        %v3552 = vtanh.pop %v3520
        %v3553 = vtanh.pop %v3521
        %v3554 = vtanh.pop %v3522
        %v3555 = vtanh.pop %v3523
        %v3556 = vtanh.pop %v3524
        %v3557 = vtanh.pop %v3525
        %v3558 = vadd.f32 %v2835, %v3526
        %v3559 = vadd.f32 %v2836, %v3527
        %v3560 = vadd.f32 %v2837, %v3528
        %v3561 = vadd.f32 %v2838, %v3529
        %v3562 = vadd.f32 %v2839, %v3530
        %v3563 = vadd.f32 %v2840, %v3531
        %v3564 = vadd.f32 %v2841, %v3532
        %v3565 = vadd.f32 %v2842, %v3533
        %v3566 = vadd.f32 %v2843, %v3534
        %v3567 = vadd.f32 %v2844, %v3535
        %v3568 = vadd.f32 %v2845, %v3536
        %v3569 = vadd.f32 %v2846, %v3537
        %v3570 = vadd.f32 %v2847, %v3538
        %v3571 = vadd.f32 %v2848, %v3539
        %v3572 = vadd.f32 %v2849, %v3540
        %v3573 = vadd.f32 %v2850, %v3541
        %v3574 = vadd.f32 %v2851, %v3542
        %v3575 = vadd.f32 %v2852, %v3543
        %v3576 = vadd.f32 %v2853, %v3544
        %v3577 = vadd.f32 %v2854, %v3545
        %v3578 = vadd.f32 %v2855, %v3546
        %v3579 = vadd.f32 %v2856, %v3547
        %v3580 = vadd.f32 %v2857, %v3548
        %v3581 = vadd.f32 %v2858, %v3549
        %v3582 = vadd.f32 %v2859, %v3550
        %v3583 = vadd.f32 %v2860, %v3551
        %v3584 = vadd.f32 %v2861, %v3552
        %v3585 = vadd.f32 %v2862, %v3553
        %v3586 = vadd.f32 %v2863, %v3554
        %v3587 = vadd.f32 %v2864, %v3555
        %v3588 = vadd.f32 %v2865, %v3556
        %v3589 = vadd.f32 %v2866, %v3557
        %v3590 = vsub.f32 %v576, %v2835
        %v3591 = vsub.f32 %v577, %v2836
        %v3592 = vsub.f32 %v578, %v2837
        %v3593 = vsub.f32 %v579, %v2838
        %v3594 = vsub.f32 %v580, %v2839
        %v3595 = vsub.f32 %v581, %v2840
        %v3596 = vsub.f32 %v582, %v2841
        %v3597 = vsub.f32 %v583, %v2842
        %v3598 = vsub.f32 %v584, %v2843
        %v3599 = vsub.f32 %v585, %v2844
        %v3600 = vsub.f32 %v586, %v2845
        %v3601 = vsub.f32 %v587, %v2846
        %v3602 = vsub.f32 %v588, %v2847
        %v3603 = vsub.f32 %v589, %v2848
        %v3604 = vsub.f32 %v590, %v2849
        %v3605 = vsub.f32 %v591, %v2850
        %v3606 = vsub.f32 %v592, %v2851
        %v3607 = vsub.f32 %v593, %v2852
        %v3608 = vsub.f32 %v594, %v2853
        %v3609 = vsub.f32 %v595, %v2854
        %v3610 = vsub.f32 %v596, %v2855
        %v3611 = vsub.f32 %v597, %v2856
        %v3612 = vsub.f32 %v598, %v2857
        %v3613 = vsub.f32 %v599, %v2858
        %v3614 = vsub.f32 %v600, %v2859
        %v3615 = vsub.f32 %v601, %v2860
        %v3616 = vsub.f32 %v602, %v2861
        %v3617 = vsub.f32 %v603, %v2862
        %v3618 = vsub.f32 %v604, %v2863
        %v3619 = vsub.f32 %v605, %v2864
        %v3620 = vsub.f32 %v606, %v2865
        %v3621 = vsub.f32 %v607, %v2866
        %v3622 = vmul.f32 %v2176, %v3590
        %v3623 = vmul.f32 %v2176, %v3591
        %v3624 = vmul.f32 %v2176, %v3592
        %v3625 = vmul.f32 %v2176, %v3593
        %v3626 = vmul.f32 %v2176, %v3594
        %v3627 = vmul.f32 %v2176, %v3595
        %v3628 = vmul.f32 %v2176, %v3596
        %v3629 = vmul.f32 %v2176, %v3597
        %v3630 = vmul.f32 %v2176, %v3598
        %v3631 = vmul.f32 %v2176, %v3599
        %v3632 = vmul.f32 %v2176, %v3600
        %v3633 = vmul.f32 %v2176, %v3601
        %v3634 = vmul.f32 %v2176, %v3602
        %v3635 = vmul.f32 %v2176, %v3603
        %v3636 = vmul.f32 %v2176, %v3604
        %v3637 = vmul.f32 %v2176, %v3605
        %v3638 = vmul.f32 %v2176, %v3606
        %v3639 = vmul.f32 %v2176, %v3607
        %v3640 = vmul.f32 %v2176, %v3608
        %v3641 = vmul.f32 %v2176, %v3609
        %v3642 = vmul.f32 %v2176, %v3610
        %v3643 = vmul.f32 %v2176, %v3611
        %v3644 = vmul.f32 %v2176, %v3612
        %v3645 = vmul.f32 %v2176, %v3613
        %v3646 = vmul.f32 %v2176, %v3614
        %v3647 = vmul.f32 %v2176, %v3615
        %v3648 = vmul.f32 %v2176, %v3616
        %v3649 = vmul.f32 %v2176, %v3617
        %v3650 = vmul.f32 %v2176, %v3618
        %v3651 = vmul.f32 %v2176, %v3619
        %v3652 = vmul.f32 %v2176, %v3620
        %v3653 = vmul.f32 %v2176, %v3621
        %v3654 = vadd.f32 %v2177, %v3622
        %v3655 = vadd.f32 %v2178, %v3623
        %v3656 = vadd.f32 %v2179, %v3624
        %v3657 = vadd.f32 %v2180, %v3625
        %v3658 = vadd.f32 %v2181, %v3626
        %v3659 = vadd.f32 %v2182, %v3627
        %v3660 = vadd.f32 %v2183, %v3628
        %v3661 = vadd.f32 %v2184, %v3629
        %v3662 = vadd.f32 %v2185, %v3630
        %v3663 = vadd.f32 %v2186, %v3631
        %v3664 = vadd.f32 %v2187, %v3632
        %v3665 = vadd.f32 %v2188, %v3633
        %v3666 = vadd.f32 %v2189, %v3634
        %v3667 = vadd.f32 %v2190, %v3635
        %v3668 = vadd.f32 %v2191, %v3636
        %v3669 = vadd.f32 %v2192, %v3637
        %v3670 = vadd.f32 %v2193, %v3638
        %v3671 = vadd.f32 %v2194, %v3639
        %v3672 = vadd.f32 %v2195, %v3640
        %v3673 = vadd.f32 %v2196, %v3641
        %v3674 = vadd.f32 %v2197, %v3642
        %v3675 = vadd.f32 %v2198, %v3643
        %v3676 = vadd.f32 %v2199, %v3644
        %v3677 = vadd.f32 %v2200, %v3645
        %v3678 = vadd.f32 %v2201, %v3646
        %v3679 = vadd.f32 %v2202, %v3647
        %v3680 = vadd.f32 %v2203, %v3648
        %v3681 = vadd.f32 %v2204, %v3649
        %v3682 = vadd.f32 %v2205, %v3650
        %v3683 = vadd.f32 %v2206, %v3651
        %v3684 = vadd.f32 %v2207, %v3652
        %v3685 = vadd.f32 %v2208, %v3653
        %v3686 = vpack.c.bf16 %v3558, %v3558
        %v3687 = vpack.c.bf16 %v3559, %v3559
        %v3688 = vpack.c.bf16 %v3560, %v3560
        %v3689 = vpack.c.bf16 %v3561, %v3561
        %v3690 = vpack.c.bf16 %v3562, %v3562
        %v3691 = vpack.c.bf16 %v3563, %v3563
        %v3692 = vpack.c.bf16 %v3564, %v3564
        %v3693 = vpack.c.bf16 %v3565, %v3565
        %v3694 = vpack.c.bf16 %v3566, %v3566
        %v3695 = vpack.c.bf16 %v3567, %v3567
        %v3696 = vpack.c.bf16 %v3568, %v3568
        %v3697 = vpack.c.bf16 %v3569, %v3569
        %v3698 = vpack.c.bf16 %v3570, %v3570
        %v3699 = vpack.c.bf16 %v3571, %v3571
        %v3700 = vpack.c.bf16 %v3572, %v3572
        %v3701 = vpack.c.bf16 %v3573, %v3573
        %v3702 = vpack.c.bf16 %v3574, %v3574
        %v3703 = vpack.c.bf16 %v3575, %v3575
        %v3704 = vpack.c.bf16 %v3576, %v3576
        %v3705 = vpack.c.bf16 %v3577, %v3577
        %v3706 = vpack.c.bf16 %v3578, %v3578
        %v3707 = vpack.c.bf16 %v3579, %v3579
        %v3708 = vpack.c.bf16 %v3580, %v3580
        %v3709 = vpack.c.bf16 %v3581, %v3581
        %v3710 = vpack.c.bf16 %v3582, %v3582
        %v3711 = vpack.c.bf16 %v3583, %v3583
        %v3712 = vpack.c.bf16 %v3584, %v3584
        %v3713 = vpack.c.bf16 %v3585, %v3585
        %v3714 = vpack.c.bf16 %v3586, %v3586
        %v3715 = vpack.c.bf16 %v3587, %v3587
        %v3716 = vpack.c.bf16 %v3588, %v3588
        %v3717 = vpack.c.bf16 %v3589, %v3589
        %v3718 = vpack.c.bf16 %v3654, %v3654
        %v3719 = vpack.c.bf16 %v3655, %v3655
        %v3720 = vpack.c.bf16 %v3656, %v3656
        %v3721 = vpack.c.bf16 %v3657, %v3657
        %v3722 = vpack.c.bf16 %v3658, %v3658
        %v3723 = vpack.c.bf16 %v3659, %v3659
        %v3724 = vpack.c.bf16 %v3660, %v3660
        %v3725 = vpack.c.bf16 %v3661, %v3661
        %v3726 = vpack.c.bf16 %v3662, %v3662
        %v3727 = vpack.c.bf16 %v3663, %v3663
        %v3728 = vpack.c.bf16 %v3664, %v3664
        %v3729 = vpack.c.bf16 %v3665, %v3665
        %v3730 = vpack.c.bf16 %v3666, %v3666
        %v3731 = vpack.c.bf16 %v3667, %v3667
        %v3732 = vpack.c.bf16 %v3668, %v3668
        %v3733 = vpack.c.bf16 %v3669, %v3669
        %v3734 = vpack.c.bf16 %v3670, %v3670
        %v3735 = vpack.c.bf16 %v3671, %v3671
        %v3736 = vpack.c.bf16 %v3672, %v3672
        %v3737 = vpack.c.bf16 %v3673, %v3673
        %v3738 = vpack.c.bf16 %v3674, %v3674
        %v3739 = vpack.c.bf16 %v3675, %v3675
        %v3740 = vpack.c.bf16 %v3676, %v3676
        %v3741 = vpack.c.bf16 %v3677, %v3677
        %v3742 = vpack.c.bf16 %v3678, %v3678
        %v3743 = vpack.c.bf16 %v3679, %v3679
        %v3744 = vpack.c.bf16 %v3680, %v3680
        %v3745 = vpack.c.bf16 %v3681, %v3681
        %v3746 = vpack.c.bf16 %v3682, %v3682
        %v3747 = vpack.c.bf16 %v3683, %v3683
        %v3748 = vpack.c.bf16 %v3684, %v3684
        %v3749 = vpack.c.bf16 %v3685, %v3685
        %v3782 = vunpack.c.l.b16 %v3686
        %v3783 = vunpack.c.l.b16 %v3687
        %v3784 = vunpack.c.l.b16 %v3688
        %v3785 = vunpack.c.l.b16 %v3689
        %v3786 = vunpack.c.l.b16 %v3690
        %v3787 = vunpack.c.l.b16 %v3691
        %v3788 = vunpack.c.l.b16 %v3692
        %v3789 = vunpack.c.l.b16 %v3693
        %v3790 = vunpack.c.l.b16 %v3694
        %v3791 = vunpack.c.l.b16 %v3695
        %v3792 = vunpack.c.l.b16 %v3696
        %v3793 = vunpack.c.l.b16 %v3697
        %v3794 = vunpack.c.l.b16 %v3698
        %v3795 = vunpack.c.l.b16 %v3699
        %v3796 = vunpack.c.l.b16 %v3700
        %v3797 = vunpack.c.l.b16 %v3701
        %v3798 = vunpack.c.l.b16 %v3702
        %v3799 = vunpack.c.l.b16 %v3703
        %v3800 = vunpack.c.l.b16 %v3704
        %v3801 = vunpack.c.l.b16 %v3705
        %v3802 = vunpack.c.l.b16 %v3706
        %v3803 = vunpack.c.l.b16 %v3707
        %v3804 = vunpack.c.l.b16 %v3708
        %v3805 = vunpack.c.l.b16 %v3709
        %v3806 = vunpack.c.l.b16 %v3710
        %v3807 = vunpack.c.l.b16 %v3711
        %v3808 = vunpack.c.l.b16 %v3712
        %v3809 = vunpack.c.l.b16 %v3713
        %v3810 = vunpack.c.l.b16 %v3714
        %v3811 = vunpack.c.l.b16 %v3715
        %v3812 = vunpack.c.l.b16 %v3716
        %v3813 = vunpack.c.l.b16 %v3717
        %v3814 = vpack.c.b16 %v3783, %v3782
        %v3815 = vpack.c.b16 %v3785, %v3784
        %v3816 = vpack.c.b16 %v3787, %v3786
        %v3817 = vpack.c.b16 %v3789, %v3788
        %v3818 = vpack.c.b16 %v3791, %v3790
        %v3819 = vpack.c.b16 %v3793, %v3792
        %v3820 = vpack.c.b16 %v3795, %v3794
        %v3821 = vpack.c.b16 %v3797, %v3796
        %v3822 = vpack.c.b16 %v3799, %v3798
        %v3823 = vpack.c.b16 %v3801, %v3800
        %v3824 = vpack.c.b16 %v3803, %v3802
        %v3825 = vpack.c.b16 %v3805, %v3804
        %v3826 = vpack.c.b16 %v3807, %v3806
        %v3827 = vpack.c.b16 %v3809, %v3808
        %v3828 = vpack.c.b16 %v3811, %v3810
        %v3829 = vpack.c.b16 %v3813, %v3812
        %v3878 = vunpack.c.l.b16 %v3718
        %v3879 = vunpack.c.l.b16 %v3719
        %v3880 = vunpack.c.l.b16 %v3720
        %v3881 = vunpack.c.l.b16 %v3721
        %v3882 = vunpack.c.l.b16 %v3722
        %v3883 = vunpack.c.l.b16 %v3723
        %v3884 = vunpack.c.l.b16 %v3724
        %v3885 = vunpack.c.l.b16 %v3725
        %v3886 = vunpack.c.l.b16 %v3726
        %v3887 = vunpack.c.l.b16 %v3727
        %v3888 = vunpack.c.l.b16 %v3728
        %v3889 = vunpack.c.l.b16 %v3729
        %v3890 = vunpack.c.l.b16 %v3730
        %v3891 = vunpack.c.l.b16 %v3731
        %v3892 = vunpack.c.l.b16 %v3732
        %v3893 = vunpack.c.l.b16 %v3733
        %v3894 = vunpack.c.l.b16 %v3734
        %v3895 = vunpack.c.l.b16 %v3735
        %v3896 = vunpack.c.l.b16 %v3736
        %v3897 = vunpack.c.l.b16 %v3737
        %v3898 = vunpack.c.l.b16 %v3738
        %v3899 = vunpack.c.l.b16 %v3739
        %v3900 = vunpack.c.l.b16 %v3740
        %v3901 = vunpack.c.l.b16 %v3741
        %v3902 = vunpack.c.l.b16 %v3742
        %v3903 = vunpack.c.l.b16 %v3743
        %v3904 = vunpack.c.l.b16 %v3744
        %v3905 = vunpack.c.l.b16 %v3745
        %v3906 = vunpack.c.l.b16 %v3746
        %v3907 = vunpack.c.l.b16 %v3747
        %v3908 = vunpack.c.l.b16 %v3748
        %v3909 = vunpack.c.l.b16 %v3749
        %v3910 = vpack.c.b16 %v3879, %v3878
        %v3911 = vpack.c.b16 %v3881, %v3880
        %v3912 = vpack.c.b16 %v3883, %v3882
        %v3913 = vpack.c.b16 %v3885, %v3884
        %v3914 = vpack.c.b16 %v3887, %v3886
        %v3915 = vpack.c.b16 %v3889, %v3888
        %v3916 = vpack.c.b16 %v3891, %v3890
        %v3917 = vpack.c.b16 %v3893, %v3892
        %v3918 = vpack.c.b16 %v3895, %v3894
        %v3919 = vpack.c.b16 %v3897, %v3896
        %v3920 = vpack.c.b16 %v3899, %v3898
        %v3921 = vpack.c.b16 %v3901, %v3900
        %v3922 = vpack.c.b16 %v3903, %v3902
        %v3923 = vpack.c.b16 %v3905, %v3904
        %v3924 = vpack.c.b16 %v3907, %v3906
        %v3925 = vpack.c.b16 %v3909, %v3908
        %3942 = vmatpush.bf16.msra.mxu0 %v2568
        %3943 = vmatpush.bf16.msra.mxu0 %v2567
        %3944 = vmatpush.bf16.msra.mxu0 %v2566
        %3945 = vmatpush.bf16.msra.mxu0 %v2565
        %3946 = vmatpush.bf16.msra.mxu0 %v2564
        %3947 = vmatpush.bf16.msra.mxu0 %v2563
        %3948 = vmatpush.bf16.msra.mxu0 %v2562
        %3949 = vmatpush.bf16.msra.mxu0 %v2561
        %3950 = vmatmul.bf16.gmra.mxu0 %v3814
        %v3951 = vpop.f32.mrf.mxu0
        %v3952 = vadd.f32 0.0, %v3951
        %v3953 = vpop.f32.mrf.mxu0
        %v3954 = vadd.f32 0.0, %v3953
        %3955 = vmatmul.bf16.gmra.mxu0 %v3815
        %v3956 = vpop.f32.mrf.mxu0
        %v3957 = vadd.f32 0.0, %v3956
        %v3958 = vpop.f32.mrf.mxu0
        %v3959 = vadd.f32 0.0, %v3958
        %3960 = vmatmul.bf16.gmra.mxu0 %v3816
        %v3961 = vpop.f32.mrf.mxu0
        %v3962 = vadd.f32 0.0, %v3961
        %v3963 = vpop.f32.mrf.mxu0
        %v3964 = vadd.f32 0.0, %v3963
        %3965 = vmatmul.bf16.gmra.mxu0 %v3817
        %v3966 = vpop.f32.mrf.mxu0
        %v3967 = vadd.f32 0.0, %v3966
        %v3968 = vpop.f32.mrf.mxu0
        %v3969 = vadd.f32 0.0, %v3968
        %3970 = vmatmul.bf16.gmra.mxu0 %v3818
        %v3971 = vpop.f32.mrf.mxu0
        %v3972 = vadd.f32 0.0, %v3971
        %v3973 = vpop.f32.mrf.mxu0
        %v3974 = vadd.f32 0.0, %v3973
        %3975 = vmatmul.bf16.gmra.mxu0 %v3819
        %v3976 = vpop.f32.mrf.mxu0
        %v3977 = vadd.f32 0.0, %v3976
        %v3978 = vpop.f32.mrf.mxu0
        %v3979 = vadd.f32 0.0, %v3978
        %3980 = vmatmul.bf16.gmra.mxu0 %v3820
        %v3981 = vpop.f32.mrf.mxu0
        %v3982 = vadd.f32 0.0, %v3981
        %v3983 = vpop.f32.mrf.mxu0
        %v3984 = vadd.f32 0.0, %v3983
        %3985 = vmatmul.bf16.gmra.mxu0 %v3821
        %v3986 = vpop.f32.mrf.mxu0
        %v3987 = vadd.f32 0.0, %v3986
        %v3988 = vpop.f32.mrf.mxu0
        %v3989 = vadd.f32 0.0, %v3988
        %3990 = vmatmul.bf16.gmra.mxu0 %v3822
        %v3991 = vpop.f32.mrf.mxu0
        %v3992 = vadd.f32 0.0, %v3991
        %v3993 = vpop.f32.mrf.mxu0
        %v3994 = vadd.f32 0.0, %v3993
        %3995 = vmatmul.bf16.gmra.mxu0 %v3823
        %v3996 = vpop.f32.mrf.mxu0
        %v3997 = vadd.f32 0.0, %v3996
        %v3998 = vpop.f32.mrf.mxu0
        %v3999 = vadd.f32 0.0, %v3998
        %4000 = vmatmul.bf16.gmra.mxu0 %v3824
        %v4001 = vpop.f32.mrf.mxu0
        %v4002 = vadd.f32 0.0, %v4001
        %v4003 = vpop.f32.mrf.mxu0
        %v4004 = vadd.f32 0.0, %v4003
        %4005 = vmatmul.bf16.gmra.mxu0 %v3825
        %v4006 = vpop.f32.mrf.mxu0
        %v4007 = vadd.f32 0.0, %v4006
        %v4008 = vpop.f32.mrf.mxu0
        %v4009 = vadd.f32 0.0, %v4008
        %4010 = vmatmul.bf16.gmra.mxu0 %v3826
        %v4011 = vpop.f32.mrf.mxu0
        %v4012 = vadd.f32 0.0, %v4011
        %v4013 = vpop.f32.mrf.mxu0
        %v4014 = vadd.f32 0.0, %v4013
        %4015 = vmatmul.bf16.gmra.mxu0 %v3827
        %v4016 = vpop.f32.mrf.mxu0
        %v4017 = vadd.f32 0.0, %v4016
        %v4018 = vpop.f32.mrf.mxu0
        %v4019 = vadd.f32 0.0, %v4018
        %4020 = vmatmul.bf16.gmra.mxu0 %v3828
        %v4021 = vpop.f32.mrf.mxu0
        %v4022 = vadd.f32 0.0, %v4021
        %v4023 = vpop.f32.mrf.mxu0
        %v4024 = vadd.f32 0.0, %v4023
        %4025 = vmatmul.bf16.gmra.mxu0 %v3829
        %v4026 = vpop.f32.mrf.mxu0
        %v4027 = vadd.f32 0.0, %v4026
        %v4028 = vpop.f32.mrf.mxu0
        %v4029 = vadd.f32 0.0, %v4028
        %4030 = vdwg.mxu0
        %4031 = vmatpush.bf16.msra.mxu0 %v2576
        %4032 = vmatpush.bf16.msra.mxu0 %v2575
        %4033 = vmatpush.bf16.msra.mxu0 %v2574
        %4034 = vmatpush.bf16.msra.mxu0 %v2573
        %4035 = vmatpush.bf16.msra.mxu0 %v2572
        %4036 = vmatpush.bf16.msra.mxu0 %v2571
        %4037 = vmatpush.bf16.msra.mxu0 %v2570
        %4038 = vmatpush.bf16.msra.mxu0 %v2569
        %4039 = vmatmul.bf16.gmra.mxu0 %v3910
        %v4040 = vpop.f32.mrf.mxu0
        %v4041 = vadd.f32 %v3952, %v4040
        %v4042 = vpop.f32.mrf.mxu0
        %v4043 = vadd.f32 %v3954, %v4042
        %4044 = vmatmul.bf16.gmra.mxu0 %v3911
        %v4045 = vpop.f32.mrf.mxu0
        %v4046 = vadd.f32 %v3957, %v4045
        %v4047 = vpop.f32.mrf.mxu0
        %v4048 = vadd.f32 %v3959, %v4047
        %4049 = vmatmul.bf16.gmra.mxu0 %v3912
        %v4050 = vpop.f32.mrf.mxu0
        %v4051 = vadd.f32 %v3962, %v4050
        %v4052 = vpop.f32.mrf.mxu0
        %v4053 = vadd.f32 %v3964, %v4052
        %4054 = vmatmul.bf16.gmra.mxu0 %v3913
        %v4055 = vpop.f32.mrf.mxu0
        %v4056 = vadd.f32 %v3967, %v4055
        %v4057 = vpop.f32.mrf.mxu0
        %v4058 = vadd.f32 %v3969, %v4057
        %4059 = vmatmul.bf16.gmra.mxu0 %v3914
        %v4060 = vpop.f32.mrf.mxu0
        %v4061 = vadd.f32 %v3972, %v4060
        %v4062 = vpop.f32.mrf.mxu0
        %v4063 = vadd.f32 %v3974, %v4062
        %4064 = vmatmul.bf16.gmra.mxu0 %v3915
        %v4065 = vpop.f32.mrf.mxu0
        %v4066 = vadd.f32 %v3977, %v4065
        %v4067 = vpop.f32.mrf.mxu0
        %v4068 = vadd.f32 %v3979, %v4067
        %4069 = vmatmul.bf16.gmra.mxu0 %v3916
        %v4070 = vpop.f32.mrf.mxu0
        %v4071 = vadd.f32 %v3982, %v4070
        %v4072 = vpop.f32.mrf.mxu0
        %v4073 = vadd.f32 %v3984, %v4072
        %4074 = vmatmul.bf16.gmra.mxu0 %v3917
        %v4075 = vpop.f32.mrf.mxu0
        %v4076 = vadd.f32 %v3987, %v4075
        %v4077 = vpop.f32.mrf.mxu0
        %v4078 = vadd.f32 %v3989, %v4077
        %4079 = vmatmul.bf16.gmra.mxu0 %v3918
        %v4080 = vpop.f32.mrf.mxu0
        %v4081 = vadd.f32 %v3992, %v4080
        %v4082 = vpop.f32.mrf.mxu0
        %v4083 = vadd.f32 %v3994, %v4082
        %4084 = vmatmul.bf16.gmra.mxu0 %v3919
        %v4085 = vpop.f32.mrf.mxu0
        %v4086 = vadd.f32 %v3997, %v4085
        %v4087 = vpop.f32.mrf.mxu0
        %v4088 = vadd.f32 %v3999, %v4087
        %4089 = vmatmul.bf16.gmra.mxu0 %v3920
        %v4090 = vpop.f32.mrf.mxu0
        %v4091 = vadd.f32 %v4002, %v4090
        %v4092 = vpop.f32.mrf.mxu0
        %v4093 = vadd.f32 %v4004, %v4092
        %4094 = vmatmul.bf16.gmra.mxu0 %v3921
        %v4095 = vpop.f32.mrf.mxu0
        %v4096 = vadd.f32 %v4007, %v4095
        %v4097 = vpop.f32.mrf.mxu0
        %v4098 = vadd.f32 %v4009, %v4097
        %4099 = vmatmul.bf16.gmra.mxu0 %v3922
        %v4100 = vpop.f32.mrf.mxu0
        %v4101 = vadd.f32 %v4012, %v4100
        %v4102 = vpop.f32.mrf.mxu0
        %v4103 = vadd.f32 %v4014, %v4102
        %4104 = vmatmul.bf16.gmra.mxu0 %v3923
        %v4105 = vpop.f32.mrf.mxu0
        %v4106 = vadd.f32 %v4017, %v4105
        %v4107 = vpop.f32.mrf.mxu0
        %v4108 = vadd.f32 %v4019, %v4107
        %4109 = vmatmul.bf16.gmra.mxu0 %v3924
        %v4110 = vpop.f32.mrf.mxu0
        %v4111 = vadd.f32 %v4022, %v4110
        %v4112 = vpop.f32.mrf.mxu0
        %v4113 = vadd.f32 %v4024, %v4112
        %4114 = vmatmul.bf16.gmra.mxu0 %v3925
        %v4115 = vpop.f32.mrf.mxu0
        %v4116 = vadd.f32 %v4027, %v4115
        %v4117 = vpop.f32.mrf.mxu0
        %v4118 = vadd.f32 %v4029, %v4117
        %4119 = vdwg.mxu0
        %v4120 = vadd.f32 %v1162, %v4041
        %v4121 = vadd.f32 %v1164, %v4043
        %v4122 = vadd.f32 %v1167, %v4046
        %v4123 = vadd.f32 %v1169, %v4048
        %v4124 = vadd.f32 %v1172, %v4051
        %v4125 = vadd.f32 %v1174, %v4053
        %v4126 = vadd.f32 %v1177, %v4056
        %v4127 = vadd.f32 %v1179, %v4058
        %v4128 = vadd.f32 %v1182, %v4061
        %v4129 = vadd.f32 %v1184, %v4063
        %v4130 = vadd.f32 %v1187, %v4066
        %v4131 = vadd.f32 %v1189, %v4068
        %v4132 = vadd.f32 %v1192, %v4071
        %v4133 = vadd.f32 %v1194, %v4073
        %v4134 = vadd.f32 %v1197, %v4076
        %v4135 = vadd.f32 %v1199, %v4078
        %v4136 = vadd.f32 %v1202, %v4081
        %v4137 = vadd.f32 %v1204, %v4083
        %v4138 = vadd.f32 %v1207, %v4086
        %v4139 = vadd.f32 %v1209, %v4088
        %v4140 = vadd.f32 %v1212, %v4091
        %v4141 = vadd.f32 %v1214, %v4093
        %v4142 = vadd.f32 %v1217, %v4096
        %v4143 = vadd.f32 %v1219, %v4098
        %v4144 = vadd.f32 %v1222, %v4101
        %v4145 = vadd.f32 %v1224, %v4103
        %v4146 = vadd.f32 %v1227, %v4106
        %v4147 = vadd.f32 %v1229, %v4108
        %v4148 = vadd.f32 %v1232, %v4111
        %v4149 = vadd.f32 %v1234, %v4113
        %v4150 = vadd.f32 %v1237, %v4116
        %v4151 = vadd.f32 %v1239, %v4118
        %v4152 = vtanh.pop %v4120
        %v4153 = vtanh.pop %v4121
        %v4154 = vtanh.pop %v4122
        %v4155 = vtanh.pop %v4123
        %v4156 = vtanh.pop %v4124
        %v4157 = vtanh.pop %v4125
        %v4158 = vtanh.pop %v4126
        %v4159 = vtanh.pop %v4127
        %v4160 = vtanh.pop %v4128
        %v4161 = vtanh.pop %v4129
        %v4162 = vtanh.pop %v4130
        %v4163 = vtanh.pop %v4131
        %v4164 = vtanh.pop %v4132
        %v4165 = vtanh.pop %v4133
        %v4166 = vtanh.pop %v4134
        %v4167 = vtanh.pop %v4135
        %v4168 = vtanh.pop %v4136
        %v4169 = vtanh.pop %v4137
        %v4170 = vtanh.pop %v4138
        %v4171 = vtanh.pop %v4139
        %v4172 = vtanh.pop %v4140
        %v4173 = vtanh.pop %v4141
        %v4174 = vtanh.pop %v4142
        %v4175 = vtanh.pop %v4143
        %v4176 = vtanh.pop %v4144
        %v4177 = vtanh.pop %v4145
        %v4178 = vtanh.pop %v4146
        %v4179 = vtanh.pop %v4147
        %v4180 = vtanh.pop %v4148
        %v4181 = vtanh.pop %v4149
        %v4182 = vtanh.pop %v4150
        %v4183 = vtanh.pop %v4151
        %v4184 = vadd.f32 %v3558, %v4152
        %v4185 = vadd.f32 %v3559, %v4153
        %v4186 = vadd.f32 %v3560, %v4154
        %v4187 = vadd.f32 %v3561, %v4155
        %v4188 = vadd.f32 %v3562, %v4156
        %v4189 = vadd.f32 %v3563, %v4157
        %v4190 = vadd.f32 %v3564, %v4158
        %v4191 = vadd.f32 %v3565, %v4159
        %v4192 = vadd.f32 %v3566, %v4160
        %v4193 = vadd.f32 %v3567, %v4161
        %v4194 = vadd.f32 %v3568, %v4162
        %v4195 = vadd.f32 %v3569, %v4163
        %v4196 = vadd.f32 %v3570, %v4164
        %v4197 = vadd.f32 %v3571, %v4165
        %v4198 = vadd.f32 %v3572, %v4166
        %v4199 = vadd.f32 %v3573, %v4167
        %v4200 = vadd.f32 %v3574, %v4168
        %v4201 = vadd.f32 %v3575, %v4169
        %v4202 = vadd.f32 %v3576, %v4170
        %v4203 = vadd.f32 %v3577, %v4171
        %v4204 = vadd.f32 %v3578, %v4172
        %v4205 = vadd.f32 %v3579, %v4173
        %v4206 = vadd.f32 %v3580, %v4174
        %v4207 = vadd.f32 %v3581, %v4175
        %v4208 = vadd.f32 %v3582, %v4176
        %v4209 = vadd.f32 %v3583, %v4177
        %v4210 = vadd.f32 %v3584, %v4178
        %v4211 = vadd.f32 %v3585, %v4179
        %v4212 = vadd.f32 %v3586, %v4180
        %v4213 = vadd.f32 %v3587, %v4181
        %v4214 = vadd.f32 %v3588, %v4182
        %v4215 = vadd.f32 %v3589, %v4183
        %v4216 = vsub.f32 %v608, %v3558
        %v4217 = vsub.f32 %v609, %v3559
        %v4218 = vsub.f32 %v610, %v3560
        %v4219 = vsub.f32 %v611, %v3561
        %v4220 = vsub.f32 %v612, %v3562
        %v4221 = vsub.f32 %v613, %v3563
        %v4222 = vsub.f32 %v614, %v3564
        %v4223 = vsub.f32 %v615, %v3565
        %v4224 = vsub.f32 %v616, %v3566
        %v4225 = vsub.f32 %v617, %v3567
        %v4226 = vsub.f32 %v618, %v3568
        %v4227 = vsub.f32 %v619, %v3569
        %v4228 = vsub.f32 %v620, %v3570
        %v4229 = vsub.f32 %v621, %v3571
        %v4230 = vsub.f32 %v622, %v3572
        %v4231 = vsub.f32 %v623, %v3573
        %v4232 = vsub.f32 %v624, %v3574
        %v4233 = vsub.f32 %v625, %v3575
        %v4234 = vsub.f32 %v626, %v3576
        %v4235 = vsub.f32 %v627, %v3577
        %v4236 = vsub.f32 %v628, %v3578
        %v4237 = vsub.f32 %v629, %v3579
        %v4238 = vsub.f32 %v630, %v3580
        %v4239 = vsub.f32 %v631, %v3581
        %v4240 = vsub.f32 %v632, %v3582
        %v4241 = vsub.f32 %v633, %v3583
        %v4242 = vsub.f32 %v634, %v3584
        %v4243 = vsub.f32 %v635, %v3585
        %v4244 = vsub.f32 %v636, %v3586
        %v4245 = vsub.f32 %v637, %v3587
        %v4246 = vsub.f32 %v638, %v3588
        %v4247 = vsub.f32 %v639, %v3589
        %v4248 = vmul.f32 %v2899, %v4216
        %v4249 = vmul.f32 %v2899, %v4217
        %v4250 = vmul.f32 %v2899, %v4218
        %v4251 = vmul.f32 %v2899, %v4219
        %v4252 = vmul.f32 %v2899, %v4220
        %v4253 = vmul.f32 %v2899, %v4221
        %v4254 = vmul.f32 %v2899, %v4222
        %v4255 = vmul.f32 %v2899, %v4223
        %v4256 = vmul.f32 %v2899, %v4224
        %v4257 = vmul.f32 %v2899, %v4225
        %v4258 = vmul.f32 %v2899, %v4226
        %v4259 = vmul.f32 %v2899, %v4227
        %v4260 = vmul.f32 %v2899, %v4228
        %v4261 = vmul.f32 %v2899, %v4229
        %v4262 = vmul.f32 %v2899, %v4230
        %v4263 = vmul.f32 %v2899, %v4231
        %v4264 = vmul.f32 %v2899, %v4232
        %v4265 = vmul.f32 %v2899, %v4233
        %v4266 = vmul.f32 %v2899, %v4234
        %v4267 = vmul.f32 %v2899, %v4235
        %v4268 = vmul.f32 %v2899, %v4236
        %v4269 = vmul.f32 %v2899, %v4237
        %v4270 = vmul.f32 %v2899, %v4238
        %v4271 = vmul.f32 %v2899, %v4239
        %v4272 = vmul.f32 %v2899, %v4240
        %v4273 = vmul.f32 %v2899, %v4241
        %v4274 = vmul.f32 %v2899, %v4242
        %v4275 = vmul.f32 %v2899, %v4243
        %v4276 = vmul.f32 %v2899, %v4244
        %v4277 = vmul.f32 %v2899, %v4245
        %v4278 = vmul.f32 %v2899, %v4246
        %v4279 = vmul.f32 %v2899, %v4247
        %v4280 = vadd.f32 %v2900, %v4248
        %v4281 = vadd.f32 %v2901, %v4249
        %v4282 = vadd.f32 %v2902, %v4250
        %v4283 = vadd.f32 %v2903, %v4251
        %v4284 = vadd.f32 %v2904, %v4252
        %v4285 = vadd.f32 %v2905, %v4253
        %v4286 = vadd.f32 %v2906, %v4254
        %v4287 = vadd.f32 %v2907, %v4255
        %v4288 = vadd.f32 %v2908, %v4256
        %v4289 = vadd.f32 %v2909, %v4257
        %v4290 = vadd.f32 %v2910, %v4258
        %v4291 = vadd.f32 %v2911, %v4259
        %v4292 = vadd.f32 %v2912, %v4260
        %v4293 = vadd.f32 %v2913, %v4261
        %v4294 = vadd.f32 %v2914, %v4262
        %v4295 = vadd.f32 %v2915, %v4263
        %v4296 = vadd.f32 %v2916, %v4264
        %v4297 = vadd.f32 %v2917, %v4265
        %v4298 = vadd.f32 %v2918, %v4266
        %v4299 = vadd.f32 %v2919, %v4267
        %v4300 = vadd.f32 %v2920, %v4268
        %v4301 = vadd.f32 %v2921, %v4269
        %v4302 = vadd.f32 %v2922, %v4270
        %v4303 = vadd.f32 %v2923, %v4271
        %v4304 = vadd.f32 %v2924, %v4272
        %v4305 = vadd.f32 %v2925, %v4273
        %v4306 = vadd.f32 %v2926, %v4274
        %v4307 = vadd.f32 %v2927, %v4275
        %v4308 = vadd.f32 %v2928, %v4276
        %v4309 = vadd.f32 %v2929, %v4277
        %v4310 = vadd.f32 %v2930, %v4278
        %v4311 = vadd.f32 %v2931, %v4279
        %v4312 = vpack.c.bf16 %v4280, %v4280
        %v4313 = vpack.c.bf16 %v4281, %v4281
        %v4314 = vpack.c.bf16 %v4282, %v4282
        %v4315 = vpack.c.bf16 %v4283, %v4283
        %v4316 = vpack.c.bf16 %v4284, %v4284
        %v4317 = vpack.c.bf16 %v4285, %v4285
        %v4318 = vpack.c.bf16 %v4286, %v4286
        %v4319 = vpack.c.bf16 %v4287, %v4287
        %v4320 = vpack.c.bf16 %v4288, %v4288
        %v4321 = vpack.c.bf16 %v4289, %v4289
        %v4322 = vpack.c.bf16 %v4290, %v4290
        %v4323 = vpack.c.bf16 %v4291, %v4291
        %v4324 = vpack.c.bf16 %v4292, %v4292
        %v4325 = vpack.c.bf16 %v4293, %v4293
        %v4326 = vpack.c.bf16 %v4294, %v4294
        %v4327 = vpack.c.bf16 %v4295, %v4295
        %v4328 = vpack.c.bf16 %v4296, %v4296
        %v4329 = vpack.c.bf16 %v4297, %v4297
        %v4330 = vpack.c.bf16 %v4298, %v4298
        %v4331 = vpack.c.bf16 %v4299, %v4299
        %v4332 = vpack.c.bf16 %v4300, %v4300
        %v4333 = vpack.c.bf16 %v4301, %v4301
        %v4334 = vpack.c.bf16 %v4302, %v4302
        %v4335 = vpack.c.bf16 %v4303, %v4303
        %v4336 = vpack.c.bf16 %v4304, %v4304
        %v4337 = vpack.c.bf16 %v4305, %v4305
        %v4338 = vpack.c.bf16 %v4306, %v4306
        %v4339 = vpack.c.bf16 %v4307, %v4307
        %v4340 = vpack.c.bf16 %v4308, %v4308
        %v4341 = vpack.c.bf16 %v4309, %v4309
        %v4342 = vpack.c.bf16 %v4310, %v4310
        %v4343 = vpack.c.bf16 %v4311, %v4311
        %v4376 = vunpack.c.l.b16 %v4312
        %v4377 = vunpack.c.l.b16 %v4313
        %v4378 = vunpack.c.l.b16 %v4314
        %v4379 = vunpack.c.l.b16 %v4315
        %v4380 = vunpack.c.l.b16 %v4316
        %v4381 = vunpack.c.l.b16 %v4317
        %v4382 = vunpack.c.l.b16 %v4318
        %v4383 = vunpack.c.l.b16 %v4319
        %v4384 = vunpack.c.l.b16 %v4320
        %v4385 = vunpack.c.l.b16 %v4321
        %v4386 = vunpack.c.l.b16 %v4322
        %v4387 = vunpack.c.l.b16 %v4323
        %v4388 = vunpack.c.l.b16 %v4324
        %v4389 = vunpack.c.l.b16 %v4325
        %v4390 = vunpack.c.l.b16 %v4326
        %v4391 = vunpack.c.l.b16 %v4327
        %v4392 = vunpack.c.l.b16 %v4328
        %v4393 = vunpack.c.l.b16 %v4329
        %v4394 = vunpack.c.l.b16 %v4330
        %v4395 = vunpack.c.l.b16 %v4331
        %v4396 = vunpack.c.l.b16 %v4332
        %v4397 = vunpack.c.l.b16 %v4333
        %v4398 = vunpack.c.l.b16 %v4334
        %v4399 = vunpack.c.l.b16 %v4335
        %v4400 = vunpack.c.l.b16 %v4336
        %v4401 = vunpack.c.l.b16 %v4337
        %v4402 = vunpack.c.l.b16 %v4338
        %v4403 = vunpack.c.l.b16 %v4339
        %v4404 = vunpack.c.l.b16 %v4340
        %v4405 = vunpack.c.l.b16 %v4341
        %v4406 = vunpack.c.l.b16 %v4342
        %v4407 = vunpack.c.l.b16 %v4343
        %v4408 = vpack.c.b16 %v4377, %v4376
        %v4409 = vpack.c.b16 %v4379, %v4378
        %v4410 = vpack.c.b16 %v4381, %v4380
        %v4411 = vpack.c.b16 %v4383, %v4382
        %v4412 = vpack.c.b16 %v4385, %v4384
        %v4413 = vpack.c.b16 %v4387, %v4386
        %v4414 = vpack.c.b16 %v4389, %v4388
        %v4415 = vpack.c.b16 %v4391, %v4390
        %v4416 = vpack.c.b16 %v4393, %v4392
        %v4417 = vpack.c.b16 %v4395, %v4394
        %v4418 = vpack.c.b16 %v4397, %v4396
        %v4419 = vpack.c.b16 %v4399, %v4398
        %v4420 = vpack.c.b16 %v4401, %v4400
        %v4421 = vpack.c.b16 %v4403, %v4402
        %v4422 = vpack.c.b16 %v4405, %v4404
        %v4423 = vpack.c.b16 %v4407, %v4406
        %4440 = vmatpush.bf16.msra.mxu0 %v3299
        %4441 = vmatpush.bf16.msra.mxu0 %v3298
        %4442 = vmatpush.bf16.msra.mxu0 %v3297
        %4443 = vmatpush.bf16.msra.mxu0 %v3296
        %4444 = vmatpush.bf16.msra.mxu0 %v3295
        %4445 = vmatpush.bf16.msra.mxu0 %v3294
        %4446 = vmatpush.bf16.msra.mxu0 %v3293
        %4447 = vmatpush.bf16.msra.mxu0 %v3292
        %4448 = vmatmul.bf16.gmra.mxu0 %v4408
        %v4449 = vpop.f32.mrf.mxu0
        %v4450 = vadd.f32 %v3326, %v4449
        %v4451 = vpop.f32.mrf.mxu0
        %v4452 = vadd.f32 %v3328, %v4451
        %4453 = vmatmul.bf16.gmra.mxu0 %v4409
        %v4454 = vpop.f32.mrf.mxu0
        %v4455 = vadd.f32 %v3331, %v4454
        %v4456 = vpop.f32.mrf.mxu0
        %v4457 = vadd.f32 %v3333, %v4456
        %4458 = vmatmul.bf16.gmra.mxu0 %v4410
        %v4459 = vpop.f32.mrf.mxu0
        %v4460 = vadd.f32 %v3336, %v4459
        %v4461 = vpop.f32.mrf.mxu0
        %v4462 = vadd.f32 %v3338, %v4461
        %4463 = vmatmul.bf16.gmra.mxu0 %v4411
        %v4464 = vpop.f32.mrf.mxu0
        %v4465 = vadd.f32 %v3341, %v4464
        %v4466 = vpop.f32.mrf.mxu0
        %v4467 = vadd.f32 %v3343, %v4466
        %4468 = vmatmul.bf16.gmra.mxu0 %v4412
        %v4469 = vpop.f32.mrf.mxu0
        %v4470 = vadd.f32 %v3346, %v4469
        %v4471 = vpop.f32.mrf.mxu0
        %v4472 = vadd.f32 %v3348, %v4471
        %4473 = vmatmul.bf16.gmra.mxu0 %v4413
        %v4474 = vpop.f32.mrf.mxu0
        %v4475 = vadd.f32 %v3351, %v4474
        %v4476 = vpop.f32.mrf.mxu0
        %v4477 = vadd.f32 %v3353, %v4476
        %4478 = vmatmul.bf16.gmra.mxu0 %v4414
        %v4479 = vpop.f32.mrf.mxu0
        %v4480 = vadd.f32 %v3356, %v4479
        %v4481 = vpop.f32.mrf.mxu0
        %v4482 = vadd.f32 %v3358, %v4481
        %4483 = vmatmul.bf16.gmra.mxu0 %v4415
        %v4484 = vpop.f32.mrf.mxu0
        %v4485 = vadd.f32 %v3361, %v4484
        %v4486 = vpop.f32.mrf.mxu0
        %v4487 = vadd.f32 %v3363, %v4486
        %4488 = vmatmul.bf16.gmra.mxu0 %v4416
        %v4489 = vpop.f32.mrf.mxu0
        %v4490 = vadd.f32 %v3366, %v4489
        %v4491 = vpop.f32.mrf.mxu0
        %v4492 = vadd.f32 %v3368, %v4491
        %4493 = vmatmul.bf16.gmra.mxu0 %v4417
        %v4494 = vpop.f32.mrf.mxu0
        %v4495 = vadd.f32 %v3371, %v4494
        %v4496 = vpop.f32.mrf.mxu0
        %v4497 = vadd.f32 %v3373, %v4496
        %4498 = vmatmul.bf16.gmra.mxu0 %v4418
        %v4499 = vpop.f32.mrf.mxu0
        %v4500 = vadd.f32 %v3376, %v4499
        %v4501 = vpop.f32.mrf.mxu0
        %v4502 = vadd.f32 %v3378, %v4501
        %4503 = vmatmul.bf16.gmra.mxu0 %v4419
        %v4504 = vpop.f32.mrf.mxu0
        %v4505 = vadd.f32 %v3381, %v4504
        %v4506 = vpop.f32.mrf.mxu0
        %v4507 = vadd.f32 %v3383, %v4506
        %4508 = vmatmul.bf16.gmra.mxu0 %v4420
        %v4509 = vpop.f32.mrf.mxu0
        %v4510 = vadd.f32 %v3386, %v4509
        %v4511 = vpop.f32.mrf.mxu0
        %v4512 = vadd.f32 %v3388, %v4511
        %4513 = vmatmul.bf16.gmra.mxu0 %v4421
        %v4514 = vpop.f32.mrf.mxu0
        %v4515 = vadd.f32 %v3391, %v4514
        %v4516 = vpop.f32.mrf.mxu0
        %v4517 = vadd.f32 %v3393, %v4516
        %4518 = vmatmul.bf16.gmra.mxu0 %v4422
        %v4519 = vpop.f32.mrf.mxu0
        %v4520 = vadd.f32 %v3396, %v4519
        %v4521 = vpop.f32.mrf.mxu0
        %v4522 = vadd.f32 %v3398, %v4521
        %4523 = vmatmul.bf16.gmra.mxu0 %v4423
        %v4524 = vpop.f32.mrf.mxu0
        %v4525 = vadd.f32 %v3401, %v4524
        %v4526 = vpop.f32.mrf.mxu0
        %v4527 = vadd.f32 %v3403, %v4526
        %4528 = vdwg.mxu0
        %v4529 = vadd.f32 %v1567, %v4450
        %v4530 = vadd.f32 %v1569, %v4452
        %v4531 = vadd.f32 %v1572, %v4455
        %v4532 = vadd.f32 %v1574, %v4457
        %v4533 = vadd.f32 %v1577, %v4460
        %v4534 = vadd.f32 %v1579, %v4462
        %v4535 = vadd.f32 %v1582, %v4465
        %v4536 = vadd.f32 %v1584, %v4467
        %v4537 = vadd.f32 %v1587, %v4470
        %v4538 = vadd.f32 %v1589, %v4472
        %v4539 = vadd.f32 %v1592, %v4475
        %v4540 = vadd.f32 %v1594, %v4477
        %v4541 = vadd.f32 %v1597, %v4480
        %v4542 = vadd.f32 %v1599, %v4482
        %v4543 = vadd.f32 %v1602, %v4485
        %v4544 = vadd.f32 %v1604, %v4487
        %v4545 = vadd.f32 %v1607, %v4490
        %v4546 = vadd.f32 %v1609, %v4492
        %v4547 = vadd.f32 %v1612, %v4495
        %v4548 = vadd.f32 %v1614, %v4497
        %v4549 = vadd.f32 %v1617, %v4500
        %v4550 = vadd.f32 %v1619, %v4502
        %v4551 = vadd.f32 %v1622, %v4505
        %v4552 = vadd.f32 %v1624, %v4507
        %v4553 = vadd.f32 %v1627, %v4510
        %v4554 = vadd.f32 %v1629, %v4512
        %v4555 = vadd.f32 %v1632, %v4515
        %v4556 = vadd.f32 %v1634, %v4517
        %v4557 = vadd.f32 %v1637, %v4520
        %v4558 = vadd.f32 %v1639, %v4522
        %v4559 = vadd.f32 %v1642, %v4525
        %v4560 = vadd.f32 %v1644, %v4527
        %v4561 = vtanh.pop %v4529
        %v4562 = vtanh.pop %v4530
        %v4563 = vtanh.pop %v4531
        %v4564 = vtanh.pop %v4532
        %v4565 = vtanh.pop %v4533
        %v4566 = vtanh.pop %v4534
        %v4567 = vtanh.pop %v4535
        %v4568 = vtanh.pop %v4536
        %v4569 = vtanh.pop %v4537
        %v4570 = vtanh.pop %v4538
        %v4571 = vtanh.pop %v4539
        %v4572 = vtanh.pop %v4540
        %v4573 = vtanh.pop %v4541
        %v4574 = vtanh.pop %v4542
        %v4575 = vtanh.pop %v4543
        %v4576 = vtanh.pop %v4544
        %v4577 = vtanh.pop %v4545
        %v4578 = vtanh.pop %v4546
        %v4579 = vtanh.pop %v4547
        %v4580 = vtanh.pop %v4548
        %v4581 = vtanh.pop %v4549
        %v4582 = vtanh.pop %v4550
        %v4583 = vtanh.pop %v4551
        %v4584 = vtanh.pop %v4552
        %v4585 = vtanh.pop %v4553
        %v4586 = vtanh.pop %v4554
        %v4587 = vtanh.pop %v4555
        %v4588 = vtanh.pop %v4556
        %v4589 = vtanh.pop %v4557
        %v4590 = vtanh.pop %v4558
        %v4591 = vtanh.pop %v4559
        %v4592 = vtanh.pop %v4560
        %v4593 = vadd.f32 %v2835, %v4561
        %v4594 = vadd.f32 %v2836, %v4562
        %v4595 = vadd.f32 %v2837, %v4563
        %v4596 = vadd.f32 %v2838, %v4564
        %v4597 = vadd.f32 %v2839, %v4565
        %v4598 = vadd.f32 %v2840, %v4566
        %v4599 = vadd.f32 %v2841, %v4567
        %v4600 = vadd.f32 %v2842, %v4568
        %v4601 = vadd.f32 %v2843, %v4569
        %v4602 = vadd.f32 %v2844, %v4570
        %v4603 = vadd.f32 %v2845, %v4571
        %v4604 = vadd.f32 %v2846, %v4572
        %v4605 = vadd.f32 %v2847, %v4573
        %v4606 = vadd.f32 %v2848, %v4574
        %v4607 = vadd.f32 %v2849, %v4575
        %v4608 = vadd.f32 %v2850, %v4576
        %v4609 = vadd.f32 %v2851, %v4577
        %v4610 = vadd.f32 %v2852, %v4578
        %v4611 = vadd.f32 %v2853, %v4579
        %v4612 = vadd.f32 %v2854, %v4580
        %v4613 = vadd.f32 %v2855, %v4581
        %v4614 = vadd.f32 %v2856, %v4582
        %v4615 = vadd.f32 %v2857, %v4583
        %v4616 = vadd.f32 %v2858, %v4584
        %v4617 = vadd.f32 %v2859, %v4585
        %v4618 = vadd.f32 %v2860, %v4586
        %v4619 = vadd.f32 %v2861, %v4587
        %v4620 = vadd.f32 %v2862, %v4588
        %v4621 = vadd.f32 %v2863, %v4589
        %v4622 = vadd.f32 %v2864, %v4590
        %v4623 = vadd.f32 %v2865, %v4591
        %v4624 = vadd.f32 %v2866, %v4592
        %4625 = vst [vmem:[%s498] sm:$0xff] %v4593
        %4626 = vst [vmem:[%s498 + $0x8] sm:$0xff] %v4594
        %4627 = vst [vmem:[%s498 + $0x10] sm:$0xff] %v4595
        %4628 = vst [vmem:[%s498 + $0x18] sm:$0xff] %v4596
        %4629 = vst [vmem:[%s498 + $0x20] sm:$0xff] %v4597
        %4630 = vst [vmem:[%s498 + $0x28] sm:$0xff] %v4598
        %4631 = vst [vmem:[%s498 + $0x30] sm:$0xff] %v4599
        %4632 = vst [vmem:[%s498 + $0x38] sm:$0xff] %v4600
        %4633 = vst [vmem:[%s498 + $0x40] sm:$0xff] %v4601
        %4634 = vst [vmem:[%s498 + $0x48] sm:$0xff] %v4602
        %4635 = vst [vmem:[%s498 + $0x50] sm:$0xff] %v4603
        %4636 = vst [vmem:[%s498 + $0x58] sm:$0xff] %v4604
        %4637 = vst [vmem:[%s498 + $0x60] sm:$0xff] %v4605
        %4638 = vst [vmem:[%s498 + $0x68] sm:$0xff] %v4606
        %4639 = vst [vmem:[%s498 + $0x70] sm:$0xff] %v4607
        %4640 = vst [vmem:[%s498 + $0x78] sm:$0xff] %v4608
        %4641 = vst [vmem:[%s498 + $0x80] sm:$0xff] %v4609
        %4642 = vst [vmem:[%s498 + $0x88] sm:$0xff] %v4610
        %4643 = vst [vmem:[%s498 + $0x90] sm:$0xff] %v4611
        %4644 = vst [vmem:[%s498 + $0x98] sm:$0xff] %v4612
        %4645 = vst [vmem:[%s498 + $0xa0] sm:$0xff] %v4613
        %4646 = vst [vmem:[%s498 + $0xa8] sm:$0xff] %v4614
        %4647 = vst [vmem:[%s498 + $0xb0] sm:$0xff] %v4615
        %4648 = vst [vmem:[%s498 + $0xb8] sm:$0xff] %v4616
        %4649 = vst [vmem:[%s498 + $0xc0] sm:$0xff] %v4617
        %4650 = vst [vmem:[%s498 + $0xc8] sm:$0xff] %v4618
        %4651 = vst [vmem:[%s498 + $0xd0] sm:$0xff] %v4619
        %4652 = vst [vmem:[%s498 + $0xd8] sm:$0xff] %v4620
        %4653 = vst [vmem:[%s498 + $0xe0] sm:$0xff] %v4621
        %4654 = vst [vmem:[%s498 + $0xe8] sm:$0xff] %v4622
        %4655 = vst [vmem:[%s498 + $0xf0] sm:$0xff] %v4623
        %4656 = vst [vmem:[%s498 + $0xf8] sm:$0xff] %v4624
        %4657 = vst [vmem:[%s505] sm:$0xff] %v4184
        %4658 = vst [vmem:[%s505 + $0x8] sm:$0xff] %v4185
        %4659 = vst [vmem:[%s505 + $0x10] sm:$0xff] %v4186
        %4660 = vst [vmem:[%s505 + $0x18] sm:$0xff] %v4187
        %4661 = vst [vmem:[%s505 + $0x20] sm:$0xff] %v4188
        %4662 = vst [vmem:[%s505 + $0x28] sm:$0xff] %v4189
        %4663 = vst [vmem:[%s505 + $0x30] sm:$0xff] %v4190
        %4664 = vst [vmem:[%s505 + $0x38] sm:$0xff] %v4191
        %4665 = vst [vmem:[%s505 + $0x40] sm:$0xff] %v4192
        %4666 = vst [vmem:[%s505 + $0x48] sm:$0xff] %v4193
        %4667 = vst [vmem:[%s505 + $0x50] sm:$0xff] %v4194
        %4668 = vst [vmem:[%s505 + $0x58] sm:$0xff] %v4195
        %4669 = vst [vmem:[%s505 + $0x60] sm:$0xff] %v4196
        %4670 = vst [vmem:[%s505 + $0x68] sm:$0xff] %v4197
        %4671 = vst [vmem:[%s505 + $0x70] sm:$0xff] %v4198
        %4672 = vst [vmem:[%s505 + $0x78] sm:$0xff] %v4199
        %4673 = vst [vmem:[%s505 + $0x80] sm:$0xff] %v4200
        %4674 = vst [vmem:[%s505 + $0x88] sm:$0xff] %v4201
        %4675 = vst [vmem:[%s505 + $0x90] sm:$0xff] %v4202
        %4676 = vst [vmem:[%s505 + $0x98] sm:$0xff] %v4203
        %4677 = vst [vmem:[%s505 + $0xa0] sm:$0xff] %v4204
        %4678 = vst [vmem:[%s505 + $0xa8] sm:$0xff] %v4205
        %4679 = vst [vmem:[%s505 + $0xb0] sm:$0xff] %v4206
        %4680 = vst [vmem:[%s505 + $0xb8] sm:$0xff] %v4207
        %4681 = vst [vmem:[%s505 + $0xc0] sm:$0xff] %v4208
        %4682 = vst [vmem:[%s505 + $0xc8] sm:$0xff] %v4209
        %4683 = vst [vmem:[%s505 + $0xd0] sm:$0xff] %v4210
        %4684 = vst [vmem:[%s505 + $0xd8] sm:$0xff] %v4211
        %4685 = vst [vmem:[%s505 + $0xe0] sm:$0xff] %v4212
        %4686 = vst [vmem:[%s505 + $0xe8] sm:$0xff] %v4213
        %4687 = vst [vmem:[%s505 + $0xf0] sm:$0xff] %v4214
        %4688 = vst [vmem:[%s505 + $0xf8] sm:$0xff] %v4215
        %s4689 = sand.u32 %s293, 1
        %s4690 = scalar_lea.sflag [#allocation3], %s4689
        %s4691 = sand.u32 %s293, 1
        %s4692 = smul.addr %s4691, 256
        %s4693 = scalar_lea.vmem [#allocation5], %s4692
        %s4694 = sand.u32 %s321, 1
        %s4695 = scalar_lea.sflag [#allocation7], %s4694
        %s4696 = sand.u32 %s321, 1
        %s4697 = smul.addr %s4696, 256
        %s4698 = scalar_lea.vmem [#allocation6], %s4697
        // Predicated region
        $region65: #{s2td_forward.1} parent=59 // pred_check
          %p4699 = pneg %p303
        $region66: #{s2td_forward.1} parent=59 // pred_check_branch
          %4701 = sbr.rel (%p4699) target = $region68
        $region67: #{s2td_forward.1} parent=59 // pred_region
          %s4702 = smul.u32 32, %s35
          %4704 = vsyncadd %s4690, 0
          %s4705 = smul.addr %s34, 32
          %s4706 = sadd.s32 %s4702, %s4705
          %s4707 = smul.addr %s4706, 8
          %s4708 = scalar_lea.hbm %s10, %s4707
          %s4709 = sshll.u32 %s4693, 4
          %s4710 = int_to_ptr.vmem [resolvable:$true] %s4709
          %s4711 = sshll.u32 %s4708, 4
          %s4712 = int_to_ptr.hbm [resolvable:$true] %s4711
          %4717 = dma.vmem_to_hbm [thread:$0]  %s4710, 4096, %s4712, %s4690, 128, 128, 8
        $region68: #{s2td_forward.1} parent=59 // pred_fallthru
          _
        // Predicated region
        $region69: #{s2td_forward.1} parent=59 // pred_check
          %p4718 = pneg %p331
        $region70: #{s2td_forward.1} parent=59 // pred_check_branch
          %4720 = sbr.rel (%p4718) target = $region72
        $region71: #{s2td_forward.1} parent=59 // pred_region
          %s4721 = smul.u32 32, %s35
          %4723 = vsyncadd %s4695, 0
          %s4724 = smul.addr %s34, 32
          %s4725 = sadd.s32 %s4721, %s4724
          %s4726 = smul.addr %s4725, 8
          %s4727 = scalar_lea.hbm %s11, %s4726
          %s4728 = sshll.u32 %s4698, 4
          %s4729 = int_to_ptr.vmem [resolvable:$true] %s4728
          %s4730 = sshll.u32 %s4727, 4
          %s4731 = int_to_ptr.hbm [resolvable:$true] %s4730
          %4736 = dma.vmem_to_hbm [thread:$0]  %s4729, 4096, %s4731, %s4695, 128, 128, 8
        $region72: #{s2td_forward.1} parent=59 // pred_fallthru
          _
      $region60: #{s2td_forward.1} parent=5 // pred_fallthru
        _
      %p4737 = scmp.le.s32.totalorder 2, %s25
      // Predicated region
      $region73: #{s2td_forward.1} parent=5 // pred_check
        %p4738 = pneg %p4737
      $region74: #{s2td_forward.1} parent=5 // pred_check_branch
        %4740 = sbr.rel (%p4738) target = $region76
      $region75: #{s2td_forward.1} parent=5 // pred_region
        %s4741 = ssub.s32 %s25, 2
        // Predicated region
        $region77: #{s2td_forward.1} parent=75 // pred_check
          %p4742 = pneg %p309
        $region78: #{s2td_forward.1} parent=75 // pred_check_branch
          %4744 = sbr.rel (%p4742) target = $region80
        $region79: #{s2td_forward.1} parent=75 // pred_region
          %s4745 = sand.u32 %s294, 1
          %s4746 = scalar_lea.sflag [#allocation3], %s4745
          %s4747 = sand.u32 %s294, 1
          %s4748 = smul.addr %s4747, 256
          %s4749 = scalar_lea.vmem [#allocation5], %s4748
          %4751 = dma.done %s4746, 4096
        $region80: #{s2td_forward.1} parent=75 // pred_fallthru
          _
        // Predicated region
        $region81: #{s2td_forward.1} parent=75 // pred_check
          %p4752 = pneg %p337
        $region82: #{s2td_forward.1} parent=75 // pred_check_branch
          %4754 = sbr.rel (%p4752) target = $region84
        $region83: #{s2td_forward.1} parent=75 // pred_region
          %s4755 = sand.u32 %s322, 1
          %s4756 = scalar_lea.sflag [#allocation7], %s4755
          %s4757 = sand.u32 %s322, 1
          %s4758 = smul.addr %s4757, 256
          %s4759 = scalar_lea.vmem [#allocation6], %s4758
          %4761 = dma.done %s4756, 4096
        $region84: #{s2td_forward.1} parent=75 // pred_fallthru
          _
      $region76: #{s2td_forward.1} parent=5 // pred_fallthru
        _
    $region6: #{s2td_forward.1} parent=1 // loop_footer
      %s29 = sadd.s32 1, %s25
    $region7: #{s2td_forward.1} parent=1 // loop_footer_branch
      %24 = sbr.rel target = $region3
    $region8: #{s2td_forward.1} parent=1 // loop_exit
      _
    %4762 = vsyncpa [#allocation3], 1
    %s4763 = scalar_lea.sflag [#allocation3], 1
    %4764 = vsyncpa %s4763, 1
    %4765 = vsyncpa [#allocation7], 1
    %s4766 = scalar_lea.sflag [#allocation7], 1
    %4767 = vsyncpa %s4766, 1
    %4768 = vsyncpa [#allocation4], 1
    %s4769 = scalar_lea.sflag [#allocation4], 1
    %4770 = vsyncpa %s4769, 1

</llo_original>
